<compile_context>
chip_gen: v7x
topology: tpu7x:2x2x1
jax: 0.10.0
libtpu: 0.0.40
codegen_flags: <defaults>
</compile_context>

<pallas_src>
import jax
import jax.numpy as jnp
from jax.experimental import pallas as pl
from jax.experimental.pallas import tpu as pltpu


def metapath_kernel(a1_ref, a2_ref, a3_ref, A_ref, out_ref,
                    q1_ref, q2_ref, q3_ref):
    # a*_ref : (C, E) softmaxed mixing weights in SMEM (cheap scalar reads)
    # A_ref  : (E, N, N) full adjacency stack in VMEM (single kernel step)
    # out_ref: (C, N, N) output in VMEM
    # q*_ref : (C, N, N) f32 VMEM scratch for the mixed adjacencies
    E = A_ref.shape[0]
    C = out_ref.shape[0]

    # ---- Phase 1: fused edge-type mixing --------------------------------
    # One pass over e: each A[e] tile is loaded from VMEM exactly once and
    # feeds all three accumulators of every channel.  E and C are tiny and
    # static, so the Python loops fully unroll into one straight-line block.
    for e in range(E):
        a_e = A_ref[e]                                   # (N, N) f32, reused 3*C times
        for c in range(C):
            if e == 0:
                q1_ref[c] = a1_ref[c, 0] * a_e
                q2_ref[c] = a2_ref[c, 0] * a_e
                q3_ref[c] = a3_ref[c, 0] * a_e
            else:
                q1_ref[c] = q1_ref[c] + a1_ref[c, e] * a_e
                q2_ref[c] = q2_ref[c] + a2_ref[c, e] * a_e
                q3_ref[c] = q3_ref[c] + a3_ref[c, e] * a_e

    # ---- Phase 2: chained N x N matmuls per channel (MXU, f32 accum) -----
    for c in range(C):
        q12 = jnp.dot(q1_ref[c], q2_ref[c], preferred_element_type=jnp.float32)
        out_ref[c] = jnp.dot(q12, q3_ref[c], preferred_element_type=jnp.float32)


def metapath_learner(A_orig, w1, w2, w3):
    """A_orig: (E, N, N) f32.  w1/w2/w3: (C, E) raw linear weights (no bias)."""
    E, N, _ = A_orig.shape
    C = w1.shape[0]

    # softmax over edge-type axis (dim=1) -- parameter glue, plain JAX
    a1 = jax.nn.softmax(w1.astype(jnp.float32), axis=1)
    a2 = jax.nn.softmax(w2.astype(jnp.float32), axis=1)
    a3 = jax.nn.softmax(w3.astype(jnp.float32), axis=1)

    smem_spec = pl.BlockSpec(memory_space=pltpu.MemorySpace.SMEM)

    return pl.pallas_call(
        metapath_kernel,
        out_shape=jax.ShapeDtypeStruct((C, N, N), jnp.float32),
        grid_spec=pltpu.PrefetchScalarGridSpec(
            num_scalar_prefetch=0,
            grid=(1,),  # single step: whole problem fits comfortably in VMEM
            in_specs=[
                smem_spec,  # alpha1 (C, E)
                smem_spec,  # alpha2 (C, E)
                smem_spec,  # alpha3 (C, E)
                pl.BlockSpec((E, N, N), lambda i: (0, 0, 0)),  # full A, resident once
            ],
            out_specs=pl.BlockSpec((C, N, N), lambda i: (0, 0, 0)),
            scratch_shapes=[pltpu.VMEM((C, N, N), jnp.float32)] * 3,  # Q1/Q2/Q3
        ),
        compiler_params=pltpu.CompilerParams(
            dimension_semantics=("arbitrary",),
        ),
    )(a1, a2, a3, A_orig)


def _reference(A_orig, w1, w2, w3):
    a1 = jax.nn.softmax(w1, axis=1)
    a2 = jax.nn.softmax(w2, axis=1)
    a3 = jax.nn.softmax(w3, axis=1)
    Q1 = jnp.einsum("ce,enk->cnk", a1, A_orig)
    Q2 = jnp.einsum("ce,enk->cnk", a2, A_orig)
    Q3 = jnp.einsum("ce,enk->cnk", a3, A_orig)
    return jnp.einsum("cnm,cmp->cnp", jnp.einsum("cnk,ckm->cnm", Q1, Q2), Q3)


if __name__ == "__main__":
    num_edge_types = 4   # E
    num_channels = 3     # C
    N = 128              # number of nodes

    key = jax.random.PRNGKey(0)
    k_a, k1, k2, k3 = jax.random.split(key, 4)

    # Synthetic single-hop adjacencies (dense, non-negative) — (E, N, N)
    A_orig = jax.random.uniform(k_a, (num_edge_types, N, N), dtype=jnp.float32)

    # Deterministic "xavier-like" init for the three bias-free Linear weights (C, E)
    scale = (2.0 / (num_edge_types + num_channels)) ** 0.5
    w1 = scale * jax.random.normal(k1, (num_channels, num_edge_types), dtype=jnp.float32)
    w2 = scale * jax.random.normal(k2, (num_channels, num_edge_types), dtype=jnp.float32)
    w3 = scale * jax.random.normal(k3, (num_channels, num_edge_types), dtype=jnp.float32)

    out = jax.block_until_ready(metapath_learner(A_orig, w1, w2, w3))
    ref = jax.block_until_ready(_reference(A_orig, w1, w2, w3))

    assert out.shape == (num_channels, N, N)
    assert jnp.allclose(out, ref, rtol=1e-4, atol=1e-3), "mismatch vs reference"

    print("KERNEL_OK")
</pallas_src>

<mosaic_0001>
module attributes {stable_mosaic.version = 11 : i64} {
  func.func @metapath_kernel(%arg0: i32, %arg1: memref<3x4xf32, #tpu.memory_space<smem>>, %arg2: memref<3x4xf32, #tpu.memory_space<smem>>, %arg3: memref<3x4xf32, #tpu.memory_space<smem>>, %arg4: memref<4x128x128xf32, #tpu.memory_space<vmem>>, %arg5: memref<3x128x128xf32, #tpu.memory_space<vmem>>, %arg6: memref<3x128x128xf32, #tpu.memory_space<vmem>>, %arg7: memref<3x128x128xf32, #tpu.memory_space<vmem>>, %arg8: memref<3x128x128xf32, #tpu.memory_space<vmem>>) attributes {dimension_semantics = [#tpu.dimension_semantics<arbitrary>], iteration_bounds = array<i64: 1>, scalar_prefetch = 0 : i64, scratch_operands = 3 : i64, tpu.core_type = #tpu.core_type<tc>, window_params = [{transform_indices = @transform_0, window_bounds = array<i64: 3, 4>}, {transform_indices = @transform_1, window_bounds = array<i64: 3, 4>}, {transform_indices = @transform_2, window_bounds = array<i64: 3, 4>}, {pipeline_mode = #tpu.pipeline_mode<synchronous>, transform_indices = @transform_3, window_bounds = array<i64: 4, 128, 128>}, {pipeline_mode = #tpu.pipeline_mode<synchronous>, transform_indices = @transform_4, window_bounds = array<i64: 3, 128, 128>}]} {
    %c0 = arith.constant 0 : index
    %c0_0 = arith.constant 0 : index
    %c0_1 = arith.constant 0 : index
    %0 = vector.load %arg4[%c0, %c0_0, %c0_1] : memref<4x128x128xf32, #tpu.memory_space<vmem>>, vector<1x128x128xf32>
    %1 = vector.shape_cast %0 : vector<1x128x128xf32> to vector<128x128xf32>
    %c0_2 = arith.constant 0 : index
    %c0_3 = arith.constant 0 : index
    %2 = memref.load %arg1[%c0_2, %c0_3] : memref<3x4xf32, #tpu.memory_space<smem>>
    %3 = vector.broadcast %2 : f32 to vector<128x128xf32>
    %4 = arith.mulf %3, %1 : vector<128x128xf32>
    %c0_4 = arith.constant 0 : index
    %c0_5 = arith.constant 0 : index
    %c0_6 = arith.constant 0 : index
    %5 = vector.load %arg6[%c0_4, %c0_5, %c0_6] : memref<3x128x128xf32, #tpu.memory_space<vmem>>, vector<1x128x128xf32>
    %6 = vector.shape_cast %5 : vector<1x128x128xf32> to vector<128x128xf32>
    %7 = vector.shape_cast %4 : vector<128x128xf32> to vector<1x128x128xf32>
    tpu.vector_store %arg6[%c0_4, %c0_5, %c0_6], %7 {strides = array<i32>} : memref<3x128x128xf32, #tpu.memory_space<vmem>>, vector<1x128x128xf32>,
    %c0_7 = arith.constant 0 : index
    %c0_8 = arith.constant 0 : index
    %8 = memref.load %arg2[%c0_7, %c0_8] : memref<3x4xf32, #tpu.memory_space<smem>>
    %9 = vector.broadcast %8 : f32 to vector<128x128xf32>
    %10 = arith.mulf %9, %1 : vector<128x128xf32>
    %c0_9 = arith.constant 0 : index
    %c0_10 = arith.constant 0 : index
    %c0_11 = arith.constant 0 : index
    %11 = vector.load %arg7[%c0_9, %c0_10, %c0_11] : memref<3x128x128xf32, #tpu.memory_space<vmem>>, vector<1x128x128xf32>
    %12 = vector.shape_cast %11 : vector<1x128x128xf32> to vector<128x128xf32>
    %13 = vector.shape_cast %10 : vector<128x128xf32> to vector<1x128x128xf32>
    tpu.vector_store %arg7[%c0_9, %c0_10, %c0_11], %13 {strides = array<i32>} : memref<3x128x128xf32, #tpu.memory_space<vmem>>, vector<1x128x128xf32>,
    %c0_12 = arith.constant 0 : index
    %c0_13 = arith.constant 0 : index
    %14 = memref.load %arg3[%c0_12, %c0_13] : memref<3x4xf32, #tpu.memory_space<smem>>
    %15 = vector.broadcast %14 : f32 to vector<128x128xf32>
    %16 = arith.mulf %15, %1 : vector<128x128xf32>
    %c0_14 = arith.constant 0 : index
    %c0_15 = arith.constant 0 : index
    %c0_16 = arith.constant 0 : index
    %17 = vector.load %arg8[%c0_14, %c0_15, %c0_16] : memref<3x128x128xf32, #tpu.memory_space<vmem>>, vector<1x128x128xf32>
    %18 = vector.shape_cast %17 : vector<1x128x128xf32> to vector<128x128xf32>
    %19 = vector.shape_cast %16 : vector<128x128xf32> to vector<1x128x128xf32>
    tpu.vector_store %arg8[%c0_14, %c0_15, %c0_16], %19 {strides = array<i32>} : memref<3x128x128xf32, #tpu.memory_space<vmem>>, vector<1x128x128xf32>,
    %c1 = arith.constant 1 : index
    %c0_17 = arith.constant 0 : index
    %20 = memref.load %arg1[%c1, %c0_17] : memref<3x4xf32, #tpu.memory_space<smem>>
    %21 = vector.broadcast %20 : f32 to vector<128x128xf32>
    %22 = arith.mulf %21, %1 : vector<128x128xf32>
    %c1_18 = arith.constant 1 : index
    %c0_19 = arith.constant 0 : index
    %c0_20 = arith.constant 0 : index
    %23 = vector.load %arg6[%c1_18, %c0_19, %c0_20] : memref<3x128x128xf32, #tpu.memory_space<vmem>>, vector<1x128x128xf32>
    %24 = vector.shape_cast %23 : vector<1x128x128xf32> to vector<128x128xf32>
    %25 = vector.shape_cast %22 : vector<128x128xf32> to vector<1x128x128xf32>
    tpu.vector_store %arg6[%c1_18, %c0_19, %c0_20], %25 {strides = array<i32>} : memref<3x128x128xf32, #tpu.memory_space<vmem>>, vector<1x128x128xf32>,
    %c1_21 = arith.constant 1 : index
    %c0_22 = arith.constant 0 : index
    %26 = memref.load %arg2[%c1_21, %c0_22] : memref<3x4xf32, #tpu.memory_space<smem>>
    %27 = vector.broadcast %26 : f32 to vector<128x128xf32>
    %28 = arith.mulf %27, %1 : vector<128x128xf32>
    %c1_23 = arith.constant 1 : index
    %c0_24 = arith.constant 0 : index
    %c0_25 = arith.constant 0 : index
    %29 = vector.load %arg7[%c1_23, %c0_24, %c0_25] : memref<3x128x128xf32, #tpu.memory_space<vmem>>, vector<1x128x128xf32>
    %30 = vector.shape_cast %29 : vector<1x128x128xf32> to vector<128x128xf32>
    %31 = vector.shape_cast %28 : vector<128x128xf32> to vector<1x128x128xf32>
    tpu.vector_store %arg7[%c1_23, %c0_24, %c0_25], %31 {strides = array<i32>} : memref<3x128x128xf32, #tpu.memory_space<vmem>>, vector<1x128x128xf32>,
    %c1_26 = arith.constant 1 : index
    %c0_27 = arith.constant 0 : index
    %32 = memref.load %arg3[%c1_26, %c0_27] : memref<3x4xf32, #tpu.memory_space<smem>>
    %33 = vector.broadcast %32 : f32 to vector<128x128xf32>
    %34 = arith.mulf %33, %1 : vector<128x128xf32>
    %c1_28 = arith.constant 1 : index
    %c0_29 = arith.constant 0 : index
    %c0_30 = arith.constant 0 : index
    %35 = vector.load %arg8[%c1_28, %c0_29, %c0_30] : memref<3x128x128xf32, #tpu.memory_space<vmem>>, vector<1x128x128xf32>
    %36 = vector.shape_cast %35 : vector<1x128x128xf32> to vector<128x128xf32>
    %37 = vector.shape_cast %34 : vector<128x128xf32> to vector<1x128x128xf32>
    tpu.vector_store %arg8[%c1_28, %c0_29, %c0_30], %37 {strides = array<i32>} : memref<3x128x128xf32, #tpu.memory_space<vmem>>, vector<1x128x128xf32>,
    %c2 = arith.constant 2 : index
    %c0_31 = arith.constant 0 : index
    %38 = memref.load %arg1[%c2, %c0_31] : memref<3x4xf32, #tpu.memory_space<smem>>
    %39 = vector.broadcast %38 : f32 to vector<128x128xf32>
    %40 = arith.mulf %39, %1 : vector<128x128xf32>
    %c2_32 = arith.constant 2 : index
    %c0_33 = arith.constant 0 : index
    %c0_34 = arith.constant 0 : index
    %41 = vector.load %arg6[%c2_32, %c0_33, %c0_34] : memref<3x128x128xf32, #tpu.memory_space<vmem>>, vector<1x128x128xf32>
    %42 = vector.shape_cast %41 : vector<1x128x128xf32> to vector<128x128xf32>
    %43 = vector.shape_cast %40 : vector<128x128xf32> to vector<1x128x128xf32>
    tpu.vector_store %arg6[%c2_32, %c0_33, %c0_34], %43 {strides = array<i32>} : memref<3x128x128xf32, #tpu.memory_space<vmem>>, vector<1x128x128xf32>,
    %c2_35 = arith.constant 2 : index
    %c0_36 = arith.constant 0 : index
    %44 = memref.load %arg2[%c2_35, %c0_36] : memref<3x4xf32, #tpu.memory_space<smem>>
    %45 = vector.broadcast %44 : f32 to vector<128x128xf32>
    %46 = arith.mulf %45, %1 : vector<128x128xf32>
    %c2_37 = arith.constant 2 : index
    %c0_38 = arith.constant 0 : index
    %c0_39 = arith.constant 0 : index
    %47 = vector.load %arg7[%c2_37, %c0_38, %c0_39] : memref<3x128x128xf32, #tpu.memory_space<vmem>>, vector<1x128x128xf32>
    %48 = vector.shape_cast %47 : vector<1x128x128xf32> to vector<128x128xf32>
    %49 = vector.shape_cast %46 : vector<128x128xf32> to vector<1x128x128xf32>
    tpu.vector_store %arg7[%c2_37, %c0_38, %c0_39], %49 {strides = array<i32>} : memref<3x128x128xf32, #tpu.memory_space<vmem>>, vector<1x128x128xf32>,
    %c2_40 = arith.constant 2 : index
    %c0_41 = arith.constant 0 : index
    %50 = memref.load %arg3[%c2_40, %c0_41] : memref<3x4xf32, #tpu.memory_space<smem>>
    %51 = vector.broadcast %50 : f32 to vector<128x128xf32>
    %52 = arith.mulf %51, %1 : vector<128x128xf32>
    %c2_42 = arith.constant 2 : index
    %c0_43 = arith.constant 0 : index
    %c0_44 = arith.constant 0 : index
    %53 = vector.load %arg8[%c2_42, %c0_43, %c0_44] : memref<3x128x128xf32, #tpu.memory_space<vmem>>, vector<1x128x128xf32>
    %54 = vector.shape_cast %53 : vector<1x128x128xf32> to vector<128x128xf32>
    %55 = vector.shape_cast %52 : vector<128x128xf32> to vector<1x128x128xf32>
    tpu.vector_store %arg8[%c2_42, %c0_43, %c0_44], %55 {strides = array<i32>} : memref<3x128x128xf32, #tpu.memory_space<vmem>>, vector<1x128x128xf32>,
    %c1_45 = arith.constant 1 : index
    %c0_46 = arith.constant 0 : index
    %c0_47 = arith.constant 0 : index
    %56 = vector.load %arg4[%c1_45, %c0_46, %c0_47] : memref<4x128x128xf32, #tpu.memory_space<vmem>>, vector<1x128x128xf32>
    %57 = vector.shape_cast %56 : vector<1x128x128xf32> to vector<128x128xf32>
    %c0_48 = arith.constant 0 : index
    %c0_49 = arith.constant 0 : index
    %c0_50 = arith.constant 0 : index
    %58 = vector.load %arg6[%c0_48, %c0_49, %c0_50] : memref<3x128x128xf32, #tpu.memory_space<vmem>>, vector<1x128x128xf32>
    %59 = vector.shape_cast %58 : vector<1x128x128xf32> to vector<128x128xf32>
    %c0_51 = arith.constant 0 : index
    %c1_52 = arith.constant 1 : index
    %60 = memref.load %arg1[%c0_51, %c1_52] : memref<3x4xf32, #tpu.memory_space<smem>>
    %61 = vector.broadcast %60 : f32 to vector<128x128xf32>
    %62 = arith.mulf %61, %57 : vector<128x128xf32>
    %63 = arith.addf %59, %62 : vector<128x128xf32>
    %c0_53 = arith.constant 0 : index
    %c0_54 = arith.constant 0 : index
    %c0_55 = arith.constant 0 : index
    %64 = vector.load %arg6[%c0_53, %c0_54, %c0_55] : memref<3x128x128xf32, #tpu.memory_space<vmem>>, vector<1x128x128xf32>
    %65 = vector.shape_cast %64 : vector<1x128x128xf32> to vector<128x128xf32>
    %66 = vector.shape_cast %63 : vector<128x128xf32> to vector<1x128x128xf32>
    tpu.vector_store %arg6[%c0_53, %c0_54, %c0_55], %66 {strides = array<i32>} : memref<3x128x128xf32, #tpu.memory_space<vmem>>, vector<1x128x128xf32>,
    %c0_56 = arith.constant 0 : index
    %c0_57 = arith.constant 0 : index
    %c0_58 = arith.constant 0 : index
    %67 = vector.load %arg7[%c0_56, %c0_57, %c0_58] : memref<3x128x128xf32, #tpu.memory_space<vmem>>, vector<1x128x128xf32>
    %68 = vector.shape_cast %67 : vector<1x128x128xf32> to vector<128x128xf32>
    %c0_59 = arith.constant 0 : index
    %c1_60 = arith.constant 1 : index
    %69 = memref.load %arg2[%c0_59, %c1_60] : memref<3x4xf32, #tpu.memory_space<smem>>
    %70 = vector.broadcast %69 : f32 to vector<128x128xf32>
    %71 = arith.mulf %70, %57 : vector<128x128xf32>
    %72 = arith.addf %68, %71 : vector<128x128xf32>
    %c0_61 = arith.constant 0 : index
    %c0_62 = arith.constant 0 : index
    %c0_63 = arith.constant 0 : index
    %73 = vector.load %arg7[%c0_61, %c0_62, %c0_63] : memref<3x128x128xf32, #tpu.memory_space<vmem>>, vector<1x128x128xf32>
    %74 = vector.shape_cast %73 : vector<1x128x128xf32> to vector<128x128xf32>
    %75 = vector.shape_cast %72 : vector<128x128xf32> to vector<1x128x128xf32>
    tpu.vector_store %arg7[%c0_61, %c0_62, %c0_63], %75 {strides = array<i32>} : memref<3x128x128xf32, #tpu.memory_space<vmem>>, vector<1x128x128xf32>,
    %c0_64 = arith.constant 0 : index
    %c0_65 = arith.constant 0 : index
    %c0_66 = arith.constant 0 : index
    %76 = vector.load %arg8[%c0_64, %c0_65, %c0_66] : memref<3x128x128xf32, #tpu.memory_space<vmem>>, vector<1x128x128xf32>
    %77 = vector.shape_cast %76 : vector<1x128x128xf32> to vector<128x128xf32>
    %c0_67 = arith.constant 0 : index
    %c1_68 = arith.constant 1 : index
    %78 = memref.load %arg3[%c0_67, %c1_68] : memref<3x4xf32, #tpu.memory_space<smem>>
    %79 = vector.broadcast %78 : f32 to vector<128x128xf32>
    %80 = arith.mulf %79, %57 : vector<128x128xf32>
    %81 = arith.addf %77, %80 : vector<128x128xf32>
    %c0_69 = arith.constant 0 : index
    %c0_70 = arith.constant 0 : index
    %c0_71 = arith.constant 0 : index
    %82 = vector.load %arg8[%c0_69, %c0_70, %c0_71] : memref<3x128x128xf32, #tpu.memory_space<vmem>>, vector<1x128x128xf32>
    %83 = vector.shape_cast %82 : vector<1x128x128xf32> to vector<128x128xf32>
    %84 = vector.shape_cast %81 : vector<128x128xf32> to vector<1x128x128xf32>
    tpu.vector_store %arg8[%c0_69, %c0_70, %c0_71], %84 {strides = array<i32>} : memref<3x128x128xf32, #tpu.memory_space<vmem>>, vector<1x128x128xf32>,
    %c1_72 = arith.constant 1 : index
    %c0_73 = arith.constant 0 : index
    %c0_74 = arith.constant 0 : index
    %85 = vector.load %arg6[%c1_72, %c0_73, %c0_74] : memref<3x128x128xf32, #tpu.memory_space<vmem>>, vector<1x128x128xf32>
    %86 = vector.shape_cast %85 : vector<1x128x128xf32> to vector<128x128xf32>
    %c1_75 = arith.constant 1 : index
    %c1_76 = arith.constant 1 : index
    %87 = memref.load %arg1[%c1_75, %c1_76] : memref<3x4xf32, #tpu.memory_space<smem>>
    %88 = vector.broadcast %87 : f32 to vector<128x128xf32>
    %89 = arith.mulf %88, %57 : vector<128x128xf32>
    %90 = arith.addf %86, %89 : vector<128x128xf32>
    %c1_77 = arith.constant 1 : index
    %c0_78 = arith.constant 0 : index
    %c0_79 = arith.constant 0 : index
    %91 = vector.load %arg6[%c1_77, %c0_78, %c0_79] : memref<3x128x128xf32, #tpu.memory_space<vmem>>, vector<1x128x128xf32>
    %92 = vector.shape_cast %91 : vector<1x128x128xf32> to vector<128x128xf32>
    %93 = vector.shape_cast %90 : vector<128x128xf32> to vector<1x128x128xf32>
    tpu.vector_store %arg6[%c1_77, %c0_78, %c0_79], %93 {strides = array<i32>} : memref<3x128x128xf32, #tpu.memory_space<vmem>>, vector<1x128x128xf32>,
    %c1_80 = arith.constant 1 : index
    %c0_81 = arith.constant 0 : index
    %c0_82 = arith.constant 0 : index
    %94 = vector.load %arg7[%c1_80, %c0_81, %c0_82] : memref<3x128x128xf32, #tpu.memory_space<vmem>>, vector<1x128x128xf32>
    %95 = vector.shape_cast %94 : vector<1x128x128xf32> to vector<128x128xf32>
    %c1_83 = arith.constant 1 : index
    %c1_84 = arith.constant 1 : index
    %96 = memref.load %arg2[%c1_83, %c1_84] : memref<3x4xf32, #tpu.memory_space<smem>>
    %97 = vector.broadcast %96 : f32 to vector<128x128xf32>
    %98 = arith.mulf %97, %57 : vector<128x128xf32>
    %99 = arith.addf %95, %98 : vector<128x128xf32>
    %c1_85 = arith.constant 1 : index
    %c0_86 = arith.constant 0 : index
    %c0_87 = arith.constant 0 : index
    %100 = vector.load %arg7[%c1_85, %c0_86, %c0_87] : memref<3x128x128xf32, #tpu.memory_space<vmem>>, vector<1x128x128xf32>
    %101 = vector.shape_cast %100 : vector<1x128x128xf32> to vector<128x128xf32>
    %102 = vector.shape_cast %99 : vector<128x128xf32> to vector<1x128x128xf32>
    tpu.vector_store %arg7[%c1_85, %c0_86, %c0_87], %102 {strides = array<i32>} : memref<3x128x128xf32, #tpu.memory_space<vmem>>, vector<1x128x128xf32>,
    %c1_88 = arith.constant 1 : index
    %c0_89 = arith.constant 0 : index
    %c0_90 = arith.constant 0 : index
    %103 = vector.load %arg8[%c1_88, %c0_89, %c0_90] : memref<3x128x128xf32, #tpu.memory_space<vmem>>, vector<1x128x128xf32>
    %104 = vector.shape_cast %103 : vector<1x128x128xf32> to vector<128x128xf32>
    %c1_91 = arith.constant 1 : index
    %c1_92 = arith.constant 1 : index
    %105 = memref.load %arg3[%c1_91, %c1_92] : memref<3x4xf32, #tpu.memory_space<smem>>
    %106 = vector.broadcast %105 : f32 to vector<128x128xf32>
    %107 = arith.mulf %106, %57 : vector<128x128xf32>
    %108 = arith.addf %104, %107 : vector<128x128xf32>
    %c1_93 = arith.constant 1 : index
    %c0_94 = arith.constant 0 : index
    %c0_95 = arith.constant 0 : index
    %109 = vector.load %arg8[%c1_93, %c0_94, %c0_95] : memref<3x128x128xf32, #tpu.memory_space<vmem>>, vector<1x128x128xf32>
    %110 = vector.shape_cast %109 : vector<1x128x128xf32> to vector<128x128xf32>
    %111 = vector.shape_cast %108 : vector<128x128xf32> to vector<1x128x128xf32>
    tpu.vector_store %arg8[%c1_93, %c0_94, %c0_95], %111 {strides = array<i32>} : memref<3x128x128xf32, #tpu.memory_space<vmem>>, vector<1x128x128xf32>,
    %c2_96 = arith.constant 2 : index
    %c0_97 = arith.constant 0 : index
    %c0_98 = arith.constant 0 : index
    %112 = vector.load %arg6[%c2_96, %c0_97, %c0_98] : memref<3x128x128xf32, #tpu.memory_space<vmem>>, vector<1x128x128xf32>
    %113 = vector.shape_cast %112 : vector<1x128x128xf32> to vector<128x128xf32>
    %c2_99 = arith.constant 2 : index
    %c1_100 = arith.constant 1 : index
    %114 = memref.load %arg1[%c2_99, %c1_100] : memref<3x4xf32, #tpu.memory_space<smem>>
    %115 = vector.broadcast %114 : f32 to vector<128x128xf32>
    %116 = arith.mulf %115, %57 : vector<128x128xf32>
    %117 = arith.addf %113, %116 : vector<128x128xf32>
    %c2_101 = arith.constant 2 : index
    %c0_102 = arith.constant 0 : index
    %c0_103 = arith.constant 0 : index
    %118 = vector.load %arg6[%c2_101, %c0_102, %c0_103] : memref<3x128x128xf32, #tpu.memory_space<vmem>>, vector<1x128x128xf32>
    %119 = vector.shape_cast %118 : vector<1x128x128xf32> to vector<128x128xf32>
    %120 = vector.shape_cast %117 : vector<128x128xf32> to vector<1x128x128xf32>
    tpu.vector_store %arg6[%c2_101, %c0_102, %c0_103], %120 {strides = array<i32>} : memref<3x128x128xf32, #tpu.memory_space<vmem>>, vector<1x128x128xf32>,
    %c2_104 = arith.constant 2 : index
    %c0_105 = arith.constant 0 : index
    %c0_106 = arith.constant 0 : index
    %121 = vector.load %arg7[%c2_104, %c0_105, %c0_106] : memref<3x128x128xf32, #tpu.memory_space<vmem>>, vector<1x128x128xf32>
    %122 = vector.shape_cast %121 : vector<1x128x128xf32> to vector<128x128xf32>
    %c2_107 = arith.constant 2 : index
    %c1_108 = arith.constant 1 : index
    %123 = memref.load %arg2[%c2_107, %c1_108] : memref<3x4xf32, #tpu.memory_space<smem>>
    %124 = vector.broadcast %123 : f32 to vector<128x128xf32>
    %125 = arith.mulf %124, %57 : vector<128x128xf32>
    %126 = arith.addf %122, %125 : vector<128x128xf32>
    %c2_109 = arith.constant 2 : index
    %c0_110 = arith.constant 0 : index
    %c0_111 = arith.constant 0 : index
    %127 = vector.load %arg7[%c2_109, %c0_110, %c0_111] : memref<3x128x128xf32, #tpu.memory_space<vmem>>, vector<1x128x128xf32>
    %128 = vector.shape_cast %127 : vector<1x128x128xf32> to vector<128x128xf32>
    %129 = vector.shape_cast %126 : vector<128x128xf32> to vector<1x128x128xf32>
    tpu.vector_store %arg7[%c2_109, %c0_110, %c0_111], %129 {strides = array<i32>} : memref<3x128x128xf32, #tpu.memory_space<vmem>>, vector<1x128x128xf32>,
    %c2_112 = arith.constant 2 : index
    %c0_113 = arith.constant 0 : index
    %c0_114 = arith.constant 0 : index
    %130 = vector.load %arg8[%c2_112, %c0_113, %c0_114] : memref<3x128x128xf32, #tpu.memory_space<vmem>>, vector<1x128x128xf32>
    %131 = vector.shape_cast %130 : vector<1x128x128xf32> to vector<128x128xf32>
    %c2_115 = arith.constant 2 : index
    %c1_116 = arith.constant 1 : index
    %132 = memref.load %arg3[%c2_115, %c1_116] : memref<3x4xf32, #tpu.memory_space<smem>>
    %133 = vector.broadcast %132 : f32 to vector<128x128xf32>
    %134 = arith.mulf %133, %57 : vector<128x128xf32>
    %135 = arith.addf %131, %134 : vector<128x128xf32>
    %c2_117 = arith.constant 2 : index
    %c0_118 = arith.constant 0 : index
    %c0_119 = arith.constant 0 : index
    %136 = vector.load %arg8[%c2_117, %c0_118, %c0_119] : memref<3x128x128xf32, #tpu.memory_space<vmem>>, vector<1x128x128xf32>
    %137 = vector.shape_cast %136 : vector<1x128x128xf32> to vector<128x128xf32>
    %138 = vector.shape_cast %135 : vector<128x128xf32> to vector<1x128x128xf32>
    tpu.vector_store %arg8[%c2_117, %c0_118, %c0_119], %138 {strides = array<i32>} : memref<3x128x128xf32, #tpu.memory_space<vmem>>, vector<1x128x128xf32>,
    %c2_120 = arith.constant 2 : index
    %c0_121 = arith.constant 0 : index
    %c0_122 = arith.constant 0 : index
    %139 = vector.load %arg4[%c2_120, %c0_121, %c0_122] : memref<4x128x128xf32, #tpu.memory_space<vmem>>, vector<1x128x128xf32>
    %140 = vector.shape_cast %139 : vector<1x128x128xf32> to vector<128x128xf32>
    %c0_123 = arith.constant 0 : index
    %c0_124 = arith.constant 0 : index
    %c0_125 = arith.constant 0 : index
    %141 = vector.load %arg6[%c0_123, %c0_124, %c0_125] : memref<3x128x128xf32, #tpu.memory_space<vmem>>, vector<1x128x128xf32>
    %142 = vector.shape_cast %141 : vector<1x128x128xf32> to vector<128x128xf32>
    %c0_126 = arith.constant 0 : index
    %c2_127 = arith.constant 2 : index
    %143 = memref.load %arg1[%c0_126, %c2_127] : memref<3x4xf32, #tpu.memory_space<smem>>
    %144 = vector.broadcast %143 : f32 to vector<128x128xf32>
    %145 = arith.mulf %144, %140 : vector<128x128xf32>
    %146 = arith.addf %142, %145 : vector<128x128xf32>
    %c0_128 = arith.constant 0 : index
    %c0_129 = arith.constant 0 : index
    %c0_130 = arith.constant 0 : index
    %147 = vector.load %arg6[%c0_128, %c0_129, %c0_130] : memref<3x128x128xf32, #tpu.memory_space<vmem>>, vector<1x128x128xf32>
    %148 = vector.shape_cast %147 : vector<1x128x128xf32> to vector<128x128xf32>
    %149 = vector.shape_cast %146 : vector<128x128xf32> to vector<1x128x128xf32>
    tpu.vector_store %arg6[%c0_128, %c0_129, %c0_130], %149 {strides = array<i32>} : memref<3x128x128xf32, #tpu.memory_space<vmem>>, vector<1x128x128xf32>,
    %c0_131 = arith.constant 0 : index
    %c0_132 = arith.constant 0 : index
    %c0_133 = arith.constant 0 : index
    %150 = vector.load %arg7[%c0_131, %c0_132, %c0_133] : memref<3x128x128xf32, #tpu.memory_space<vmem>>, vector<1x128x128xf32>
    %151 = vector.shape_cast %150 : vector<1x128x128xf32> to vector<128x128xf32>
    %c0_134 = arith.constant 0 : index
    %c2_135 = arith.constant 2 : index
    %152 = memref.load %arg2[%c0_134, %c2_135] : memref<3x4xf32, #tpu.memory_space<smem>>
    %153 = vector.broadcast %152 : f32 to vector<128x128xf32>
    %154 = arith.mulf %153, %140 : vector<128x128xf32>
    %155 = arith.addf %151, %154 : vector<128x128xf32>
    %c0_136 = arith.constant 0 : index
    %c0_137 = arith.constant 0 : index
    %c0_138 = arith.constant 0 : index
    %156 = vector.load %arg7[%c0_136, %c0_137, %c0_138] : memref<3x128x128xf32, #tpu.memory_space<vmem>>, vector<1x128x128xf32>
    %157 = vector.shape_cast %156 : vector<1x128x128xf32> to vector<128x128xf32>
    %158 = vector.shape_cast %155 : vector<128x128xf32> to vector<1x128x128xf32>
    tpu.vector_store %arg7[%c0_136, %c0_137, %c0_138], %158 {strides = array<i32>} : memref<3x128x128xf32, #tpu.memory_space<vmem>>, vector<1x128x128xf32>,
    %c0_139 = arith.constant 0 : index
    %c0_140 = arith.constant 0 : index
    %c0_141 = arith.constant 0 : index
    %159 = vector.load %arg8[%c0_139, %c0_140, %c0_141] : memref<3x128x128xf32, #tpu.memory_space<vmem>>, vector<1x128x128xf32>
    %160 = vector.shape_cast %159 : vector<1x128x128xf32> to vector<128x128xf32>
    %c0_142 = arith.constant 0 : index
    %c2_143 = arith.constant 2 : index
    %161 = memref.load %arg3[%c0_142, %c2_143] : memref<3x4xf32, #tpu.memory_space<smem>>
    %162 = vector.broadcast %161 : f32 to vector<128x128xf32>
    %163 = arith.mulf %162, %140 : vector<128x128xf32>
    %164 = arith.addf %160, %163 : vector<128x128xf32>
    %c0_144 = arith.constant 0 : index
    %c0_145 = arith.constant 0 : index
    %c0_146 = arith.constant 0 : index
    %165 = vector.load %arg8[%c0_144, %c0_145, %c0_146] : memref<3x128x128xf32, #tpu.memory_space<vmem>>, vector<1x128x128xf32>
    %166 = vector.shape_cast %165 : vector<1x128x128xf32> to vector<128x128xf32>
    %167 = vector.shape_cast %164 : vector<128x128xf32> to vector<1x128x128xf32>
    tpu.vector_store %arg8[%c0_144, %c0_145, %c0_146], %167 {strides = array<i32>} : memref<3x128x128xf32, #tpu.memory_space<vmem>>, vector<1x128x128xf32>,
    %c1_147 = arith.constant 1 : index
    %c0_148 = arith.constant 0 : index
    %c0_149 = arith.constant 0 : index
    %168 = vector.load %arg6[%c1_147, %c0_148, %c0_149] : memref<3x128x128xf32, #tpu.memory_space<vmem>>, vector<1x128x128xf32>
    %169 = vector.shape_cast %168 : vector<1x128x128xf32> to vector<128x128xf32>
    %c1_150 = arith.constant 1 : index
    %c2_151 = arith.constant 2 : index
    %170 = memref.load %arg1[%c1_150, %c2_151] : memref<3x4xf32, #tpu.memory_space<smem>>
    %171 = vector.broadcast %170 : f32 to vector<128x128xf32>
    %172 = arith.mulf %171, %140 : vector<128x128xf32>
    %173 = arith.addf %169, %172 : vector<128x128xf32>
    %c1_152 = arith.constant 1 : index
    %c0_153 = arith.constant 0 : index
    %c0_154 = arith.constant 0 : index
    %174 = vector.load %arg6[%c1_152, %c0_153, %c0_154] : memref<3x128x128xf32, #tpu.memory_space<vmem>>, vector<1x128x128xf32>
    %175 = vector.shape_cast %174 : vector<1x128x128xf32> to vector<128x128xf32>
    %176 = vector.shape_cast %173 : vector<128x128xf32> to vector<1x128x128xf32>
    tpu.vector_store %arg6[%c1_152, %c0_153, %c0_154], %176 {strides = array<i32>} : memref<3x128x128xf32, #tpu.memory_space<vmem>>, vector<1x128x128xf32>,
    %c1_155 = arith.constant 1 : index
    %c0_156 = arith.constant 0 : index
    %c0_157 = arith.constant 0 : index
    %177 = vector.load %arg7[%c1_155, %c0_156, %c0_157] : memref<3x128x128xf32, #tpu.memory_space<vmem>>, vector<1x128x128xf32>
    %178 = vector.shape_cast %177 : vector<1x128x128xf32> to vector<128x128xf32>
    %c1_158 = arith.constant 1 : index
    %c2_159 = arith.constant 2 : index
    %179 = memref.load %arg2[%c1_158, %c2_159] : memref<3x4xf32, #tpu.memory_space<smem>>
    %180 = vector.broadcast %179 : f32 to vector<128x128xf32>
    %181 = arith.mulf %180, %140 : vector<128x128xf32>
    %182 = arith.addf %178, %181 : vector<128x128xf32>
    %c1_160 = arith.constant 1 : index
    %c0_161 = arith.constant 0 : index
    %c0_162 = arith.constant 0 : index
    %183 = vector.load %arg7[%c1_160, %c0_161, %c0_162] : memref<3x128x128xf32, #tpu.memory_space<vmem>>, vector<1x128x128xf32>
    %184 = vector.shape_cast %183 : vector<1x128x128xf32> to vector<128x128xf32>
    %185 = vector.shape_cast %182 : vector<128x128xf32> to vector<1x128x128xf32>
    tpu.vector_store %arg7[%c1_160, %c0_161, %c0_162], %185 {strides = array<i32>} : memref<3x128x128xf32, #tpu.memory_space<vmem>>, vector<1x128x128xf32>,
    %c1_163 = arith.constant 1 : index
    %c0_164 = arith.constant 0 : index
    %c0_165 = arith.constant 0 : index
    %186 = vector.load %arg8[%c1_163, %c0_164, %c0_165] : memref<3x128x128xf32, #tpu.memory_space<vmem>>, vector<1x128x128xf32>
    %187 = vector.shape_cast %186 : vector<1x128x128xf32> to vector<128x128xf32>
    %c1_166 = arith.constant 1 : index
    %c2_167 = arith.constant 2 : index
    %188 = memref.load %arg3[%c1_166, %c2_167] : memref<3x4xf32, #tpu.memory_space<smem>>
    %189 = vector.broadcast %188 : f32 to vector<128x128xf32>
    %190 = arith.mulf %189, %140 : vector<128x128xf32>
    %191 = arith.addf %187, %190 : vector<128x128xf32>
    %c1_168 = arith.constant 1 : index
    %c0_169 = arith.constant 0 : index
    %c0_170 = arith.constant 0 : index
    %192 = vector.load %arg8[%c1_168, %c0_169, %c0_170] : memref<3x128x128xf32, #tpu.memory_space<vmem>>, vector<1x128x128xf32>
    %193 = vector.shape_cast %192 : vector<1x128x128xf32> to vector<128x128xf32>
    %194 = vector.shape_cast %191 : vector<128x128xf32> to vector<1x128x128xf32>
    tpu.vector_store %arg8[%c1_168, %c0_169, %c0_170], %194 {strides = array<i32>} : memref<3x128x128xf32, #tpu.memory_space<vmem>>, vector<1x128x128xf32>,
    %c2_171 = arith.constant 2 : index
    %c0_172 = arith.constant 0 : index
    %c0_173 = arith.constant 0 : index
    %195 = vector.load %arg6[%c2_171, %c0_172, %c0_173] : memref<3x128x128xf32, #tpu.memory_space<vmem>>, vector<1x128x128xf32>
    %196 = vector.shape_cast %195 : vector<1x128x128xf32> to vector<128x128xf32>
    %c2_174 = arith.constant 2 : index
    %c2_175 = arith.constant 2 : index
    %197 = memref.load %arg1[%c2_174, %c2_175] : memref<3x4xf32, #tpu.memory_space<smem>>
    %198 = vector.broadcast %197 : f32 to vector<128x128xf32>
    %199 = arith.mulf %198, %140 : vector<128x128xf32>
    %200 = arith.addf %196, %199 : vector<128x128xf32>
    %c2_176 = arith.constant 2 : index
    %c0_177 = arith.constant 0 : index
    %c0_178 = arith.constant 0 : index
    %201 = vector.load %arg6[%c2_176, %c0_177, %c0_178] : memref<3x128x128xf32, #tpu.memory_space<vmem>>, vector<1x128x128xf32>
    %202 = vector.shape_cast %201 : vector<1x128x128xf32> to vector<128x128xf32>
    %203 = vector.shape_cast %200 : vector<128x128xf32> to vector<1x128x128xf32>
    tpu.vector_store %arg6[%c2_176, %c0_177, %c0_178], %203 {strides = array<i32>} : memref<3x128x128xf32, #tpu.memory_space<vmem>>, vector<1x128x128xf32>,
    %c2_179 = arith.constant 2 : index
    %c0_180 = arith.constant 0 : index
    %c0_181 = arith.constant 0 : index
    %204 = vector.load %arg7[%c2_179, %c0_180, %c0_181] : memref<3x128x128xf32, #tpu.memory_space<vmem>>, vector<1x128x128xf32>
    %205 = vector.shape_cast %204 : vector<1x128x128xf32> to vector<128x128xf32>
    %c2_182 = arith.constant 2 : index
    %c2_183 = arith.constant 2 : index
    %206 = memref.load %arg2[%c2_182, %c2_183] : memref<3x4xf32, #tpu.memory_space<smem>>
    %207 = vector.broadcast %206 : f32 to vector<128x128xf32>
    %208 = arith.mulf %207, %140 : vector<128x128xf32>
    %209 = arith.addf %205, %208 : vector<128x128xf32>
    %c2_184 = arith.constant 2 : index
    %c0_185 = arith.constant 0 : index
    %c0_186 = arith.constant 0 : index
    %210 = vector.load %arg7[%c2_184, %c0_185, %c0_186] : memref<3x128x128xf32, #tpu.memory_space<vmem>>, vector<1x128x128xf32>
    %211 = vector.shape_cast %210 : vector<1x128x128xf32> to vector<128x128xf32>
    %212 = vector.shape_cast %209 : vector<128x128xf32> to vector<1x128x128xf32>
    tpu.vector_store %arg7[%c2_184, %c0_185, %c0_186], %212 {strides = array<i32>} : memref<3x128x128xf32, #tpu.memory_space<vmem>>, vector<1x128x128xf32>,
    %c2_187 = arith.constant 2 : index
    %c0_188 = arith.constant 0 : index
    %c0_189 = arith.constant 0 : index
    %213 = vector.load %arg8[%c2_187, %c0_188, %c0_189] : memref<3x128x128xf32, #tpu.memory_space<vmem>>, vector<1x128x128xf32>
    %214 = vector.shape_cast %213 : vector<1x128x128xf32> to vector<128x128xf32>
    %c2_190 = arith.constant 2 : index
    %c2_191 = arith.constant 2 : index
    %215 = memref.load %arg3[%c2_190, %c2_191] : memref<3x4xf32, #tpu.memory_space<smem>>
    %216 = vector.broadcast %215 : f32 to vector<128x128xf32>
    %217 = arith.mulf %216, %140 : vector<128x128xf32>
    %218 = arith.addf %214, %217 : vector<128x128xf32>
    %c2_192 = arith.constant 2 : index
    %c0_193 = arith.constant 0 : index
    %c0_194 = arith.constant 0 : index
    %219 = vector.load %arg8[%c2_192, %c0_193, %c0_194] : memref<3x128x128xf32, #tpu.memory_space<vmem>>, vector<1x128x128xf32>
    %220 = vector.shape_cast %219 : vector<1x128x128xf32> to vector<128x128xf32>
    %221 = vector.shape_cast %218 : vector<128x128xf32> to vector<1x128x128xf32>
    tpu.vector_store %arg8[%c2_192, %c0_193, %c0_194], %221 {strides = array<i32>} : memref<3x128x128xf32, #tpu.memory_space<vmem>>, vector<1x128x128xf32>,
    %c3 = arith.constant 3 : index
    %c0_195 = arith.constant 0 : index
    %c0_196 = arith.constant 0 : index
    %222 = vector.load %arg4[%c3, %c0_195, %c0_196] : memref<4x128x128xf32, #tpu.memory_space<vmem>>, vector<1x128x128xf32>
    %223 = vector.shape_cast %222 : vector<1x128x128xf32> to vector<128x128xf32>
    %c0_197 = arith.constant 0 : index
    %c0_198 = arith.constant 0 : index
    %c0_199 = arith.constant 0 : index
    %224 = vector.load %arg6[%c0_197, %c0_198, %c0_199] : memref<3x128x128xf32, #tpu.memory_space<vmem>>, vector<1x128x128xf32>
    %225 = vector.shape_cast %224 : vector<1x128x128xf32> to vector<128x128xf32>
    %c0_200 = arith.constant 0 : index
    %c3_201 = arith.constant 3 : index
    %226 = memref.load %arg1[%c0_200, %c3_201] : memref<3x4xf32, #tpu.memory_space<smem>>
    %227 = vector.broadcast %226 : f32 to vector<128x128xf32>
    %228 = arith.mulf %227, %223 : vector<128x128xf32>
    %229 = arith.addf %225, %228 : vector<128x128xf32>
    %c0_202 = arith.constant 0 : index
    %c0_203 = arith.constant 0 : index
    %c0_204 = arith.constant 0 : index
    %230 = vector.load %arg6[%c0_202, %c0_203, %c0_204] : memref<3x128x128xf32, #tpu.memory_space<vmem>>, vector<1x128x128xf32>
    %231 = vector.shape_cast %230 : vector<1x128x128xf32> to vector<128x128xf32>
    %232 = vector.shape_cast %229 : vector<128x128xf32> to vector<1x128x128xf32>
    tpu.vector_store %arg6[%c0_202, %c0_203, %c0_204], %232 {strides = array<i32>} : memref<3x128x128xf32, #tpu.memory_space<vmem>>, vector<1x128x128xf32>,
    %c0_205 = arith.constant 0 : index
    %c0_206 = arith.constant 0 : index
    %c0_207 = arith.constant 0 : index
    %233 = vector.load %arg7[%c0_205, %c0_206, %c0_207] : memref<3x128x128xf32, #tpu.memory_space<vmem>>, vector<1x128x128xf32>
    %234 = vector.shape_cast %233 : vector<1x128x128xf32> to vector<128x128xf32>
    %c0_208 = arith.constant 0 : index
    %c3_209 = arith.constant 3 : index
    %235 = memref.load %arg2[%c0_208, %c3_209] : memref<3x4xf32, #tpu.memory_space<smem>>
    %236 = vector.broadcast %235 : f32 to vector<128x128xf32>
    %237 = arith.mulf %236, %223 : vector<128x128xf32>
    %238 = arith.addf %234, %237 : vector<128x128xf32>
    %c0_210 = arith.constant 0 : index
    %c0_211 = arith.constant 0 : index
    %c0_212 = arith.constant 0 : index
    %239 = vector.load %arg7[%c0_210, %c0_211, %c0_212] : memref<3x128x128xf32, #tpu.memory_space<vmem>>, vector<1x128x128xf32>
    %240 = vector.shape_cast %239 : vector<1x128x128xf32> to vector<128x128xf32>
    %241 = vector.shape_cast %238 : vector<128x128xf32> to vector<1x128x128xf32>
    tpu.vector_store %arg7[%c0_210, %c0_211, %c0_212], %241 {strides = array<i32>} : memref<3x128x128xf32, #tpu.memory_space<vmem>>, vector<1x128x128xf32>,
    %c0_213 = arith.constant 0 : index
    %c0_214 = arith.constant 0 : index
    %c0_215 = arith.constant 0 : index
    %242 = vector.load %arg8[%c0_213, %c0_214, %c0_215] : memref<3x128x128xf32, #tpu.memory_space<vmem>>, vector<1x128x128xf32>
    %243 = vector.shape_cast %242 : vector<1x128x128xf32> to vector<128x128xf32>
    %c0_216 = arith.constant 0 : index
    %c3_217 = arith.constant 3 : index
    %244 = memref.load %arg3[%c0_216, %c3_217] : memref<3x4xf32, #tpu.memory_space<smem>>
    %245 = vector.broadcast %244 : f32 to vector<128x128xf32>
    %246 = arith.mulf %245, %223 : vector<128x128xf32>
    %247 = arith.addf %243, %246 : vector<128x128xf32>
    %c0_218 = arith.constant 0 : index
    %c0_219 = arith.constant 0 : index
    %c0_220 = arith.constant 0 : index
    %248 = vector.load %arg8[%c0_218, %c0_219, %c0_220] : memref<3x128x128xf32, #tpu.memory_space<vmem>>, vector<1x128x128xf32>
    %249 = vector.shape_cast %248 : vector<1x128x128xf32> to vector<128x128xf32>
    %250 = vector.shape_cast %247 : vector<128x128xf32> to vector<1x128x128xf32>
    tpu.vector_store %arg8[%c0_218, %c0_219, %c0_220], %250 {strides = array<i32>} : memref<3x128x128xf32, #tpu.memory_space<vmem>>, vector<1x128x128xf32>,
    %c1_221 = arith.constant 1 : index
    %c0_222 = arith.constant 0 : index
    %c0_223 = arith.constant 0 : index
    %251 = vector.load %arg6[%c1_221, %c0_222, %c0_223] : memref<3x128x128xf32, #tpu.memory_space<vmem>>, vector<1x128x128xf32>
    %252 = vector.shape_cast %251 : vector<1x128x128xf32> to vector<128x128xf32>
    %c1_224 = arith.constant 1 : index
    %c3_225 = arith.constant 3 : index
    %253 = memref.load %arg1[%c1_224, %c3_225] : memref<3x4xf32, #tpu.memory_space<smem>>
    %254 = vector.broadcast %253 : f32 to vector<128x128xf32>
    %255 = arith.mulf %254, %223 : vector<128x128xf32>
    %256 = arith.addf %252, %255 : vector<128x128xf32>
    %c1_226 = arith.constant 1 : index
    %c0_227 = arith.constant 0 : index
    %c0_228 = arith.constant 0 : index
    %257 = vector.load %arg6[%c1_226, %c0_227, %c0_228] : memref<3x128x128xf32, #tpu.memory_space<vmem>>, vector<1x128x128xf32>
    %258 = vector.shape_cast %257 : vector<1x128x128xf32> to vector<128x128xf32>
    %259 = vector.shape_cast %256 : vector<128x128xf32> to vector<1x128x128xf32>
    tpu.vector_store %arg6[%c1_226, %c0_227, %c0_228], %259 {strides = array<i32>} : memref<3x128x128xf32, #tpu.memory_space<vmem>>, vector<1x128x128xf32>,
    %c1_229 = arith.constant 1 : index
    %c0_230 = arith.constant 0 : index
    %c0_231 = arith.constant 0 : index
    %260 = vector.load %arg7[%c1_229, %c0_230, %c0_231] : memref<3x128x128xf32, #tpu.memory_space<vmem>>, vector<1x128x128xf32>
    %261 = vector.shape_cast %260 : vector<1x128x128xf32> to vector<128x128xf32>
    %c1_232 = arith.constant 1 : index
    %c3_233 = arith.constant 3 : index
    %262 = memref.load %arg2[%c1_232, %c3_233] : memref<3x4xf32, #tpu.memory_space<smem>>
    %263 = vector.broadcast %262 : f32 to vector<128x128xf32>
    %264 = arith.mulf %263, %223 : vector<128x128xf32>
    %265 = arith.addf %261, %264 : vector<128x128xf32>
    %c1_234 = arith.constant 1 : index
    %c0_235 = arith.constant 0 : index
    %c0_236 = arith.constant 0 : index
    %266 = vector.load %arg7[%c1_234, %c0_235, %c0_236] : memref<3x128x128xf32, #tpu.memory_space<vmem>>, vector<1x128x128xf32>
    %267 = vector.shape_cast %266 : vector<1x128x128xf32> to vector<128x128xf32>
    %268 = vector.shape_cast %265 : vector<128x128xf32> to vector<1x128x128xf32>
    tpu.vector_store %arg7[%c1_234, %c0_235, %c0_236], %268 {strides = array<i32>} : memref<3x128x128xf32, #tpu.memory_space<vmem>>, vector<1x128x128xf32>,
    %c1_237 = arith.constant 1 : index
    %c0_238 = arith.constant 0 : index
    %c0_239 = arith.constant 0 : index
    %269 = vector.load %arg8[%c1_237, %c0_238, %c0_239] : memref<3x128x128xf32, #tpu.memory_space<vmem>>, vector<1x128x128xf32>
    %270 = vector.shape_cast %269 : vector<1x128x128xf32> to vector<128x128xf32>
    %c1_240 = arith.constant 1 : index
    %c3_241 = arith.constant 3 : index
    %271 = memref.load %arg3[%c1_240, %c3_241] : memref<3x4xf32, #tpu.memory_space<smem>>
    %272 = vector.broadcast %271 : f32 to vector<128x128xf32>
    %273 = arith.mulf %272, %223 : vector<128x128xf32>
    %274 = arith.addf %270, %273 : vector<128x128xf32>
    %c1_242 = arith.constant 1 : index
    %c0_243 = arith.constant 0 : index
    %c0_244 = arith.constant 0 : index
    %275 = vector.load %arg8[%c1_242, %c0_243, %c0_244] : memref<3x128x128xf32, #tpu.memory_space<vmem>>, vector<1x128x128xf32>
    %276 = vector.shape_cast %275 : vector<1x128x128xf32> to vector<128x128xf32>
    %277 = vector.shape_cast %274 : vector<128x128xf32> to vector<1x128x128xf32>
    tpu.vector_store %arg8[%c1_242, %c0_243, %c0_244], %277 {strides = array<i32>} : memref<3x128x128xf32, #tpu.memory_space<vmem>>, vector<1x128x128xf32>,
    %c2_245 = arith.constant 2 : index
    %c0_246 = arith.constant 0 : index
    %c0_247 = arith.constant 0 : index
    %278 = vector.load %arg6[%c2_245, %c0_246, %c0_247] : memref<3x128x128xf32, #tpu.memory_space<vmem>>, vector<1x128x128xf32>
    %279 = vector.shape_cast %278 : vector<1x128x128xf32> to vector<128x128xf32>
    %c2_248 = arith.constant 2 : index
    %c3_249 = arith.constant 3 : index
    %280 = memref.load %arg1[%c2_248, %c3_249] : memref<3x4xf32, #tpu.memory_space<smem>>
    %281 = vector.broadcast %280 : f32 to vector<128x128xf32>
    %282 = arith.mulf %281, %223 : vector<128x128xf32>
    %283 = arith.addf %279, %282 : vector<128x128xf32>
    %c2_250 = arith.constant 2 : index
    %c0_251 = arith.constant 0 : index
    %c0_252 = arith.constant 0 : index
    %284 = vector.load %arg6[%c2_250, %c0_251, %c0_252] : memref<3x128x128xf32, #tpu.memory_space<vmem>>, vector<1x128x128xf32>
    %285 = vector.shape_cast %284 : vector<1x128x128xf32> to vector<128x128xf32>
    %286 = vector.shape_cast %283 : vector<128x128xf32> to vector<1x128x128xf32>
    tpu.vector_store %arg6[%c2_250, %c0_251, %c0_252], %286 {strides = array<i32>} : memref<3x128x128xf32, #tpu.memory_space<vmem>>, vector<1x128x128xf32>,
    %c2_253 = arith.constant 2 : index
    %c0_254 = arith.constant 0 : index
    %c0_255 = arith.constant 0 : index
    %287 = vector.load %arg7[%c2_253, %c0_254, %c0_255] : memref<3x128x128xf32, #tpu.memory_space<vmem>>, vector<1x128x128xf32>
    %288 = vector.shape_cast %287 : vector<1x128x128xf32> to vector<128x128xf32>
    %c2_256 = arith.constant 2 : index
    %c3_257 = arith.constant 3 : index
    %289 = memref.load %arg2[%c2_256, %c3_257] : memref<3x4xf32, #tpu.memory_space<smem>>
    %290 = vector.broadcast %289 : f32 to vector<128x128xf32>
    %291 = arith.mulf %290, %223 : vector<128x128xf32>
    %292 = arith.addf %288, %291 : vector<128x128xf32>
    %c2_258 = arith.constant 2 : index
    %c0_259 = arith.constant 0 : index
    %c0_260 = arith.constant 0 : index
    %293 = vector.load %arg7[%c2_258, %c0_259, %c0_260] : memref<3x128x128xf32, #tpu.memory_space<vmem>>, vector<1x128x128xf32>
    %294 = vector.shape_cast %293 : vector<1x128x128xf32> to vector<128x128xf32>
    %295 = vector.shape_cast %292 : vector<128x128xf32> to vector<1x128x128xf32>
    tpu.vector_store %arg7[%c2_258, %c0_259, %c0_260], %295 {strides = array<i32>} : memref<3x128x128xf32, #tpu.memory_space<vmem>>, vector<1x128x128xf32>,
    %c2_261 = arith.constant 2 : index
    %c0_262 = arith.constant 0 : index
    %c0_263 = arith.constant 0 : index
    %296 = vector.load %arg8[%c2_261, %c0_262, %c0_263] : memref<3x128x128xf32, #tpu.memory_space<vmem>>, vector<1x128x128xf32>
    %297 = vector.shape_cast %296 : vector<1x128x128xf32> to vector<128x128xf32>
    %c2_264 = arith.constant 2 : index
    %c3_265 = arith.constant 3 : index
    %298 = memref.load %arg3[%c2_264, %c3_265] : memref<3x4xf32, #tpu.memory_space<smem>>
    %299 = vector.broadcast %298 : f32 to vector<128x128xf32>
    %300 = arith.mulf %299, %223 : vector<128x128xf32>
    %301 = arith.addf %297, %300 : vector<128x128xf32>
    %c2_266 = arith.constant 2 : index
    %c0_267 = arith.constant 0 : index
    %c0_268 = arith.constant 0 : index
    %302 = vector.load %arg8[%c2_266, %c0_267, %c0_268] : memref<3x128x128xf32, #tpu.memory_space<vmem>>, vector<1x128x128xf32>
    %303 = vector.shape_cast %302 : vector<1x128x128xf32> to vector<128x128xf32>
    %304 = vector.shape_cast %301 : vector<128x128xf32> to vector<1x128x128xf32>
    tpu.vector_store %arg8[%c2_266, %c0_267, %c0_268], %304 {strides = array<i32>} : memref<3x128x128xf32, #tpu.memory_space<vmem>>, vector<1x128x128xf32>,
    %c0_269 = arith.constant 0 : index
    %c0_270 = arith.constant 0 : index
    %c0_271 = arith.constant 0 : index
    %305 = vector.load %arg6[%c0_269, %c0_270, %c0_271] : memref<3x128x128xf32, #tpu.memory_space<vmem>>, vector<1x128x128xf32>
    %306 = vector.shape_cast %305 : vector<1x128x128xf32> to vector<128x128xf32>
    %c0_272 = arith.constant 0 : index
    %c0_273 = arith.constant 0 : index
    %c0_274 = arith.constant 0 : index
    %307 = vector.load %arg7[%c0_272, %c0_273, %c0_274] : memref<3x128x128xf32, #tpu.memory_space<vmem>>, vector<1x128x128xf32>
    %308 = vector.shape_cast %307 : vector<1x128x128xf32> to vector<128x128xf32>
    %cst = arith.constant dense<0.000000e+00> : vector<128x128xf32>
    %309 = tpu.matmul %306, %308, %cst {dimension_numbers = #tpu.dot_dimension_numbers<[1], [0], [0], [1], [0, 0, 1, 1], [], []>} : vector<128x128xf32>, vector<128x128xf32>, vector<128x128xf32> -> vector<128x128xf32>
    %c0_275 = arith.constant 0 : index
    %c0_276 = arith.constant 0 : index
    %c0_277 = arith.constant 0 : index
    %310 = vector.load %arg8[%c0_275, %c0_276, %c0_277] : memref<3x128x128xf32, #tpu.memory_space<vmem>>, vector<1x128x128xf32>
    %311 = vector.shape_cast %310 : vector<1x128x128xf32> to vector<128x128xf32>
    %cst_278 = arith.constant dense<0.000000e+00> : vector<128x128xf32>
    %312 = tpu.matmul %309, %311, %cst_278 {dimension_numbers = #tpu.dot_dimension_numbers<[1], [0], [0], [1], [0, 0, 1, 1], [], []>} : vector<128x128xf32>, vector<128x128xf32>, vector<128x128xf32> -> vector<128x128xf32>
    %c0_279 = arith.constant 0 : index
    %c0_280 = arith.constant 0 : index
    %c0_281 = arith.constant 0 : index
    %313 = vector.load %arg5[%c0_279, %c0_280, %c0_281] : memref<3x128x128xf32, #tpu.memory_space<vmem>>, vector<1x128x128xf32>
    %314 = vector.shape_cast %313 : vector<1x128x128xf32> to vector<128x128xf32>
    %315 = vector.shape_cast %312 : vector<128x128xf32> to vector<1x128x128xf32>
    tpu.vector_store %arg5[%c0_279, %c0_280, %c0_281], %315 {strides = array<i32>} : memref<3x128x128xf32, #tpu.memory_space<vmem>>, vector<1x128x128xf32>,
    %c1_282 = arith.constant 1 : index
    %c0_283 = arith.constant 0 : index
    %c0_284 = arith.constant 0 : index
    %316 = vector.load %arg6[%c1_282, %c0_283, %c0_284] : memref<3x128x128xf32, #tpu.memory_space<vmem>>, vector<1x128x128xf32>
    %317 = vector.shape_cast %316 : vector<1x128x128xf32> to vector<128x128xf32>
    %c1_285 = arith.constant 1 : index
    %c0_286 = arith.constant 0 : index
    %c0_287 = arith.constant 0 : index
    %318 = vector.load %arg7[%c1_285, %c0_286, %c0_287] : memref<3x128x128xf32, #tpu.memory_space<vmem>>, vector<1x128x128xf32>
    %319 = vector.shape_cast %318 : vector<1x128x128xf32> to vector<128x128xf32>
    %cst_288 = arith.constant dense<0.000000e+00> : vector<128x128xf32>
    %320 = tpu.matmul %317, %319, %cst_288 {dimension_numbers = #tpu.dot_dimension_numbers<[1], [0], [0], [1], [0, 0, 1, 1], [], []>} : vector<128x128xf32>, vector<128x128xf32>, vector<128x128xf32> -> vector<128x128xf32>
    %c1_289 = arith.constant 1 : index
    %c0_290 = arith.constant 0 : index
    %c0_291 = arith.constant 0 : index
    %321 = vector.load %arg8[%c1_289, %c0_290, %c0_291] : memref<3x128x128xf32, #tpu.memory_space<vmem>>, vector<1x128x128xf32>
    %322 = vector.shape_cast %321 : vector<1x128x128xf32> to vector<128x128xf32>
    %cst_292 = arith.constant dense<0.000000e+00> : vector<128x128xf32>
    %323 = tpu.matmul %320, %322, %cst_292 {dimension_numbers = #tpu.dot_dimension_numbers<[1], [0], [0], [1], [0, 0, 1, 1], [], []>} : vector<128x128xf32>, vector<128x128xf32>, vector<128x128xf32> -> vector<128x128xf32>
    %c1_293 = arith.constant 1 : index
    %c0_294 = arith.constant 0 : index
    %c0_295 = arith.constant 0 : index
    %324 = vector.load %arg5[%c1_293, %c0_294, %c0_295] : memref<3x128x128xf32, #tpu.memory_space<vmem>>, vector<1x128x128xf32>
    %325 = vector.shape_cast %324 : vector<1x128x128xf32> to vector<128x128xf32>
    %326 = vector.shape_cast %323 : vector<128x128xf32> to vector<1x128x128xf32>
    tpu.vector_store %arg5[%c1_293, %c0_294, %c0_295], %326 {strides = array<i32>} : memref<3x128x128xf32, #tpu.memory_space<vmem>>, vector<1x128x128xf32>,
    %c2_296 = arith.constant 2 : index
    %c0_297 = arith.constant 0 : index
    %c0_298 = arith.constant 0 : index
    %327 = vector.load %arg6[%c2_296, %c0_297, %c0_298] : memref<3x128x128xf32, #tpu.memory_space<vmem>>, vector<1x128x128xf32>
    %328 = vector.shape_cast %327 : vector<1x128x128xf32> to vector<128x128xf32>
    %c2_299 = arith.constant 2 : index
    %c0_300 = arith.constant 0 : index
    %c0_301 = arith.constant 0 : index
    %329 = vector.load %arg7[%c2_299, %c0_300, %c0_301] : memref<3x128x128xf32, #tpu.memory_space<vmem>>, vector<1x128x128xf32>
    %330 = vector.shape_cast %329 : vector<1x128x128xf32> to vector<128x128xf32>
    %cst_302 = arith.constant dense<0.000000e+00> : vector<128x128xf32>
    %331 = tpu.matmul %328, %330, %cst_302 {dimension_numbers = #tpu.dot_dimension_numbers<[1], [0], [0], [1], [0, 0, 1, 1], [], []>} : vector<128x128xf32>, vector<128x128xf32>, vector<128x128xf32> -> vector<128x128xf32>
    %c2_303 = arith.constant 2 : index
    %c0_304 = arith.constant 0 : index
    %c0_305 = arith.constant 0 : index
    %332 = vector.load %arg8[%c2_303, %c0_304, %c0_305] : memref<3x128x128xf32, #tpu.memory_space<vmem>>, vector<1x128x128xf32>
    %333 = vector.shape_cast %332 : vector<1x128x128xf32> to vector<128x128xf32>
    %cst_306 = arith.constant dense<0.000000e+00> : vector<128x128xf32>
    %334 = tpu.matmul %331, %333, %cst_306 {dimension_numbers = #tpu.dot_dimension_numbers<[1], [0], [0], [1], [0, 0, 1, 1], [], []>} : vector<128x128xf32>, vector<128x128xf32>, vector<128x128xf32> -> vector<128x128xf32>
    %c2_307 = arith.constant 2 : index
    %c0_308 = arith.constant 0 : index
    %c0_309 = arith.constant 0 : index
    %335 = vector.load %arg5[%c2_307, %c0_308, %c0_309] : memref<3x128x128xf32, #tpu.memory_space<vmem>>, vector<1x128x128xf32>
    %336 = vector.shape_cast %335 : vector<1x128x128xf32> to vector<128x128xf32>
    %337 = vector.shape_cast %334 : vector<128x128xf32> to vector<1x128x128xf32>
    tpu.vector_store %arg5[%c2_307, %c0_308, %c0_309], %337 {strides = array<i32>} : memref<3x128x128xf32, #tpu.memory_space<vmem>>, vector<1x128x128xf32>,
    return
  }
  func.func @transform_0(%arg0: i32) -> (i32, i32) {
    %c0_i32 = arith.constant 0 : i32
    %c0_i32_0 = arith.constant 0 : i32
    %c0_i32_1 = arith.constant 0 : i32
    return %c0_i32, %c0_i32_0 : i32, i32
  }
  func.func @transform_1(%arg0: i32) -> (i32, i32) {
    %c0_i32 = arith.constant 0 : i32
    %c0_i32_0 = arith.constant 0 : i32
    %c0_i32_1 = arith.constant 0 : i32
    return %c0_i32, %c0_i32_0 : i32, i32
  }
  func.func @transform_2(%arg0: i32) -> (i32, i32) {
    %c0_i32 = arith.constant 0 : i32
    %c0_i32_0 = arith.constant 0 : i32
    %c0_i32_1 = arith.constant 0 : i32
    return %c0_i32, %c0_i32_0 : i32, i32
  }
  func.func @transform_3(%arg0: i32) -> (i32, i32, i32) {
    %c0_i32 = arith.constant 0 : i32
    %c0_i32_0 = arith.constant 0 : i32
    %c0_i32_1 = arith.constant 0 : i32
    %c0_i32_2 = arith.constant 0 : i32
    return %c0_i32, %c0_i32_0, %c0_i32_1 : i32, i32, i32
  }
  func.func @transform_4(%arg0: i32) -> (i32, i32, i32) {
    %c0_i32 = arith.constant 0 : i32
    %c0_i32_0 = arith.constant 0 : i32
    %c0_i32_1 = arith.constant 0 : i32
    %c0_i32_2 = arith.constant 0 : i32
    return %c0_i32, %c0_i32_0, %c0_i32_1 : i32, i32, i32
  }
}

</mosaic_0001>

<llo_original>
// kernel: tpu_custom_call.1
$region0: #{tpu_custom_call.1}
  #allocation0 [shape = 'u32[]', space=smem, size = 0x4, offset = 0x4, fixed_abs, tag = 'smem constant byte address 0x4 - core index']
  #allocation1 [shape = 'u32[144,128]{1,0:T(1,128)}', space=vmem, size = 0x12000, scoped, tag = 'internal scratch']
  #allocation2 [shape = 'f32[3,128,128]{2,1,0:T(8,128)}', space=vmem, size = 0x30000, scoped, tag = 'scratch operand']
  #allocation3 [shape = 'f32[3,128,128]{2,1,0:T(8,128)}', space=vmem, size = 0x30000, scoped, tag = 'scratch operand']
  #allocation4 [shape = 'f32[3,128,128]{2,1,0:T(8,128)}', space=vmem, size = 0x30000, scoped, tag = 'scratch operand']
  %s0 = inlined_call_operand.hbm [shape: f32[3,4], index: 0, kind: input, shape index: {}]
  %s1 = inlined_call_operand.hbm [shape: f32[3,4], index: 1, kind: input, shape index: {}]
  %s2 = inlined_call_operand.vmem [shape: f32[3,4], index: 2, kind: input, shape index: {}]
  %s3 = inlined_call_operand.hbm [shape: f32[4,128,128], index: 3, kind: input, shape index: {}]
  %s4 = inlined_call_operand.hbm [shape: f32[3,128,128], index: 4, kind: output, shape index: {}]
  %s5 = sld [smem:[#allocation0]]
  $region42: #{tpu_custom_call.1} parent=0
    _
  %s7 = ssub.s32 1, %s5
  %s8 = scalar_select 0, %s7, %s5
  $region1: #{tpu_custom_call.1} parent=0
    #allocation5 [shape = 'u8[2048]{0}', space=smem, size = 0x800, scoped, tag = 'input window, operand 0, single buffered']
    #allocation6 [shape = 's32[1]{0}', space=sflag, size = 0x4, scoped, tag = 'scoped memory for tpu_custom_call.1']
    #allocation7 [shape = 's32[1]{0}', space=sflag, size = 0x4, scoped, tag = 'scoped memory for tpu_custom_call.1']
    #allocation8 [shape = 's32[1]{0}', space=sflag, size = 0x4, scoped, tag = 'scoped memory for tpu_custom_call.1']
    #allocation9 [shape = 's32[1]{0}', space=sflag, size = 0x4, scoped, tag = 'scoped memory for tpu_custom_call.1']
    #allocation10 [shape = 'u8[2048]{0}', space=smem, size = 0x800, scoped, tag = 'input window, operand 1, single buffered']
    #allocation11 [shape = 's32[1]{0}', space=sflag, size = 0x4, scoped, tag = 'scoped memory for tpu_custom_call.1']
    #allocation12 [shape = 'u8[2048]{0}', space=smem, size = 0x800, scoped, tag = 'input window, operand 2, single buffered']
    #allocation13 [shape = 'u8[262144]{0}', space=vmem, size = 0x40000, scoped, tag = 'input window, operand 3, single buffered']
    #allocation14 [shape = 'u8[196608]{0}', space=vmem, size = 0x30000, scoped, tag = 'output window, operand 0, single buffered']
    %9 = vsyncpa [#allocation8], 0
    %10 = vsyncpa [#allocation11], 0
    %11 = vsyncpa [#allocation9], 0
    %12 = vsyncpa [#allocation6], 0
    %13 = vsyncpa [#allocation7], 0
    // Predicated region
    $region2: #{tpu_custom_call.1} parent=1 // pred_check
      _
    $region3: #{tpu_custom_call.1} parent=1 // pred_check_branch
      %15 = sbr.rel (0) target = $region5
    $region4: #{tpu_custom_call.1} parent=1 // pred_region
      %s17 = ssub.s32 64, 64
      %18 = vsyncadd [#allocation8], %s17
      %21 = dma.hbm_to_smem %s0, 64, [#allocation5], [#allocation8]
    $region5: #{tpu_custom_call.1} parent=1 // pred_fallthru
      _
    // Predicated region
    $region6: #{tpu_custom_call.1} parent=1 // pred_check
      _
    $region7: #{tpu_custom_call.1} parent=1 // pred_check_branch
      %23 = sbr.rel (0) target = $region9
    $region8: #{tpu_custom_call.1} parent=1 // pred_region
      %s25 = ssub.s32 64, 64
      %26 = vsyncadd [#allocation11], %s25
      %29 = dma.hbm_to_smem %s1, 64, [#allocation10], [#allocation11]
    $region9: #{tpu_custom_call.1} parent=1 // pred_fallthru
      _
    // Predicated region
    $region10: #{tpu_custom_call.1} parent=1 // pred_check
      _
    $region11: #{tpu_custom_call.1} parent=1 // pred_check_branch
      %31 = sbr.rel (0) target = $region13
    $region12: #{tpu_custom_call.1} parent=1 // pred_region
      %s33 = ssub.s32 64, 64
      %34 = vsyncadd [#allocation9], %s33
      %s36 = sshll.u32 %s2, 4
      %s37 = int_to_ptr.vmem [resolvable:$true] %s36
      %39 = dma.vmem_to_smem %s37, 64, [#allocation12], [#allocation9]
    $region13: #{tpu_custom_call.1} parent=1 // pred_fallthru
      _
    // Predicated region
    $region14: #{tpu_custom_call.1} parent=1 // pred_check
      _
    $region15: #{tpu_custom_call.1} parent=1 // pred_check_branch
      %41 = sbr.rel (0) target = $region17
    $region16: #{tpu_custom_call.1} parent=1 // pred_region
      %s43 = ssub.s32 8192, 8192
      %44 = vsyncadd [#allocation6], %s43
      %s45 = sshll.u32 [#allocation13], 4
      %s46 = int_to_ptr.vmem [resolvable:$true] %s45
      %51 = dma.hbm_to_vmem [thread:$0]  %s3, 8192, %s46, [#allocation6], 128, 128, 8
    $region17: #{tpu_custom_call.1} parent=1 // pred_fallthru
      _
    // Predicated region
    $region18: #{tpu_custom_call.1} parent=1 // pred_check
      _
    $region19: #{tpu_custom_call.1} parent=1 // pred_check_branch
      %53 = sbr.rel (0) target = $region21
    $region20: #{tpu_custom_call.1} parent=1 // pred_region
      %54 = dma.done [#allocation8], 64
    $region21: #{tpu_custom_call.1} parent=1 // pred_fallthru
      _
    // Predicated region
    $region22: #{tpu_custom_call.1} parent=1 // pred_check
      _
    $region23: #{tpu_custom_call.1} parent=1 // pred_check_branch
      %56 = sbr.rel (0) target = $region25
    $region24: #{tpu_custom_call.1} parent=1 // pred_region
      %57 = dma.done [#allocation11], 64
    $region25: #{tpu_custom_call.1} parent=1 // pred_fallthru
      _
    // Predicated region
    $region26: #{tpu_custom_call.1} parent=1 // pred_check
      _
    $region27: #{tpu_custom_call.1} parent=1 // pred_check_branch
      %59 = sbr.rel (0) target = $region29
    $region28: #{tpu_custom_call.1} parent=1 // pred_region
      %60 = dma.done [#allocation9], 64
    $region29: #{tpu_custom_call.1} parent=1 // pred_fallthru
      _
    // Predicated region
    $region30: #{tpu_custom_call.1} parent=1 // pred_check
      _
    $region31: #{tpu_custom_call.1} parent=1 // pred_check_branch
      %62 = sbr.rel (0) target = $region33
    $region32: #{tpu_custom_call.1} parent=1 // pred_region
      %63 = dma.done [#allocation6], 8192
    $region33: #{tpu_custom_call.1} parent=1 // pred_fallthru
      _
    %64 = sfence
    %v65 = vld [vmem:[#allocation13] sm:$0xff]
    %v66 = vld [vmem:[#allocation13 + $0x8] sm:$0xff]
    %v67 = vld [vmem:[#allocation13 + $0x10] sm:$0xff]
    %v68 = vld [vmem:[#allocation13 + $0x18] sm:$0xff]
    %v69 = vld [vmem:[#allocation13 + $0x20] sm:$0xff]
    %v70 = vld [vmem:[#allocation13 + $0x28] sm:$0xff]
    %v71 = vld [vmem:[#allocation13 + $0x30] sm:$0xff]
    %v72 = vld [vmem:[#allocation13 + $0x38] sm:$0xff]
    %v73 = vld [vmem:[#allocation13 + $0x40] sm:$0xff]
    %v74 = vld [vmem:[#allocation13 + $0x48] sm:$0xff]
    %v75 = vld [vmem:[#allocation13 + $0x50] sm:$0xff]
    %v76 = vld [vmem:[#allocation13 + $0x58] sm:$0xff]
    %v77 = vld [vmem:[#allocation13 + $0x60] sm:$0xff]
    %v78 = vld [vmem:[#allocation13 + $0x68] sm:$0xff]
    %v79 = vld [vmem:[#allocation13 + $0x70] sm:$0xff]
    %v80 = vld [vmem:[#allocation13 + $0x78] sm:$0xff]
    %s81 = sld [smem:[#allocation5]]
    %v82 = vstv %s81
    %v83 = vmul.f32 %v82, %v65
    %v84 = vmul.f32 %v82, %v66
    %v85 = vmul.f32 %v82, %v67
    %v86 = vmul.f32 %v82, %v68
    %v87 = vmul.f32 %v82, %v69
    %v88 = vmul.f32 %v82, %v70
    %v89 = vmul.f32 %v82, %v71
    %v90 = vmul.f32 %v82, %v72
    %v91 = vmul.f32 %v82, %v73
    %v92 = vmul.f32 %v82, %v74
    %v93 = vmul.f32 %v82, %v75
    %v94 = vmul.f32 %v82, %v76
    %v95 = vmul.f32 %v82, %v77
    %v96 = vmul.f32 %v82, %v78
    %v97 = vmul.f32 %v82, %v79
    %v98 = vmul.f32 %v82, %v80
    %99 = vst [vmem:[#allocation2] sm:$0xff] %v83
    %100 = vst [vmem:[#allocation2 + $0x8] sm:$0xff] %v84
    %101 = vst [vmem:[#allocation2 + $0x10] sm:$0xff] %v85
    %102 = vst [vmem:[#allocation2 + $0x18] sm:$0xff] %v86
    %103 = vst [vmem:[#allocation2 + $0x20] sm:$0xff] %v87
    %104 = vst [vmem:[#allocation2 + $0x28] sm:$0xff] %v88
    %105 = vst [vmem:[#allocation2 + $0x30] sm:$0xff] %v89
    %106 = vst [vmem:[#allocation2 + $0x38] sm:$0xff] %v90
    %107 = vst [vmem:[#allocation2 + $0x40] sm:$0xff] %v91
    %108 = vst [vmem:[#allocation2 + $0x48] sm:$0xff] %v92
    %109 = vst [vmem:[#allocation2 + $0x50] sm:$0xff] %v93
    %110 = vst [vmem:[#allocation2 + $0x58] sm:$0xff] %v94
    %111 = vst [vmem:[#allocation2 + $0x60] sm:$0xff] %v95
    %112 = vst [vmem:[#allocation2 + $0x68] sm:$0xff] %v96
    %113 = vst [vmem:[#allocation2 + $0x70] sm:$0xff] %v97
    %114 = vst [vmem:[#allocation2 + $0x78] sm:$0xff] %v98
    %s115 = sld [smem:[#allocation10]]
    %v116 = vstv %s115
    %v117 = vmul.f32 %v116, %v65
    %v118 = vmul.f32 %v116, %v66
    %v119 = vmul.f32 %v116, %v67
    %v120 = vmul.f32 %v116, %v68
    %v121 = vmul.f32 %v116, %v69
    %v122 = vmul.f32 %v116, %v70
    %v123 = vmul.f32 %v116, %v71
    %v124 = vmul.f32 %v116, %v72
    %v125 = vmul.f32 %v116, %v73
    %v126 = vmul.f32 %v116, %v74
    %v127 = vmul.f32 %v116, %v75
    %v128 = vmul.f32 %v116, %v76
    %v129 = vmul.f32 %v116, %v77
    %v130 = vmul.f32 %v116, %v78
    %v131 = vmul.f32 %v116, %v79
    %v132 = vmul.f32 %v116, %v80
    %133 = vst [vmem:[#allocation3] sm:$0xff] %v117
    %134 = vst [vmem:[#allocation3 + $0x8] sm:$0xff] %v118
    %135 = vst [vmem:[#allocation3 + $0x10] sm:$0xff] %v119
    %136 = vst [vmem:[#allocation3 + $0x18] sm:$0xff] %v120
    %137 = vst [vmem:[#allocation3 + $0x20] sm:$0xff] %v121
    %138 = vst [vmem:[#allocation3 + $0x28] sm:$0xff] %v122
    %139 = vst [vmem:[#allocation3 + $0x30] sm:$0xff] %v123
    %140 = vst [vmem:[#allocation3 + $0x38] sm:$0xff] %v124
    %141 = vst [vmem:[#allocation3 + $0x40] sm:$0xff] %v125
    %142 = vst [vmem:[#allocation3 + $0x48] sm:$0xff] %v126
    %143 = vst [vmem:[#allocation3 + $0x50] sm:$0xff] %v127
    %144 = vst [vmem:[#allocation3 + $0x58] sm:$0xff] %v128
    %145 = vst [vmem:[#allocation3 + $0x60] sm:$0xff] %v129
    %146 = vst [vmem:[#allocation3 + $0x68] sm:$0xff] %v130
    %147 = vst [vmem:[#allocation3 + $0x70] sm:$0xff] %v131
    %148 = vst [vmem:[#allocation3 + $0x78] sm:$0xff] %v132
    %s149 = sld [smem:[#allocation12]]
    %v150 = vstv %s149
    %v151 = vmul.f32 %v150, %v65
    %v152 = vmul.f32 %v150, %v66
    %v153 = vmul.f32 %v150, %v67
    %v154 = vmul.f32 %v150, %v68
    %v155 = vmul.f32 %v150, %v69
    %v156 = vmul.f32 %v150, %v70
    %v157 = vmul.f32 %v150, %v71
    %v158 = vmul.f32 %v150, %v72
    %v159 = vmul.f32 %v150, %v73
    %v160 = vmul.f32 %v150, %v74
    %v161 = vmul.f32 %v150, %v75
    %v162 = vmul.f32 %v150, %v76
    %v163 = vmul.f32 %v150, %v77
    %v164 = vmul.f32 %v150, %v78
    %v165 = vmul.f32 %v150, %v79
    %v166 = vmul.f32 %v150, %v80
    %167 = vst [vmem:[#allocation4] sm:$0xff] %v151
    %168 = vst [vmem:[#allocation4 + $0x8] sm:$0xff] %v152
    %169 = vst [vmem:[#allocation4 + $0x10] sm:$0xff] %v153
    %170 = vst [vmem:[#allocation4 + $0x18] sm:$0xff] %v154
    %171 = vst [vmem:[#allocation4 + $0x20] sm:$0xff] %v155
    %172 = vst [vmem:[#allocation4 + $0x28] sm:$0xff] %v156
    %173 = vst [vmem:[#allocation4 + $0x30] sm:$0xff] %v157
    %174 = vst [vmem:[#allocation4 + $0x38] sm:$0xff] %v158
    %175 = vst [vmem:[#allocation4 + $0x40] sm:$0xff] %v159
    %176 = vst [vmem:[#allocation4 + $0x48] sm:$0xff] %v160
    %177 = vst [vmem:[#allocation4 + $0x50] sm:$0xff] %v161
    %178 = vst [vmem:[#allocation4 + $0x58] sm:$0xff] %v162
    %179 = vst [vmem:[#allocation4 + $0x60] sm:$0xff] %v163
    %180 = vst [vmem:[#allocation4 + $0x68] sm:$0xff] %v164
    %181 = vst [vmem:[#allocation4 + $0x70] sm:$0xff] %v165
    %182 = vst [vmem:[#allocation4 + $0x78] sm:$0xff] %v166
    %s183 = sld [smem:[#allocation5 + $0x80]]
    %v184 = vstv %s183
    %v185 = vmul.f32 %v184, %v65
    %v186 = vmul.f32 %v184, %v66
    %v187 = vmul.f32 %v184, %v67
    %v188 = vmul.f32 %v184, %v68
    %v189 = vmul.f32 %v184, %v69
    %v190 = vmul.f32 %v184, %v70
    %v191 = vmul.f32 %v184, %v71
    %v192 = vmul.f32 %v184, %v72
    %v193 = vmul.f32 %v184, %v73
    %v194 = vmul.f32 %v184, %v74
    %v195 = vmul.f32 %v184, %v75
    %v196 = vmul.f32 %v184, %v76
    %v197 = vmul.f32 %v184, %v77
    %v198 = vmul.f32 %v184, %v78
    %v199 = vmul.f32 %v184, %v79
    %v200 = vmul.f32 %v184, %v80
    %s201 = scalar_lea.vmem [#allocation2], 128
    %202 = vst [vmem:[%s201] sm:$0xff] %v185
    %203 = vst [vmem:[%s201 + $0x8] sm:$0xff] %v186
    %204 = vst [vmem:[%s201 + $0x10] sm:$0xff] %v187
    %205 = vst [vmem:[%s201 + $0x18] sm:$0xff] %v188
    %206 = vst [vmem:[%s201 + $0x20] sm:$0xff] %v189
    %207 = vst [vmem:[%s201 + $0x28] sm:$0xff] %v190
    %208 = vst [vmem:[%s201 + $0x30] sm:$0xff] %v191
    %209 = vst [vmem:[%s201 + $0x38] sm:$0xff] %v192
    %210 = vst [vmem:[%s201 + $0x40] sm:$0xff] %v193
    %211 = vst [vmem:[%s201 + $0x48] sm:$0xff] %v194
    %212 = vst [vmem:[%s201 + $0x50] sm:$0xff] %v195
    %213 = vst [vmem:[%s201 + $0x58] sm:$0xff] %v196
    %214 = vst [vmem:[%s201 + $0x60] sm:$0xff] %v197
    %215 = vst [vmem:[%s201 + $0x68] sm:$0xff] %v198
    %216 = vst [vmem:[%s201 + $0x70] sm:$0xff] %v199
    %217 = vst [vmem:[%s201 + $0x78] sm:$0xff] %v200
    %s218 = sld [smem:[#allocation10 + $0x80]]
    %v219 = vstv %s218
    %v220 = vmul.f32 %v219, %v65
    %v221 = vmul.f32 %v219, %v66
    %v222 = vmul.f32 %v219, %v67
    %v223 = vmul.f32 %v219, %v68
    %v224 = vmul.f32 %v219, %v69
    %v225 = vmul.f32 %v219, %v70
    %v226 = vmul.f32 %v219, %v71
    %v227 = vmul.f32 %v219, %v72
    %v228 = vmul.f32 %v219, %v73
    %v229 = vmul.f32 %v219, %v74
    %v230 = vmul.f32 %v219, %v75
    %v231 = vmul.f32 %v219, %v76
    %v232 = vmul.f32 %v219, %v77
    %v233 = vmul.f32 %v219, %v78
    %v234 = vmul.f32 %v219, %v79
    %v235 = vmul.f32 %v219, %v80
    %s236 = scalar_lea.vmem [#allocation3], 128
    %237 = vst [vmem:[%s236] sm:$0xff] %v220
    %238 = vst [vmem:[%s236 + $0x8] sm:$0xff] %v221
    %239 = vst [vmem:[%s236 + $0x10] sm:$0xff] %v222
    %240 = vst [vmem:[%s236 + $0x18] sm:$0xff] %v223
    %241 = vst [vmem:[%s236 + $0x20] sm:$0xff] %v224
    %242 = vst [vmem:[%s236 + $0x28] sm:$0xff] %v225
    %243 = vst [vmem:[%s236 + $0x30] sm:$0xff] %v226
    %244 = vst [vmem:[%s236 + $0x38] sm:$0xff] %v227
    %245 = vst [vmem:[%s236 + $0x40] sm:$0xff] %v228
    %246 = vst [vmem:[%s236 + $0x48] sm:$0xff] %v229
    %247 = vst [vmem:[%s236 + $0x50] sm:$0xff] %v230
    %248 = vst [vmem:[%s236 + $0x58] sm:$0xff] %v231
    %249 = vst [vmem:[%s236 + $0x60] sm:$0xff] %v232
    %250 = vst [vmem:[%s236 + $0x68] sm:$0xff] %v233
    %251 = vst [vmem:[%s236 + $0x70] sm:$0xff] %v234
    %252 = vst [vmem:[%s236 + $0x78] sm:$0xff] %v235
    %s253 = sld [smem:[#allocation12 + $0x80]]
    %v254 = vstv %s253
    %v255 = vmul.f32 %v254, %v65
    %v256 = vmul.f32 %v254, %v66
    %v257 = vmul.f32 %v254, %v67
    %v258 = vmul.f32 %v254, %v68
    %v259 = vmul.f32 %v254, %v69
    %v260 = vmul.f32 %v254, %v70
    %v261 = vmul.f32 %v254, %v71
    %v262 = vmul.f32 %v254, %v72
    %v263 = vmul.f32 %v254, %v73
    %v264 = vmul.f32 %v254, %v74
    %v265 = vmul.f32 %v254, %v75
    %v266 = vmul.f32 %v254, %v76
    %v267 = vmul.f32 %v254, %v77
    %v268 = vmul.f32 %v254, %v78
    %v269 = vmul.f32 %v254, %v79
    %v270 = vmul.f32 %v254, %v80
    %s271 = scalar_lea.vmem [#allocation4], 128
    %272 = vst [vmem:[%s271] sm:$0xff] %v255
    %273 = vst [vmem:[%s271 + $0x8] sm:$0xff] %v256
    %274 = vst [vmem:[%s271 + $0x10] sm:$0xff] %v257
    %275 = vst [vmem:[%s271 + $0x18] sm:$0xff] %v258
    %276 = vst [vmem:[%s271 + $0x20] sm:$0xff] %v259
    %277 = vst [vmem:[%s271 + $0x28] sm:$0xff] %v260
    %278 = vst [vmem:[%s271 + $0x30] sm:$0xff] %v261
    %279 = vst [vmem:[%s271 + $0x38] sm:$0xff] %v262
    %280 = vst [vmem:[%s271 + $0x40] sm:$0xff] %v263
    %281 = vst [vmem:[%s271 + $0x48] sm:$0xff] %v264
    %282 = vst [vmem:[%s271 + $0x50] sm:$0xff] %v265
    %283 = vst [vmem:[%s271 + $0x58] sm:$0xff] %v266
    %284 = vst [vmem:[%s271 + $0x60] sm:$0xff] %v267
    %285 = vst [vmem:[%s271 + $0x68] sm:$0xff] %v268
    %286 = vst [vmem:[%s271 + $0x70] sm:$0xff] %v269
    %287 = vst [vmem:[%s271 + $0x78] sm:$0xff] %v270
    %s288 = sld [smem:[#allocation5 + $0x100]]
    %v289 = vstv %s288
    %v290 = vmul.f32 %v289, %v65
    %v291 = vmul.f32 %v289, %v66
    %v292 = vmul.f32 %v289, %v67
    %v293 = vmul.f32 %v289, %v68
    %v294 = vmul.f32 %v289, %v69
    %v295 = vmul.f32 %v289, %v70
    %v296 = vmul.f32 %v289, %v71
    %v297 = vmul.f32 %v289, %v72
    %v298 = vmul.f32 %v289, %v73
    %v299 = vmul.f32 %v289, %v74
    %v300 = vmul.f32 %v289, %v75
    %v301 = vmul.f32 %v289, %v76
    %v302 = vmul.f32 %v289, %v77
    %v303 = vmul.f32 %v289, %v78
    %v304 = vmul.f32 %v289, %v79
    %v305 = vmul.f32 %v289, %v80
    %s306 = scalar_lea.vmem [#allocation2], 256
    %307 = vst [vmem:[%s306] sm:$0xff] %v290
    %308 = vst [vmem:[%s306 + $0x8] sm:$0xff] %v291
    %309 = vst [vmem:[%s306 + $0x10] sm:$0xff] %v292
    %310 = vst [vmem:[%s306 + $0x18] sm:$0xff] %v293
    %311 = vst [vmem:[%s306 + $0x20] sm:$0xff] %v294
    %312 = vst [vmem:[%s306 + $0x28] sm:$0xff] %v295
    %313 = vst [vmem:[%s306 + $0x30] sm:$0xff] %v296
    %314 = vst [vmem:[%s306 + $0x38] sm:$0xff] %v297
    %315 = vst [vmem:[%s306 + $0x40] sm:$0xff] %v298
    %316 = vst [vmem:[%s306 + $0x48] sm:$0xff] %v299
    %317 = vst [vmem:[%s306 + $0x50] sm:$0xff] %v300
    %318 = vst [vmem:[%s306 + $0x58] sm:$0xff] %v301
    %319 = vst [vmem:[%s306 + $0x60] sm:$0xff] %v302
    %320 = vst [vmem:[%s306 + $0x68] sm:$0xff] %v303
    %321 = vst [vmem:[%s306 + $0x70] sm:$0xff] %v304
    %322 = vst [vmem:[%s306 + $0x78] sm:$0xff] %v305
    %s323 = sld [smem:[#allocation10 + $0x100]]
    %v324 = vstv %s323
    %v325 = vmul.f32 %v324, %v65
    %v326 = vmul.f32 %v324, %v66
    %v327 = vmul.f32 %v324, %v67
    %v328 = vmul.f32 %v324, %v68
    %v329 = vmul.f32 %v324, %v69
    %v330 = vmul.f32 %v324, %v70
    %v331 = vmul.f32 %v324, %v71
    %v332 = vmul.f32 %v324, %v72
    %v333 = vmul.f32 %v324, %v73
    %v334 = vmul.f32 %v324, %v74
    %v335 = vmul.f32 %v324, %v75
    %v336 = vmul.f32 %v324, %v76
    %v337 = vmul.f32 %v324, %v77
    %v338 = vmul.f32 %v324, %v78
    %v339 = vmul.f32 %v324, %v79
    %v340 = vmul.f32 %v324, %v80
    %s341 = scalar_lea.vmem [#allocation3], 256
    %342 = vst [vmem:[%s341] sm:$0xff] %v325
    %343 = vst [vmem:[%s341 + $0x8] sm:$0xff] %v326
    %344 = vst [vmem:[%s341 + $0x10] sm:$0xff] %v327
    %345 = vst [vmem:[%s341 + $0x18] sm:$0xff] %v328
    %346 = vst [vmem:[%s341 + $0x20] sm:$0xff] %v329
    %347 = vst [vmem:[%s341 + $0x28] sm:$0xff] %v330
    %348 = vst [vmem:[%s341 + $0x30] sm:$0xff] %v331
    %349 = vst [vmem:[%s341 + $0x38] sm:$0xff] %v332
    %350 = vst [vmem:[%s341 + $0x40] sm:$0xff] %v333
    %351 = vst [vmem:[%s341 + $0x48] sm:$0xff] %v334
    %352 = vst [vmem:[%s341 + $0x50] sm:$0xff] %v335
    %353 = vst [vmem:[%s341 + $0x58] sm:$0xff] %v336
    %354 = vst [vmem:[%s341 + $0x60] sm:$0xff] %v337
    %355 = vst [vmem:[%s341 + $0x68] sm:$0xff] %v338
    %356 = vst [vmem:[%s341 + $0x70] sm:$0xff] %v339
    %357 = vst [vmem:[%s341 + $0x78] sm:$0xff] %v340
    %s358 = sld [smem:[#allocation12 + $0x100]]
    %v359 = vstv %s358
    %v360 = vmul.f32 %v359, %v65
    %v361 = vmul.f32 %v359, %v66
    %v362 = vmul.f32 %v359, %v67
    %v363 = vmul.f32 %v359, %v68
    %v364 = vmul.f32 %v359, %v69
    %v365 = vmul.f32 %v359, %v70
    %v366 = vmul.f32 %v359, %v71
    %v367 = vmul.f32 %v359, %v72
    %v368 = vmul.f32 %v359, %v73
    %v369 = vmul.f32 %v359, %v74
    %v370 = vmul.f32 %v359, %v75
    %v371 = vmul.f32 %v359, %v76
    %v372 = vmul.f32 %v359, %v77
    %v373 = vmul.f32 %v359, %v78
    %v374 = vmul.f32 %v359, %v79
    %v375 = vmul.f32 %v359, %v80
    %s376 = scalar_lea.vmem [#allocation4], 256
    %377 = vst [vmem:[%s376] sm:$0xff] %v360
    %378 = vst [vmem:[%s376 + $0x8] sm:$0xff] %v361
    %379 = vst [vmem:[%s376 + $0x10] sm:$0xff] %v362
    %380 = vst [vmem:[%s376 + $0x18] sm:$0xff] %v363
    %381 = vst [vmem:[%s376 + $0x20] sm:$0xff] %v364
    %382 = vst [vmem:[%s376 + $0x28] sm:$0xff] %v365
    %383 = vst [vmem:[%s376 + $0x30] sm:$0xff] %v366
    %384 = vst [vmem:[%s376 + $0x38] sm:$0xff] %v367
    %385 = vst [vmem:[%s376 + $0x40] sm:$0xff] %v368
    %386 = vst [vmem:[%s376 + $0x48] sm:$0xff] %v369
    %387 = vst [vmem:[%s376 + $0x50] sm:$0xff] %v370
    %388 = vst [vmem:[%s376 + $0x58] sm:$0xff] %v371
    %389 = vst [vmem:[%s376 + $0x60] sm:$0xff] %v372
    %390 = vst [vmem:[%s376 + $0x68] sm:$0xff] %v373
    %391 = vst [vmem:[%s376 + $0x70] sm:$0xff] %v374
    %392 = vst [vmem:[%s376 + $0x78] sm:$0xff] %v375
    %s393 = scalar_lea.vmem [#allocation13], 128
    %v394 = vld [vmem:[%s393] sm:$0xff]
    %v395 = vld [vmem:[%s393 + $0x8] sm:$0xff]
    %v396 = vld [vmem:[%s393 + $0x10] sm:$0xff]
    %v397 = vld [vmem:[%s393 + $0x18] sm:$0xff]
    %v398 = vld [vmem:[%s393 + $0x20] sm:$0xff]
    %v399 = vld [vmem:[%s393 + $0x28] sm:$0xff]
    %v400 = vld [vmem:[%s393 + $0x30] sm:$0xff]
    %v401 = vld [vmem:[%s393 + $0x38] sm:$0xff]
    %v402 = vld [vmem:[%s393 + $0x40] sm:$0xff]
    %v403 = vld [vmem:[%s393 + $0x48] sm:$0xff]
    %v404 = vld [vmem:[%s393 + $0x50] sm:$0xff]
    %v405 = vld [vmem:[%s393 + $0x58] sm:$0xff]
    %v406 = vld [vmem:[%s393 + $0x60] sm:$0xff]
    %v407 = vld [vmem:[%s393 + $0x68] sm:$0xff]
    %v408 = vld [vmem:[%s393 + $0x70] sm:$0xff]
    %v409 = vld [vmem:[%s393 + $0x78] sm:$0xff]
    %v410 = vld [vmem:[#allocation2] sm:$0xff]
    %v411 = vld [vmem:[#allocation2 + $0x8] sm:$0xff]
    %v412 = vld [vmem:[#allocation2 + $0x10] sm:$0xff]
    %v413 = vld [vmem:[#allocation2 + $0x18] sm:$0xff]
    %v414 = vld [vmem:[#allocation2 + $0x20] sm:$0xff]
    %v415 = vld [vmem:[#allocation2 + $0x28] sm:$0xff]
    %v416 = vld [vmem:[#allocation2 + $0x30] sm:$0xff]
    %v417 = vld [vmem:[#allocation2 + $0x38] sm:$0xff]
    %v418 = vld [vmem:[#allocation2 + $0x40] sm:$0xff]
    %v419 = vld [vmem:[#allocation2 + $0x48] sm:$0xff]
    %v420 = vld [vmem:[#allocation2 + $0x50] sm:$0xff]
    %v421 = vld [vmem:[#allocation2 + $0x58] sm:$0xff]
    %v422 = vld [vmem:[#allocation2 + $0x60] sm:$0xff]
    %v423 = vld [vmem:[#allocation2 + $0x68] sm:$0xff]
    %v424 = vld [vmem:[#allocation2 + $0x70] sm:$0xff]
    %v425 = vld [vmem:[#allocation2 + $0x78] sm:$0xff]
    %s426 = sld [smem:[#allocation5 + $0x1]]
    %v427 = vstv %s426
    %v428 = vmul.f32 %v427, %v394
    %v429 = vmul.f32 %v427, %v395
    %v430 = vmul.f32 %v427, %v396
    %v431 = vmul.f32 %v427, %v397
    %v432 = vmul.f32 %v427, %v398
    %v433 = vmul.f32 %v427, %v399
    %v434 = vmul.f32 %v427, %v400
    %v435 = vmul.f32 %v427, %v401
    %v436 = vmul.f32 %v427, %v402
    %v437 = vmul.f32 %v427, %v403
    %v438 = vmul.f32 %v427, %v404
    %v439 = vmul.f32 %v427, %v405
    %v440 = vmul.f32 %v427, %v406
    %v441 = vmul.f32 %v427, %v407
    %v442 = vmul.f32 %v427, %v408
    %v443 = vmul.f32 %v427, %v409
    %v444 = vadd.f32 %v410, %v428
    %v445 = vadd.f32 %v411, %v429
    %v446 = vadd.f32 %v412, %v430
    %v447 = vadd.f32 %v413, %v431
    %v448 = vadd.f32 %v414, %v432
    %v449 = vadd.f32 %v415, %v433
    %v450 = vadd.f32 %v416, %v434
    %v451 = vadd.f32 %v417, %v435
    %v452 = vadd.f32 %v418, %v436
    %v453 = vadd.f32 %v419, %v437
    %v454 = vadd.f32 %v420, %v438
    %v455 = vadd.f32 %v421, %v439
    %v456 = vadd.f32 %v422, %v440
    %v457 = vadd.f32 %v423, %v441
    %v458 = vadd.f32 %v424, %v442
    %v459 = vadd.f32 %v425, %v443
    %460 = vst [vmem:[#allocation2] sm:$0xff] %v444
    %461 = vst [vmem:[#allocation2 + $0x8] sm:$0xff] %v445
    %462 = vst [vmem:[#allocation2 + $0x10] sm:$0xff] %v446
    %463 = vst [vmem:[#allocation2 + $0x18] sm:$0xff] %v447
    %464 = vst [vmem:[#allocation2 + $0x20] sm:$0xff] %v448
    %465 = vst [vmem:[#allocation2 + $0x28] sm:$0xff] %v449
    %466 = vst [vmem:[#allocation2 + $0x30] sm:$0xff] %v450
    %467 = vst [vmem:[#allocation2 + $0x38] sm:$0xff] %v451
    %468 = vst [vmem:[#allocation2 + $0x40] sm:$0xff] %v452
    %469 = vst [vmem:[#allocation2 + $0x48] sm:$0xff] %v453
    %470 = vst [vmem:[#allocation2 + $0x50] sm:$0xff] %v454
    %471 = vst [vmem:[#allocation2 + $0x58] sm:$0xff] %v455
    %472 = vst [vmem:[#allocation2 + $0x60] sm:$0xff] %v456
    %473 = vst [vmem:[#allocation2 + $0x68] sm:$0xff] %v457
    %474 = vst [vmem:[#allocation2 + $0x70] sm:$0xff] %v458
    %475 = vst [vmem:[#allocation2 + $0x78] sm:$0xff] %v459
    %v476 = vld [vmem:[#allocation3] sm:$0xff]
    %v477 = vld [vmem:[#allocation3 + $0x8] sm:$0xff]
    %v478 = vld [vmem:[#allocation3 + $0x10] sm:$0xff]
    %v479 = vld [vmem:[#allocation3 + $0x18] sm:$0xff]
    %v480 = vld [vmem:[#allocation3 + $0x20] sm:$0xff]
    %v481 = vld [vmem:[#allocation3 + $0x28] sm:$0xff]
    %v482 = vld [vmem:[#allocation3 + $0x30] sm:$0xff]
    %v483 = vld [vmem:[#allocation3 + $0x38] sm:$0xff]
    %v484 = vld [vmem:[#allocation3 + $0x40] sm:$0xff]
    %v485 = vld [vmem:[#allocation3 + $0x48] sm:$0xff]
    %v486 = vld [vmem:[#allocation3 + $0x50] sm:$0xff]
    %v487 = vld [vmem:[#allocation3 + $0x58] sm:$0xff]
    %v488 = vld [vmem:[#allocation3 + $0x60] sm:$0xff]
    %v489 = vld [vmem:[#allocation3 + $0x68] sm:$0xff]
    %v490 = vld [vmem:[#allocation3 + $0x70] sm:$0xff]
    %v491 = vld [vmem:[#allocation3 + $0x78] sm:$0xff]
    %s492 = sld [smem:[#allocation10 + $0x1]]
    %v493 = vstv %s492
    %v494 = vmul.f32 %v493, %v394
    %v495 = vmul.f32 %v493, %v395
    %v496 = vmul.f32 %v493, %v396
    %v497 = vmul.f32 %v493, %v397
    %v498 = vmul.f32 %v493, %v398
    %v499 = vmul.f32 %v493, %v399
    %v500 = vmul.f32 %v493, %v400
    %v501 = vmul.f32 %v493, %v401
    %v502 = vmul.f32 %v493, %v402
    %v503 = vmul.f32 %v493, %v403
    %v504 = vmul.f32 %v493, %v404
    %v505 = vmul.f32 %v493, %v405
    %v506 = vmul.f32 %v493, %v406
    %v507 = vmul.f32 %v493, %v407
    %v508 = vmul.f32 %v493, %v408
    %v509 = vmul.f32 %v493, %v409
    %v510 = vadd.f32 %v476, %v494
    %v511 = vadd.f32 %v477, %v495
    %v512 = vadd.f32 %v478, %v496
    %v513 = vadd.f32 %v479, %v497
    %v514 = vadd.f32 %v480, %v498
    %v515 = vadd.f32 %v481, %v499
    %v516 = vadd.f32 %v482, %v500
    %v517 = vadd.f32 %v483, %v501
    %v518 = vadd.f32 %v484, %v502
    %v519 = vadd.f32 %v485, %v503
    %v520 = vadd.f32 %v486, %v504
    %v521 = vadd.f32 %v487, %v505
    %v522 = vadd.f32 %v488, %v506
    %v523 = vadd.f32 %v489, %v507
    %v524 = vadd.f32 %v490, %v508
    %v525 = vadd.f32 %v491, %v509
    %526 = vst [vmem:[#allocation3] sm:$0xff] %v510
    %527 = vst [vmem:[#allocation3 + $0x8] sm:$0xff] %v511
    %528 = vst [vmem:[#allocation3 + $0x10] sm:$0xff] %v512
    %529 = vst [vmem:[#allocation3 + $0x18] sm:$0xff] %v513
    %530 = vst [vmem:[#allocation3 + $0x20] sm:$0xff] %v514
    %531 = vst [vmem:[#allocation3 + $0x28] sm:$0xff] %v515
    %532 = vst [vmem:[#allocation3 + $0x30] sm:$0xff] %v516
    %533 = vst [vmem:[#allocation3 + $0x38] sm:$0xff] %v517
    %534 = vst [vmem:[#allocation3 + $0x40] sm:$0xff] %v518
    %535 = vst [vmem:[#allocation3 + $0x48] sm:$0xff] %v519
    %536 = vst [vmem:[#allocation3 + $0x50] sm:$0xff] %v520
    %537 = vst [vmem:[#allocation3 + $0x58] sm:$0xff] %v521
    %538 = vst [vmem:[#allocation3 + $0x60] sm:$0xff] %v522
    %539 = vst [vmem:[#allocation3 + $0x68] sm:$0xff] %v523
    %540 = vst [vmem:[#allocation3 + $0x70] sm:$0xff] %v524
    %541 = vst [vmem:[#allocation3 + $0x78] sm:$0xff] %v525
    %v542 = vld [vmem:[#allocation4] sm:$0xff]
    %v543 = vld [vmem:[#allocation4 + $0x8] sm:$0xff]
    %v544 = vld [vmem:[#allocation4 + $0x10] sm:$0xff]
    %v545 = vld [vmem:[#allocation4 + $0x18] sm:$0xff]
    %v546 = vld [vmem:[#allocation4 + $0x20] sm:$0xff]
    %v547 = vld [vmem:[#allocation4 + $0x28] sm:$0xff]
    %v548 = vld [vmem:[#allocation4 + $0x30] sm:$0xff]
    %v549 = vld [vmem:[#allocation4 + $0x38] sm:$0xff]
    %v550 = vld [vmem:[#allocation4 + $0x40] sm:$0xff]
    %v551 = vld [vmem:[#allocation4 + $0x48] sm:$0xff]
    %v552 = vld [vmem:[#allocation4 + $0x50] sm:$0xff]
    %v553 = vld [vmem:[#allocation4 + $0x58] sm:$0xff]
    %v554 = vld [vmem:[#allocation4 + $0x60] sm:$0xff]
    %v555 = vld [vmem:[#allocation4 + $0x68] sm:$0xff]
    %v556 = vld [vmem:[#allocation4 + $0x70] sm:$0xff]
    %v557 = vld [vmem:[#allocation4 + $0x78] sm:$0xff]
    %s558 = sld [smem:[#allocation12 + $0x1]]
    %v559 = vstv %s558
    %v560 = vmul.f32 %v559, %v394
    %v561 = vmul.f32 %v559, %v395
    %v562 = vmul.f32 %v559, %v396
    %v563 = vmul.f32 %v559, %v397
    %v564 = vmul.f32 %v559, %v398
    %v565 = vmul.f32 %v559, %v399
    %v566 = vmul.f32 %v559, %v400
    %v567 = vmul.f32 %v559, %v401
    %v568 = vmul.f32 %v559, %v402
    %v569 = vmul.f32 %v559, %v403
    %v570 = vmul.f32 %v559, %v404
    %v571 = vmul.f32 %v559, %v405
    %v572 = vmul.f32 %v559, %v406
    %v573 = vmul.f32 %v559, %v407
    %v574 = vmul.f32 %v559, %v408
    %v575 = vmul.f32 %v559, %v409
    %v576 = vadd.f32 %v542, %v560
    %v577 = vadd.f32 %v543, %v561
    %v578 = vadd.f32 %v544, %v562
    %v579 = vadd.f32 %v545, %v563
    %v580 = vadd.f32 %v546, %v564
    %v581 = vadd.f32 %v547, %v565
    %v582 = vadd.f32 %v548, %v566
    %v583 = vadd.f32 %v549, %v567
    %v584 = vadd.f32 %v550, %v568
    %v585 = vadd.f32 %v551, %v569
    %v586 = vadd.f32 %v552, %v570
    %v587 = vadd.f32 %v553, %v571
    %v588 = vadd.f32 %v554, %v572
    %v589 = vadd.f32 %v555, %v573
    %v590 = vadd.f32 %v556, %v574
    %v591 = vadd.f32 %v557, %v575
    %592 = vst [vmem:[#allocation4] sm:$0xff] %v576
    %593 = vst [vmem:[#allocation4 + $0x8] sm:$0xff] %v577
    %594 = vst [vmem:[#allocation4 + $0x10] sm:$0xff] %v578
    %595 = vst [vmem:[#allocation4 + $0x18] sm:$0xff] %v579
    %596 = vst [vmem:[#allocation4 + $0x20] sm:$0xff] %v580
    %597 = vst [vmem:[#allocation4 + $0x28] sm:$0xff] %v581
    %598 = vst [vmem:[#allocation4 + $0x30] sm:$0xff] %v582
    %599 = vst [vmem:[#allocation4 + $0x38] sm:$0xff] %v583
    %600 = vst [vmem:[#allocation4 + $0x40] sm:$0xff] %v584
    %601 = vst [vmem:[#allocation4 + $0x48] sm:$0xff] %v585
    %602 = vst [vmem:[#allocation4 + $0x50] sm:$0xff] %v586
    %603 = vst [vmem:[#allocation4 + $0x58] sm:$0xff] %v587
    %604 = vst [vmem:[#allocation4 + $0x60] sm:$0xff] %v588
    %605 = vst [vmem:[#allocation4 + $0x68] sm:$0xff] %v589
    %606 = vst [vmem:[#allocation4 + $0x70] sm:$0xff] %v590
    %607 = vst [vmem:[#allocation4 + $0x78] sm:$0xff] %v591
    %v608 = vld [vmem:[%s201] sm:$0xff]
    %v609 = vld [vmem:[%s201 + $0x8] sm:$0xff]
    %v610 = vld [vmem:[%s201 + $0x10] sm:$0xff]
    %v611 = vld [vmem:[%s201 + $0x18] sm:$0xff]
    %v612 = vld [vmem:[%s201 + $0x20] sm:$0xff]
    %v613 = vld [vmem:[%s201 + $0x28] sm:$0xff]
    %v614 = vld [vmem:[%s201 + $0x30] sm:$0xff]
    %v615 = vld [vmem:[%s201 + $0x38] sm:$0xff]
    %v616 = vld [vmem:[%s201 + $0x40] sm:$0xff]
    %v617 = vld [vmem:[%s201 + $0x48] sm:$0xff]
    %v618 = vld [vmem:[%s201 + $0x50] sm:$0xff]
    %v619 = vld [vmem:[%s201 + $0x58] sm:$0xff]
    %v620 = vld [vmem:[%s201 + $0x60] sm:$0xff]
    %v621 = vld [vmem:[%s201 + $0x68] sm:$0xff]
    %v622 = vld [vmem:[%s201 + $0x70] sm:$0xff]
    %v623 = vld [vmem:[%s201 + $0x78] sm:$0xff]
    %s624 = sld [smem:[#allocation5 + $0x81]]
    %v625 = vstv %s624
    %v626 = vmul.f32 %v625, %v394
    %v627 = vmul.f32 %v625, %v395
    %v628 = vmul.f32 %v625, %v396
    %v629 = vmul.f32 %v625, %v397
    %v630 = vmul.f32 %v625, %v398
    %v631 = vmul.f32 %v625, %v399
    %v632 = vmul.f32 %v625, %v400
    %v633 = vmul.f32 %v625, %v401
    %v634 = vmul.f32 %v625, %v402
    %v635 = vmul.f32 %v625, %v403
    %v636 = vmul.f32 %v625, %v404
    %v637 = vmul.f32 %v625, %v405
    %v638 = vmul.f32 %v625, %v406
    %v639 = vmul.f32 %v625, %v407
    %v640 = vmul.f32 %v625, %v408
    %v641 = vmul.f32 %v625, %v409
    %v642 = vadd.f32 %v608, %v626
    %v643 = vadd.f32 %v609, %v627
    %v644 = vadd.f32 %v610, %v628
    %v645 = vadd.f32 %v611, %v629
    %v646 = vadd.f32 %v612, %v630
    %v647 = vadd.f32 %v613, %v631
    %v648 = vadd.f32 %v614, %v632
    %v649 = vadd.f32 %v615, %v633
    %v650 = vadd.f32 %v616, %v634
    %v651 = vadd.f32 %v617, %v635
    %v652 = vadd.f32 %v618, %v636
    %v653 = vadd.f32 %v619, %v637
    %v654 = vadd.f32 %v620, %v638
    %v655 = vadd.f32 %v621, %v639
    %v656 = vadd.f32 %v622, %v640
    %v657 = vadd.f32 %v623, %v641
    %658 = vst [vmem:[%s201] sm:$0xff] %v642
    %659 = vst [vmem:[%s201 + $0x8] sm:$0xff] %v643
    %660 = vst [vmem:[%s201 + $0x10] sm:$0xff] %v644
    %661 = vst [vmem:[%s201 + $0x18] sm:$0xff] %v645
    %662 = vst [vmem:[%s201 + $0x20] sm:$0xff] %v646
    %663 = vst [vmem:[%s201 + $0x28] sm:$0xff] %v647
    %664 = vst [vmem:[%s201 + $0x30] sm:$0xff] %v648
    %665 = vst [vmem:[%s201 + $0x38] sm:$0xff] %v649
    %666 = vst [vmem:[%s201 + $0x40] sm:$0xff] %v650
    %667 = vst [vmem:[%s201 + $0x48] sm:$0xff] %v651
    %668 = vst [vmem:[%s201 + $0x50] sm:$0xff] %v652
    %669 = vst [vmem:[%s201 + $0x58] sm:$0xff] %v653
    %670 = vst [vmem:[%s201 + $0x60] sm:$0xff] %v654
    %671 = vst [vmem:[%s201 + $0x68] sm:$0xff] %v655
    %672 = vst [vmem:[%s201 + $0x70] sm:$0xff] %v656
    %673 = vst [vmem:[%s201 + $0x78] sm:$0xff] %v657
    %v674 = vld [vmem:[%s236] sm:$0xff]
    %v675 = vld [vmem:[%s236 + $0x8] sm:$0xff]
    %v676 = vld [vmem:[%s236 + $0x10] sm:$0xff]
    %v677 = vld [vmem:[%s236 + $0x18] sm:$0xff]
    %v678 = vld [vmem:[%s236 + $0x20] sm:$0xff]
    %v679 = vld [vmem:[%s236 + $0x28] sm:$0xff]
    %v680 = vld [vmem:[%s236 + $0x30] sm:$0xff]
    %v681 = vld [vmem:[%s236 + $0x38] sm:$0xff]
    %v682 = vld [vmem:[%s236 + $0x40] sm:$0xff]
    %v683 = vld [vmem:[%s236 + $0x48] sm:$0xff]
    %v684 = vld [vmem:[%s236 + $0x50] sm:$0xff]
    %v685 = vld [vmem:[%s236 + $0x58] sm:$0xff]
    %v686 = vld [vmem:[%s236 + $0x60] sm:$0xff]
    %v687 = vld [vmem:[%s236 + $0x68] sm:$0xff]
    %v688 = vld [vmem:[%s236 + $0x70] sm:$0xff]
    %v689 = vld [vmem:[%s236 + $0x78] sm:$0xff]
    %s690 = sld [smem:[#allocation10 + $0x81]]
    %v691 = vstv %s690
    %v692 = vmul.f32 %v691, %v394
    %v693 = vmul.f32 %v691, %v395
    %v694 = vmul.f32 %v691, %v396
    %v695 = vmul.f32 %v691, %v397
    %v696 = vmul.f32 %v691, %v398
    %v697 = vmul.f32 %v691, %v399
    %v698 = vmul.f32 %v691, %v400
    %v699 = vmul.f32 %v691, %v401
    %v700 = vmul.f32 %v691, %v402
    %v701 = vmul.f32 %v691, %v403
    %v702 = vmul.f32 %v691, %v404
    %v703 = vmul.f32 %v691, %v405
    %v704 = vmul.f32 %v691, %v406
    %v705 = vmul.f32 %v691, %v407
    %v706 = vmul.f32 %v691, %v408
    %v707 = vmul.f32 %v691, %v409
    %v708 = vadd.f32 %v674, %v692
    %v709 = vadd.f32 %v675, %v693
    %v710 = vadd.f32 %v676, %v694
    %v711 = vadd.f32 %v677, %v695
    %v712 = vadd.f32 %v678, %v696
    %v713 = vadd.f32 %v679, %v697
    %v714 = vadd.f32 %v680, %v698
    %v715 = vadd.f32 %v681, %v699
    %v716 = vadd.f32 %v682, %v700
    %v717 = vadd.f32 %v683, %v701
    %v718 = vadd.f32 %v684, %v702
    %v719 = vadd.f32 %v685, %v703
    %v720 = vadd.f32 %v686, %v704
    %v721 = vadd.f32 %v687, %v705
    %v722 = vadd.f32 %v688, %v706
    %v723 = vadd.f32 %v689, %v707
    %724 = vst [vmem:[%s236] sm:$0xff] %v708
    %725 = vst [vmem:[%s236 + $0x8] sm:$0xff] %v709
    %726 = vst [vmem:[%s236 + $0x10] sm:$0xff] %v710
    %727 = vst [vmem:[%s236 + $0x18] sm:$0xff] %v711
    %728 = vst [vmem:[%s236 + $0x20] sm:$0xff] %v712
    %729 = vst [vmem:[%s236 + $0x28] sm:$0xff] %v713
    %730 = vst [vmem:[%s236 + $0x30] sm:$0xff] %v714
    %731 = vst [vmem:[%s236 + $0x38] sm:$0xff] %v715
    %732 = vst [vmem:[%s236 + $0x40] sm:$0xff] %v716
    %733 = vst [vmem:[%s236 + $0x48] sm:$0xff] %v717
    %734 = vst [vmem:[%s236 + $0x50] sm:$0xff] %v718
    %735 = vst [vmem:[%s236 + $0x58] sm:$0xff] %v719
    %736 = vst [vmem:[%s236 + $0x60] sm:$0xff] %v720
    %737 = vst [vmem:[%s236 + $0x68] sm:$0xff] %v721
    %738 = vst [vmem:[%s236 + $0x70] sm:$0xff] %v722
    %739 = vst [vmem:[%s236 + $0x78] sm:$0xff] %v723
    %v740 = vld [vmem:[%s271] sm:$0xff]
    %v741 = vld [vmem:[%s271 + $0x8] sm:$0xff]
    %v742 = vld [vmem:[%s271 + $0x10] sm:$0xff]
    %v743 = vld [vmem:[%s271 + $0x18] sm:$0xff]
    %v744 = vld [vmem:[%s271 + $0x20] sm:$0xff]
    %v745 = vld [vmem:[%s271 + $0x28] sm:$0xff]
    %v746 = vld [vmem:[%s271 + $0x30] sm:$0xff]
    %v747 = vld [vmem:[%s271 + $0x38] sm:$0xff]
    %v748 = vld [vmem:[%s271 + $0x40] sm:$0xff]
    %v749 = vld [vmem:[%s271 + $0x48] sm:$0xff]
    %v750 = vld [vmem:[%s271 + $0x50] sm:$0xff]
    %v751 = vld [vmem:[%s271 + $0x58] sm:$0xff]
    %v752 = vld [vmem:[%s271 + $0x60] sm:$0xff]
    %v753 = vld [vmem:[%s271 + $0x68] sm:$0xff]
    %v754 = vld [vmem:[%s271 + $0x70] sm:$0xff]
    %v755 = vld [vmem:[%s271 + $0x78] sm:$0xff]
    %s756 = sld [smem:[#allocation12 + $0x81]]
    %v757 = vstv %s756
    %v758 = vmul.f32 %v757, %v394
    %v759 = vmul.f32 %v757, %v395
    %v760 = vmul.f32 %v757, %v396
    %v761 = vmul.f32 %v757, %v397
    %v762 = vmul.f32 %v757, %v398
    %v763 = vmul.f32 %v757, %v399
    %v764 = vmul.f32 %v757, %v400
    %v765 = vmul.f32 %v757, %v401
    %v766 = vmul.f32 %v757, %v402
    %v767 = vmul.f32 %v757, %v403
    %v768 = vmul.f32 %v757, %v404
    %v769 = vmul.f32 %v757, %v405
    %v770 = vmul.f32 %v757, %v406
    %v771 = vmul.f32 %v757, %v407
    %v772 = vmul.f32 %v757, %v408
    %v773 = vmul.f32 %v757, %v409
    %v774 = vadd.f32 %v740, %v758
    %v775 = vadd.f32 %v741, %v759
    %v776 = vadd.f32 %v742, %v760
    %v777 = vadd.f32 %v743, %v761
    %v778 = vadd.f32 %v744, %v762
    %v779 = vadd.f32 %v745, %v763
    %v780 = vadd.f32 %v746, %v764
    %v781 = vadd.f32 %v747, %v765
    %v782 = vadd.f32 %v748, %v766
    %v783 = vadd.f32 %v749, %v767
    %v784 = vadd.f32 %v750, %v768
    %v785 = vadd.f32 %v751, %v769
    %v786 = vadd.f32 %v752, %v770
    %v787 = vadd.f32 %v753, %v771
    %v788 = vadd.f32 %v754, %v772
    %v789 = vadd.f32 %v755, %v773
    %790 = vst [vmem:[%s271] sm:$0xff] %v774
    %791 = vst [vmem:[%s271 + $0x8] sm:$0xff] %v775
    %792 = vst [vmem:[%s271 + $0x10] sm:$0xff] %v776
    %793 = vst [vmem:[%s271 + $0x18] sm:$0xff] %v777
    %794 = vst [vmem:[%s271 + $0x20] sm:$0xff] %v778
    %795 = vst [vmem:[%s271 + $0x28] sm:$0xff] %v779
    %796 = vst [vmem:[%s271 + $0x30] sm:$0xff] %v780
    %797 = vst [vmem:[%s271 + $0x38] sm:$0xff] %v781
    %798 = vst [vmem:[%s271 + $0x40] sm:$0xff] %v782
    %799 = vst [vmem:[%s271 + $0x48] sm:$0xff] %v783
    %800 = vst [vmem:[%s271 + $0x50] sm:$0xff] %v784
    %801 = vst [vmem:[%s271 + $0x58] sm:$0xff] %v785
    %802 = vst [vmem:[%s271 + $0x60] sm:$0xff] %v786
    %803 = vst [vmem:[%s271 + $0x68] sm:$0xff] %v787
    %804 = vst [vmem:[%s271 + $0x70] sm:$0xff] %v788
    %805 = vst [vmem:[%s271 + $0x78] sm:$0xff] %v789
    %v806 = vld [vmem:[%s306] sm:$0xff]
    %v807 = vld [vmem:[%s306 + $0x8] sm:$0xff]
    %v808 = vld [vmem:[%s306 + $0x10] sm:$0xff]
    %v809 = vld [vmem:[%s306 + $0x18] sm:$0xff]
    %v810 = vld [vmem:[%s306 + $0x20] sm:$0xff]
    %v811 = vld [vmem:[%s306 + $0x28] sm:$0xff]
    %v812 = vld [vmem:[%s306 + $0x30] sm:$0xff]
    %v813 = vld [vmem:[%s306 + $0x38] sm:$0xff]
    %v814 = vld [vmem:[%s306 + $0x40] sm:$0xff]
    %v815 = vld [vmem:[%s306 + $0x48] sm:$0xff]
    %v816 = vld [vmem:[%s306 + $0x50] sm:$0xff]
    %v817 = vld [vmem:[%s306 + $0x58] sm:$0xff]
    %v818 = vld [vmem:[%s306 + $0x60] sm:$0xff]
    %v819 = vld [vmem:[%s306 + $0x68] sm:$0xff]
    %v820 = vld [vmem:[%s306 + $0x70] sm:$0xff]
    %v821 = vld [vmem:[%s306 + $0x78] sm:$0xff]
    %s822 = sld [smem:[#allocation5 + $0x101]]
    %v823 = vstv %s822
    %v824 = vmul.f32 %v823, %v394
    %v825 = vmul.f32 %v823, %v395
    %v826 = vmul.f32 %v823, %v396
    %v827 = vmul.f32 %v823, %v397
    %v828 = vmul.f32 %v823, %v398
    %v829 = vmul.f32 %v823, %v399
    %v830 = vmul.f32 %v823, %v400
    %v831 = vmul.f32 %v823, %v401
    %v832 = vmul.f32 %v823, %v402
    %v833 = vmul.f32 %v823, %v403
    %v834 = vmul.f32 %v823, %v404
    %v835 = vmul.f32 %v823, %v405
    %v836 = vmul.f32 %v823, %v406
    %v837 = vmul.f32 %v823, %v407
    %v838 = vmul.f32 %v823, %v408
    %v839 = vmul.f32 %v823, %v409
    %v840 = vadd.f32 %v806, %v824
    %v841 = vadd.f32 %v807, %v825
    %v842 = vadd.f32 %v808, %v826
    %v843 = vadd.f32 %v809, %v827
    %v844 = vadd.f32 %v810, %v828
    %v845 = vadd.f32 %v811, %v829
    %v846 = vadd.f32 %v812, %v830
    %v847 = vadd.f32 %v813, %v831
    %v848 = vadd.f32 %v814, %v832
    %v849 = vadd.f32 %v815, %v833
    %v850 = vadd.f32 %v816, %v834
    %v851 = vadd.f32 %v817, %v835
    %v852 = vadd.f32 %v818, %v836
    %v853 = vadd.f32 %v819, %v837
    %v854 = vadd.f32 %v820, %v838
    %v855 = vadd.f32 %v821, %v839
    %856 = vst [vmem:[%s306] sm:$0xff] %v840
    %857 = vst [vmem:[%s306 + $0x8] sm:$0xff] %v841
    %858 = vst [vmem:[%s306 + $0x10] sm:$0xff] %v842
    %859 = vst [vmem:[%s306 + $0x18] sm:$0xff] %v843
    %860 = vst [vmem:[%s306 + $0x20] sm:$0xff] %v844
    %861 = vst [vmem:[%s306 + $0x28] sm:$0xff] %v845
    %862 = vst [vmem:[%s306 + $0x30] sm:$0xff] %v846
    %863 = vst [vmem:[%s306 + $0x38] sm:$0xff] %v847
    %864 = vst [vmem:[%s306 + $0x40] sm:$0xff] %v848
    %865 = vst [vmem:[%s306 + $0x48] sm:$0xff] %v849
    %866 = vst [vmem:[%s306 + $0x50] sm:$0xff] %v850
    %867 = vst [vmem:[%s306 + $0x58] sm:$0xff] %v851
    %868 = vst [vmem:[%s306 + $0x60] sm:$0xff] %v852
    %869 = vst [vmem:[%s306 + $0x68] sm:$0xff] %v853
    %870 = vst [vmem:[%s306 + $0x70] sm:$0xff] %v854
    %871 = vst [vmem:[%s306 + $0x78] sm:$0xff] %v855
    %v872 = vld [vmem:[%s341] sm:$0xff]
    %v873 = vld [vmem:[%s341 + $0x8] sm:$0xff]
    %v874 = vld [vmem:[%s341 + $0x10] sm:$0xff]
    %v875 = vld [vmem:[%s341 + $0x18] sm:$0xff]
    %v876 = vld [vmem:[%s341 + $0x20] sm:$0xff]
    %v877 = vld [vmem:[%s341 + $0x28] sm:$0xff]
    %v878 = vld [vmem:[%s341 + $0x30] sm:$0xff]
    %v879 = vld [vmem:[%s341 + $0x38] sm:$0xff]
    %v880 = vld [vmem:[%s341 + $0x40] sm:$0xff]
    %v881 = vld [vmem:[%s341 + $0x48] sm:$0xff]
    %v882 = vld [vmem:[%s341 + $0x50] sm:$0xff]
    %v883 = vld [vmem:[%s341 + $0x58] sm:$0xff]
    %v884 = vld [vmem:[%s341 + $0x60] sm:$0xff]
    %v885 = vld [vmem:[%s341 + $0x68] sm:$0xff]
    %v886 = vld [vmem:[%s341 + $0x70] sm:$0xff]
    %v887 = vld [vmem:[%s341 + $0x78] sm:$0xff]
    %s888 = sld [smem:[#allocation10 + $0x101]]
    %v889 = vstv %s888
    %v890 = vmul.f32 %v889, %v394
    %v891 = vmul.f32 %v889, %v395
    %v892 = vmul.f32 %v889, %v396
    %v893 = vmul.f32 %v889, %v397
    %v894 = vmul.f32 %v889, %v398
    %v895 = vmul.f32 %v889, %v399
    %v896 = vmul.f32 %v889, %v400
    %v897 = vmul.f32 %v889, %v401
    %v898 = vmul.f32 %v889, %v402
    %v899 = vmul.f32 %v889, %v403
    %v900 = vmul.f32 %v889, %v404
    %v901 = vmul.f32 %v889, %v405
    %v902 = vmul.f32 %v889, %v406
    %v903 = vmul.f32 %v889, %v407
    %v904 = vmul.f32 %v889, %v408
    %v905 = vmul.f32 %v889, %v409
    %v906 = vadd.f32 %v872, %v890
    %v907 = vadd.f32 %v873, %v891
    %v908 = vadd.f32 %v874, %v892
    %v909 = vadd.f32 %v875, %v893
    %v910 = vadd.f32 %v876, %v894
    %v911 = vadd.f32 %v877, %v895
    %v912 = vadd.f32 %v878, %v896
    %v913 = vadd.f32 %v879, %v897
    %v914 = vadd.f32 %v880, %v898
    %v915 = vadd.f32 %v881, %v899
    %v916 = vadd.f32 %v882, %v900
    %v917 = vadd.f32 %v883, %v901
    %v918 = vadd.f32 %v884, %v902
    %v919 = vadd.f32 %v885, %v903
    %v920 = vadd.f32 %v886, %v904
    %v921 = vadd.f32 %v887, %v905
    %922 = vst [vmem:[%s341] sm:$0xff] %v906
    %923 = vst [vmem:[%s341 + $0x8] sm:$0xff] %v907
    %924 = vst [vmem:[%s341 + $0x10] sm:$0xff] %v908
    %925 = vst [vmem:[%s341 + $0x18] sm:$0xff] %v909
    %926 = vst [vmem:[%s341 + $0x20] sm:$0xff] %v910
    %927 = vst [vmem:[%s341 + $0x28] sm:$0xff] %v911
    %928 = vst [vmem:[%s341 + $0x30] sm:$0xff] %v912
    %929 = vst [vmem:[%s341 + $0x38] sm:$0xff] %v913
    %930 = vst [vmem:[%s341 + $0x40] sm:$0xff] %v914
    %931 = vst [vmem:[%s341 + $0x48] sm:$0xff] %v915
    %932 = vst [vmem:[%s341 + $0x50] sm:$0xff] %v916
    %933 = vst [vmem:[%s341 + $0x58] sm:$0xff] %v917
    %934 = vst [vmem:[%s341 + $0x60] sm:$0xff] %v918
    %935 = vst [vmem:[%s341 + $0x68] sm:$0xff] %v919
    %936 = vst [vmem:[%s341 + $0x70] sm:$0xff] %v920
    %937 = vst [vmem:[%s341 + $0x78] sm:$0xff] %v921
    %v938 = vld [vmem:[%s376] sm:$0xff]
    %v939 = vld [vmem:[%s376 + $0x8] sm:$0xff]
    %v940 = vld [vmem:[%s376 + $0x10] sm:$0xff]
    %v941 = vld [vmem:[%s376 + $0x18] sm:$0xff]
    %v942 = vld [vmem:[%s376 + $0x20] sm:$0xff]
    %v943 = vld [vmem:[%s376 + $0x28] sm:$0xff]
    %v944 = vld [vmem:[%s376 + $0x30] sm:$0xff]
    %v945 = vld [vmem:[%s376 + $0x38] sm:$0xff]
    %v946 = vld [vmem:[%s376 + $0x40] sm:$0xff]
    %v947 = vld [vmem:[%s376 + $0x48] sm:$0xff]
    %v948 = vld [vmem:[%s376 + $0x50] sm:$0xff]
    %v949 = vld [vmem:[%s376 + $0x58] sm:$0xff]
    %v950 = vld [vmem:[%s376 + $0x60] sm:$0xff]
    %v951 = vld [vmem:[%s376 + $0x68] sm:$0xff]
    %v952 = vld [vmem:[%s376 + $0x70] sm:$0xff]
    %v953 = vld [vmem:[%s376 + $0x78] sm:$0xff]
    %s954 = sld [smem:[#allocation12 + $0x101]]
    %v955 = vstv %s954
    %v956 = vmul.f32 %v955, %v394
    %v957 = vmul.f32 %v955, %v395
    %v958 = vmul.f32 %v955, %v396
    %v959 = vmul.f32 %v955, %v397
    %v960 = vmul.f32 %v955, %v398
    %v961 = vmul.f32 %v955, %v399
    %v962 = vmul.f32 %v955, %v400
    %v963 = vmul.f32 %v955, %v401
    %v964 = vmul.f32 %v955, %v402
    %v965 = vmul.f32 %v955, %v403
    %v966 = vmul.f32 %v955, %v404
    %v967 = vmul.f32 %v955, %v405
    %v968 = vmul.f32 %v955, %v406
    %v969 = vmul.f32 %v955, %v407
    %v970 = vmul.f32 %v955, %v408
    %v971 = vmul.f32 %v955, %v409
    %v972 = vadd.f32 %v938, %v956
    %v973 = vadd.f32 %v939, %v957
    %v974 = vadd.f32 %v940, %v958
    %v975 = vadd.f32 %v941, %v959
    %v976 = vadd.f32 %v942, %v960
    %v977 = vadd.f32 %v943, %v961
    %v978 = vadd.f32 %v944, %v962
    %v979 = vadd.f32 %v945, %v963
    %v980 = vadd.f32 %v946, %v964
    %v981 = vadd.f32 %v947, %v965
    %v982 = vadd.f32 %v948, %v966
    %v983 = vadd.f32 %v949, %v967
    %v984 = vadd.f32 %v950, %v968
    %v985 = vadd.f32 %v951, %v969
    %v986 = vadd.f32 %v952, %v970
    %v987 = vadd.f32 %v953, %v971
    %988 = vst [vmem:[%s376] sm:$0xff] %v972
    %989 = vst [vmem:[%s376 + $0x8] sm:$0xff] %v973
    %990 = vst [vmem:[%s376 + $0x10] sm:$0xff] %v974
    %991 = vst [vmem:[%s376 + $0x18] sm:$0xff] %v975
    %992 = vst [vmem:[%s376 + $0x20] sm:$0xff] %v976
    %993 = vst [vmem:[%s376 + $0x28] sm:$0xff] %v977
    %994 = vst [vmem:[%s376 + $0x30] sm:$0xff] %v978
    %995 = vst [vmem:[%s376 + $0x38] sm:$0xff] %v979
    %996 = vst [vmem:[%s376 + $0x40] sm:$0xff] %v980
    %997 = vst [vmem:[%s376 + $0x48] sm:$0xff] %v981
    %998 = vst [vmem:[%s376 + $0x50] sm:$0xff] %v982
    %999 = vst [vmem:[%s376 + $0x58] sm:$0xff] %v983
    %1000 = vst [vmem:[%s376 + $0x60] sm:$0xff] %v984
    %1001 = vst [vmem:[%s376 + $0x68] sm:$0xff] %v985
    %1002 = vst [vmem:[%s376 + $0x70] sm:$0xff] %v986
    %1003 = vst [vmem:[%s376 + $0x78] sm:$0xff] %v987
    %s1004 = scalar_lea.vmem [#allocation13], 256
    %v1005 = vld [vmem:[%s1004] sm:$0xff]
    %v1006 = vld [vmem:[%s1004 + $0x8] sm:$0xff]
    %v1007 = vld [vmem:[%s1004 + $0x10] sm:$0xff]
    %v1008 = vld [vmem:[%s1004 + $0x18] sm:$0xff]
    %v1009 = vld [vmem:[%s1004 + $0x20] sm:$0xff]
    %v1010 = vld [vmem:[%s1004 + $0x28] sm:$0xff]
    %v1011 = vld [vmem:[%s1004 + $0x30] sm:$0xff]
    %v1012 = vld [vmem:[%s1004 + $0x38] sm:$0xff]
    %v1013 = vld [vmem:[%s1004 + $0x40] sm:$0xff]
    %v1014 = vld [vmem:[%s1004 + $0x48] sm:$0xff]
    %v1015 = vld [vmem:[%s1004 + $0x50] sm:$0xff]
    %v1016 = vld [vmem:[%s1004 + $0x58] sm:$0xff]
    %v1017 = vld [vmem:[%s1004 + $0x60] sm:$0xff]
    %v1018 = vld [vmem:[%s1004 + $0x68] sm:$0xff]
    %v1019 = vld [vmem:[%s1004 + $0x70] sm:$0xff]
    %v1020 = vld [vmem:[%s1004 + $0x78] sm:$0xff]
    %v1021 = vld [vmem:[#allocation2] sm:$0xff]
    %v1022 = vld [vmem:[#allocation2 + $0x8] sm:$0xff]
    %v1023 = vld [vmem:[#allocation2 + $0x10] sm:$0xff]
    %v1024 = vld [vmem:[#allocation2 + $0x18] sm:$0xff]
    %v1025 = vld [vmem:[#allocation2 + $0x20] sm:$0xff]
    %v1026 = vld [vmem:[#allocation2 + $0x28] sm:$0xff]
    %v1027 = vld [vmem:[#allocation2 + $0x30] sm:$0xff]
    %v1028 = vld [vmem:[#allocation2 + $0x38] sm:$0xff]
    %v1029 = vld [vmem:[#allocation2 + $0x40] sm:$0xff]
    %v1030 = vld [vmem:[#allocation2 + $0x48] sm:$0xff]
    %v1031 = vld [vmem:[#allocation2 + $0x50] sm:$0xff]
    %v1032 = vld [vmem:[#allocation2 + $0x58] sm:$0xff]
    %v1033 = vld [vmem:[#allocation2 + $0x60] sm:$0xff]
    %v1034 = vld [vmem:[#allocation2 + $0x68] sm:$0xff]
    %v1035 = vld [vmem:[#allocation2 + $0x70] sm:$0xff]
    %v1036 = vld [vmem:[#allocation2 + $0x78] sm:$0xff]
    %s1037 = sld [smem:[#allocation5 + $0x2]]
    %v1038 = vstv %s1037
    %v1039 = vmul.f32 %v1038, %v1005
    %v1040 = vmul.f32 %v1038, %v1006
    %v1041 = vmul.f32 %v1038, %v1007
    %v1042 = vmul.f32 %v1038, %v1008
    %v1043 = vmul.f32 %v1038, %v1009
    %v1044 = vmul.f32 %v1038, %v1010
    %v1045 = vmul.f32 %v1038, %v1011
    %v1046 = vmul.f32 %v1038, %v1012
    %v1047 = vmul.f32 %v1038, %v1013
    %v1048 = vmul.f32 %v1038, %v1014
    %v1049 = vmul.f32 %v1038, %v1015
    %v1050 = vmul.f32 %v1038, %v1016
    %v1051 = vmul.f32 %v1038, %v1017
    %v1052 = vmul.f32 %v1038, %v1018
    %v1053 = vmul.f32 %v1038, %v1019
    %v1054 = vmul.f32 %v1038, %v1020
    %v1055 = vadd.f32 %v1021, %v1039
    %v1056 = vadd.f32 %v1022, %v1040
    %v1057 = vadd.f32 %v1023, %v1041
    %v1058 = vadd.f32 %v1024, %v1042
    %v1059 = vadd.f32 %v1025, %v1043
    %v1060 = vadd.f32 %v1026, %v1044
    %v1061 = vadd.f32 %v1027, %v1045
    %v1062 = vadd.f32 %v1028, %v1046
    %v1063 = vadd.f32 %v1029, %v1047
    %v1064 = vadd.f32 %v1030, %v1048
    %v1065 = vadd.f32 %v1031, %v1049
    %v1066 = vadd.f32 %v1032, %v1050
    %v1067 = vadd.f32 %v1033, %v1051
    %v1068 = vadd.f32 %v1034, %v1052
    %v1069 = vadd.f32 %v1035, %v1053
    %v1070 = vadd.f32 %v1036, %v1054
    %1071 = vst [vmem:[#allocation2] sm:$0xff] %v1055
    %1072 = vst [vmem:[#allocation2 + $0x8] sm:$0xff] %v1056
    %1073 = vst [vmem:[#allocation2 + $0x10] sm:$0xff] %v1057
    %1074 = vst [vmem:[#allocation2 + $0x18] sm:$0xff] %v1058
    %1075 = vst [vmem:[#allocation2 + $0x20] sm:$0xff] %v1059
    %1076 = vst [vmem:[#allocation2 + $0x28] sm:$0xff] %v1060
    %1077 = vst [vmem:[#allocation2 + $0x30] sm:$0xff] %v1061
    %1078 = vst [vmem:[#allocation2 + $0x38] sm:$0xff] %v1062
    %1079 = vst [vmem:[#allocation2 + $0x40] sm:$0xff] %v1063
    %1080 = vst [vmem:[#allocation2 + $0x48] sm:$0xff] %v1064
    %1081 = vst [vmem:[#allocation2 + $0x50] sm:$0xff] %v1065
    %1082 = vst [vmem:[#allocation2 + $0x58] sm:$0xff] %v1066
    %1083 = vst [vmem:[#allocation2 + $0x60] sm:$0xff] %v1067
    %1084 = vst [vmem:[#allocation2 + $0x68] sm:$0xff] %v1068
    %1085 = vst [vmem:[#allocation2 + $0x70] sm:$0xff] %v1069
    %1086 = vst [vmem:[#allocation2 + $0x78] sm:$0xff] %v1070
    %v1087 = vld [vmem:[#allocation3] sm:$0xff]
    %v1088 = vld [vmem:[#allocation3 + $0x8] sm:$0xff]
    %v1089 = vld [vmem:[#allocation3 + $0x10] sm:$0xff]
    %v1090 = vld [vmem:[#allocation3 + $0x18] sm:$0xff]
    %v1091 = vld [vmem:[#allocation3 + $0x20] sm:$0xff]
    %v1092 = vld [vmem:[#allocation3 + $0x28] sm:$0xff]
    %v1093 = vld [vmem:[#allocation3 + $0x30] sm:$0xff]
    %v1094 = vld [vmem:[#allocation3 + $0x38] sm:$0xff]
    %v1095 = vld [vmem:[#allocation3 + $0x40] sm:$0xff]
    %v1096 = vld [vmem:[#allocation3 + $0x48] sm:$0xff]
    %v1097 = vld [vmem:[#allocation3 + $0x50] sm:$0xff]
    %v1098 = vld [vmem:[#allocation3 + $0x58] sm:$0xff]
    %v1099 = vld [vmem:[#allocation3 + $0x60] sm:$0xff]
    %v1100 = vld [vmem:[#allocation3 + $0x68] sm:$0xff]
    %v1101 = vld [vmem:[#allocation3 + $0x70] sm:$0xff]
    %v1102 = vld [vmem:[#allocation3 + $0x78] sm:$0xff]
    %s1103 = sld [smem:[#allocation10 + $0x2]]
    %v1104 = vstv %s1103
    %v1105 = vmul.f32 %v1104, %v1005
    %v1106 = vmul.f32 %v1104, %v1006
    %v1107 = vmul.f32 %v1104, %v1007
    %v1108 = vmul.f32 %v1104, %v1008
    %v1109 = vmul.f32 %v1104, %v1009
    %v1110 = vmul.f32 %v1104, %v1010
    %v1111 = vmul.f32 %v1104, %v1011
    %v1112 = vmul.f32 %v1104, %v1012
    %v1113 = vmul.f32 %v1104, %v1013
    %v1114 = vmul.f32 %v1104, %v1014
    %v1115 = vmul.f32 %v1104, %v1015
    %v1116 = vmul.f32 %v1104, %v1016
    %v1117 = vmul.f32 %v1104, %v1017
    %v1118 = vmul.f32 %v1104, %v1018
    %v1119 = vmul.f32 %v1104, %v1019
    %v1120 = vmul.f32 %v1104, %v1020
    %v1121 = vadd.f32 %v1087, %v1105
    %v1122 = vadd.f32 %v1088, %v1106
    %v1123 = vadd.f32 %v1089, %v1107
    %v1124 = vadd.f32 %v1090, %v1108
    %v1125 = vadd.f32 %v1091, %v1109
    %v1126 = vadd.f32 %v1092, %v1110
    %v1127 = vadd.f32 %v1093, %v1111
    %v1128 = vadd.f32 %v1094, %v1112
    %v1129 = vadd.f32 %v1095, %v1113
    %v1130 = vadd.f32 %v1096, %v1114
    %v1131 = vadd.f32 %v1097, %v1115
    %v1132 = vadd.f32 %v1098, %v1116
    %v1133 = vadd.f32 %v1099, %v1117
    %v1134 = vadd.f32 %v1100, %v1118
    %v1135 = vadd.f32 %v1101, %v1119
    %v1136 = vadd.f32 %v1102, %v1120
    %1137 = vst [vmem:[#allocation3] sm:$0xff] %v1121
    %1138 = vst [vmem:[#allocation3 + $0x8] sm:$0xff] %v1122
    %1139 = vst [vmem:[#allocation3 + $0x10] sm:$0xff] %v1123
    %1140 = vst [vmem:[#allocation3 + $0x18] sm:$0xff] %v1124
    %1141 = vst [vmem:[#allocation3 + $0x20] sm:$0xff] %v1125
    %1142 = vst [vmem:[#allocation3 + $0x28] sm:$0xff] %v1126
    %1143 = vst [vmem:[#allocation3 + $0x30] sm:$0xff] %v1127
    %1144 = vst [vmem:[#allocation3 + $0x38] sm:$0xff] %v1128
    %1145 = vst [vmem:[#allocation3 + $0x40] sm:$0xff] %v1129
    %1146 = vst [vmem:[#allocation3 + $0x48] sm:$0xff] %v1130
    %1147 = vst [vmem:[#allocation3 + $0x50] sm:$0xff] %v1131
    %1148 = vst [vmem:[#allocation3 + $0x58] sm:$0xff] %v1132
    %1149 = vst [vmem:[#allocation3 + $0x60] sm:$0xff] %v1133
    %1150 = vst [vmem:[#allocation3 + $0x68] sm:$0xff] %v1134
    %1151 = vst [vmem:[#allocation3 + $0x70] sm:$0xff] %v1135
    %1152 = vst [vmem:[#allocation3 + $0x78] sm:$0xff] %v1136
    %v1153 = vld [vmem:[#allocation4] sm:$0xff]
    %v1154 = vld [vmem:[#allocation4 + $0x8] sm:$0xff]
    %v1155 = vld [vmem:[#allocation4 + $0x10] sm:$0xff]
    %v1156 = vld [vmem:[#allocation4 + $0x18] sm:$0xff]
    %v1157 = vld [vmem:[#allocation4 + $0x20] sm:$0xff]
    %v1158 = vld [vmem:[#allocation4 + $0x28] sm:$0xff]
    %v1159 = vld [vmem:[#allocation4 + $0x30] sm:$0xff]
    %v1160 = vld [vmem:[#allocation4 + $0x38] sm:$0xff]
    %v1161 = vld [vmem:[#allocation4 + $0x40] sm:$0xff]
    %v1162 = vld [vmem:[#allocation4 + $0x48] sm:$0xff]
    %v1163 = vld [vmem:[#allocation4 + $0x50] sm:$0xff]
    %v1164 = vld [vmem:[#allocation4 + $0x58] sm:$0xff]
    %v1165 = vld [vmem:[#allocation4 + $0x60] sm:$0xff]
    %v1166 = vld [vmem:[#allocation4 + $0x68] sm:$0xff]
    %v1167 = vld [vmem:[#allocation4 + $0x70] sm:$0xff]
    %v1168 = vld [vmem:[#allocation4 + $0x78] sm:$0xff]
    %s1169 = sld [smem:[#allocation12 + $0x2]]
    %v1170 = vstv %s1169
    %v1171 = vmul.f32 %v1170, %v1005
    %v1172 = vmul.f32 %v1170, %v1006
    %v1173 = vmul.f32 %v1170, %v1007
    %v1174 = vmul.f32 %v1170, %v1008
    %v1175 = vmul.f32 %v1170, %v1009
    %v1176 = vmul.f32 %v1170, %v1010
    %v1177 = vmul.f32 %v1170, %v1011
    %v1178 = vmul.f32 %v1170, %v1012
    %v1179 = vmul.f32 %v1170, %v1013
    %v1180 = vmul.f32 %v1170, %v1014
    %v1181 = vmul.f32 %v1170, %v1015
    %v1182 = vmul.f32 %v1170, %v1016
    %v1183 = vmul.f32 %v1170, %v1017
    %v1184 = vmul.f32 %v1170, %v1018
    %v1185 = vmul.f32 %v1170, %v1019
    %v1186 = vmul.f32 %v1170, %v1020
    %v1187 = vadd.f32 %v1153, %v1171
    %v1188 = vadd.f32 %v1154, %v1172
    %v1189 = vadd.f32 %v1155, %v1173
    %v1190 = vadd.f32 %v1156, %v1174
    %v1191 = vadd.f32 %v1157, %v1175
    %v1192 = vadd.f32 %v1158, %v1176
    %v1193 = vadd.f32 %v1159, %v1177
    %v1194 = vadd.f32 %v1160, %v1178
    %v1195 = vadd.f32 %v1161, %v1179
    %v1196 = vadd.f32 %v1162, %v1180
    %v1197 = vadd.f32 %v1163, %v1181
    %v1198 = vadd.f32 %v1164, %v1182
    %v1199 = vadd.f32 %v1165, %v1183
    %v1200 = vadd.f32 %v1166, %v1184
    %v1201 = vadd.f32 %v1167, %v1185
    %v1202 = vadd.f32 %v1168, %v1186
    %1203 = vst [vmem:[#allocation4] sm:$0xff] %v1187
    %1204 = vst [vmem:[#allocation4 + $0x8] sm:$0xff] %v1188
    %1205 = vst [vmem:[#allocation4 + $0x10] sm:$0xff] %v1189
    %1206 = vst [vmem:[#allocation4 + $0x18] sm:$0xff] %v1190
    %1207 = vst [vmem:[#allocation4 + $0x20] sm:$0xff] %v1191
    %1208 = vst [vmem:[#allocation4 + $0x28] sm:$0xff] %v1192
    %1209 = vst [vmem:[#allocation4 + $0x30] sm:$0xff] %v1193
    %1210 = vst [vmem:[#allocation4 + $0x38] sm:$0xff] %v1194
    %1211 = vst [vmem:[#allocation4 + $0x40] sm:$0xff] %v1195
    %1212 = vst [vmem:[#allocation4 + $0x48] sm:$0xff] %v1196
    %1213 = vst [vmem:[#allocation4 + $0x50] sm:$0xff] %v1197
    %1214 = vst [vmem:[#allocation4 + $0x58] sm:$0xff] %v1198
    %1215 = vst [vmem:[#allocation4 + $0x60] sm:$0xff] %v1199
    %1216 = vst [vmem:[#allocation4 + $0x68] sm:$0xff] %v1200
    %1217 = vst [vmem:[#allocation4 + $0x70] sm:$0xff] %v1201
    %1218 = vst [vmem:[#allocation4 + $0x78] sm:$0xff] %v1202
    %v1219 = vld [vmem:[%s201] sm:$0xff]
    %v1220 = vld [vmem:[%s201 + $0x8] sm:$0xff]
    %v1221 = vld [vmem:[%s201 + $0x10] sm:$0xff]
    %v1222 = vld [vmem:[%s201 + $0x18] sm:$0xff]
    %v1223 = vld [vmem:[%s201 + $0x20] sm:$0xff]
    %v1224 = vld [vmem:[%s201 + $0x28] sm:$0xff]
    %v1225 = vld [vmem:[%s201 + $0x30] sm:$0xff]
    %v1226 = vld [vmem:[%s201 + $0x38] sm:$0xff]
    %v1227 = vld [vmem:[%s201 + $0x40] sm:$0xff]
    %v1228 = vld [vmem:[%s201 + $0x48] sm:$0xff]
    %v1229 = vld [vmem:[%s201 + $0x50] sm:$0xff]
    %v1230 = vld [vmem:[%s201 + $0x58] sm:$0xff]
    %v1231 = vld [vmem:[%s201 + $0x60] sm:$0xff]
    %v1232 = vld [vmem:[%s201 + $0x68] sm:$0xff]
    %v1233 = vld [vmem:[%s201 + $0x70] sm:$0xff]
    %v1234 = vld [vmem:[%s201 + $0x78] sm:$0xff]
    %s1235 = sld [smem:[#allocation5 + $0x82]]
    %v1236 = vstv %s1235
    %v1237 = vmul.f32 %v1236, %v1005
    %v1238 = vmul.f32 %v1236, %v1006
    %v1239 = vmul.f32 %v1236, %v1007
    %v1240 = vmul.f32 %v1236, %v1008
    %v1241 = vmul.f32 %v1236, %v1009
    %v1242 = vmul.f32 %v1236, %v1010
    %v1243 = vmul.f32 %v1236, %v1011
    %v1244 = vmul.f32 %v1236, %v1012
    %v1245 = vmul.f32 %v1236, %v1013
    %v1246 = vmul.f32 %v1236, %v1014
    %v1247 = vmul.f32 %v1236, %v1015
    %v1248 = vmul.f32 %v1236, %v1016
    %v1249 = vmul.f32 %v1236, %v1017
    %v1250 = vmul.f32 %v1236, %v1018
    %v1251 = vmul.f32 %v1236, %v1019
    %v1252 = vmul.f32 %v1236, %v1020
    %v1253 = vadd.f32 %v1219, %v1237
    %v1254 = vadd.f32 %v1220, %v1238
    %v1255 = vadd.f32 %v1221, %v1239
    %v1256 = vadd.f32 %v1222, %v1240
    %v1257 = vadd.f32 %v1223, %v1241
    %v1258 = vadd.f32 %v1224, %v1242
    %v1259 = vadd.f32 %v1225, %v1243
    %v1260 = vadd.f32 %v1226, %v1244
    %v1261 = vadd.f32 %v1227, %v1245
    %v1262 = vadd.f32 %v1228, %v1246
    %v1263 = vadd.f32 %v1229, %v1247
    %v1264 = vadd.f32 %v1230, %v1248
    %v1265 = vadd.f32 %v1231, %v1249
    %v1266 = vadd.f32 %v1232, %v1250
    %v1267 = vadd.f32 %v1233, %v1251
    %v1268 = vadd.f32 %v1234, %v1252
    %1269 = vst [vmem:[%s201] sm:$0xff] %v1253
    %1270 = vst [vmem:[%s201 + $0x8] sm:$0xff] %v1254
    %1271 = vst [vmem:[%s201 + $0x10] sm:$0xff] %v1255
    %1272 = vst [vmem:[%s201 + $0x18] sm:$0xff] %v1256
    %1273 = vst [vmem:[%s201 + $0x20] sm:$0xff] %v1257
    %1274 = vst [vmem:[%s201 + $0x28] sm:$0xff] %v1258
    %1275 = vst [vmem:[%s201 + $0x30] sm:$0xff] %v1259
    %1276 = vst [vmem:[%s201 + $0x38] sm:$0xff] %v1260
    %1277 = vst [vmem:[%s201 + $0x40] sm:$0xff] %v1261
    %1278 = vst [vmem:[%s201 + $0x48] sm:$0xff] %v1262
    %1279 = vst [vmem:[%s201 + $0x50] sm:$0xff] %v1263
    %1280 = vst [vmem:[%s201 + $0x58] sm:$0xff] %v1264
    %1281 = vst [vmem:[%s201 + $0x60] sm:$0xff] %v1265
    %1282 = vst [vmem:[%s201 + $0x68] sm:$0xff] %v1266
    %1283 = vst [vmem:[%s201 + $0x70] sm:$0xff] %v1267
    %1284 = vst [vmem:[%s201 + $0x78] sm:$0xff] %v1268
    %v1285 = vld [vmem:[%s236] sm:$0xff]
    %v1286 = vld [vmem:[%s236 + $0x8] sm:$0xff]
    %v1287 = vld [vmem:[%s236 + $0x10] sm:$0xff]
    %v1288 = vld [vmem:[%s236 + $0x18] sm:$0xff]
    %v1289 = vld [vmem:[%s236 + $0x20] sm:$0xff]
    %v1290 = vld [vmem:[%s236 + $0x28] sm:$0xff]
    %v1291 = vld [vmem:[%s236 + $0x30] sm:$0xff]
    %v1292 = vld [vmem:[%s236 + $0x38] sm:$0xff]
    %v1293 = vld [vmem:[%s236 + $0x40] sm:$0xff]
    %v1294 = vld [vmem:[%s236 + $0x48] sm:$0xff]
    %v1295 = vld [vmem:[%s236 + $0x50] sm:$0xff]
    %v1296 = vld [vmem:[%s236 + $0x58] sm:$0xff]
    %v1297 = vld [vmem:[%s236 + $0x60] sm:$0xff]
    %v1298 = vld [vmem:[%s236 + $0x68] sm:$0xff]
    %v1299 = vld [vmem:[%s236 + $0x70] sm:$0xff]
    %v1300 = vld [vmem:[%s236 + $0x78] sm:$0xff]
    %s1301 = sld [smem:[#allocation10 + $0x82]]
    %v1302 = vstv %s1301
    %v1303 = vmul.f32 %v1302, %v1005
    %v1304 = vmul.f32 %v1302, %v1006
    %v1305 = vmul.f32 %v1302, %v1007
    %v1306 = vmul.f32 %v1302, %v1008
    %v1307 = vmul.f32 %v1302, %v1009
    %v1308 = vmul.f32 %v1302, %v1010
    %v1309 = vmul.f32 %v1302, %v1011
    %v1310 = vmul.f32 %v1302, %v1012
    %v1311 = vmul.f32 %v1302, %v1013
    %v1312 = vmul.f32 %v1302, %v1014
    %v1313 = vmul.f32 %v1302, %v1015
    %v1314 = vmul.f32 %v1302, %v1016
    %v1315 = vmul.f32 %v1302, %v1017
    %v1316 = vmul.f32 %v1302, %v1018
    %v1317 = vmul.f32 %v1302, %v1019
    %v1318 = vmul.f32 %v1302, %v1020
    %v1319 = vadd.f32 %v1285, %v1303
    %v1320 = vadd.f32 %v1286, %v1304
    %v1321 = vadd.f32 %v1287, %v1305
    %v1322 = vadd.f32 %v1288, %v1306
    %v1323 = vadd.f32 %v1289, %v1307
    %v1324 = vadd.f32 %v1290, %v1308
    %v1325 = vadd.f32 %v1291, %v1309
    %v1326 = vadd.f32 %v1292, %v1310
    %v1327 = vadd.f32 %v1293, %v1311
    %v1328 = vadd.f32 %v1294, %v1312
    %v1329 = vadd.f32 %v1295, %v1313
    %v1330 = vadd.f32 %v1296, %v1314
    %v1331 = vadd.f32 %v1297, %v1315
    %v1332 = vadd.f32 %v1298, %v1316
    %v1333 = vadd.f32 %v1299, %v1317
    %v1334 = vadd.f32 %v1300, %v1318
    %1335 = vst [vmem:[%s236] sm:$0xff] %v1319
    %1336 = vst [vmem:[%s236 + $0x8] sm:$0xff] %v1320
    %1337 = vst [vmem:[%s236 + $0x10] sm:$0xff] %v1321
    %1338 = vst [vmem:[%s236 + $0x18] sm:$0xff] %v1322
    %1339 = vst [vmem:[%s236 + $0x20] sm:$0xff] %v1323
    %1340 = vst [vmem:[%s236 + $0x28] sm:$0xff] %v1324
    %1341 = vst [vmem:[%s236 + $0x30] sm:$0xff] %v1325
    %1342 = vst [vmem:[%s236 + $0x38] sm:$0xff] %v1326
    %1343 = vst [vmem:[%s236 + $0x40] sm:$0xff] %v1327
    %1344 = vst [vmem:[%s236 + $0x48] sm:$0xff] %v1328
    %1345 = vst [vmem:[%s236 + $0x50] sm:$0xff] %v1329
    %1346 = vst [vmem:[%s236 + $0x58] sm:$0xff] %v1330
    %1347 = vst [vmem:[%s236 + $0x60] sm:$0xff] %v1331
    %1348 = vst [vmem:[%s236 + $0x68] sm:$0xff] %v1332
    %1349 = vst [vmem:[%s236 + $0x70] sm:$0xff] %v1333
    %1350 = vst [vmem:[%s236 + $0x78] sm:$0xff] %v1334
    %v1351 = vld [vmem:[%s271] sm:$0xff]
    %v1352 = vld [vmem:[%s271 + $0x8] sm:$0xff]
    %v1353 = vld [vmem:[%s271 + $0x10] sm:$0xff]
    %v1354 = vld [vmem:[%s271 + $0x18] sm:$0xff]
    %v1355 = vld [vmem:[%s271 + $0x20] sm:$0xff]
    %v1356 = vld [vmem:[%s271 + $0x28] sm:$0xff]
    %v1357 = vld [vmem:[%s271 + $0x30] sm:$0xff]
    %v1358 = vld [vmem:[%s271 + $0x38] sm:$0xff]
    %v1359 = vld [vmem:[%s271 + $0x40] sm:$0xff]
    %v1360 = vld [vmem:[%s271 + $0x48] sm:$0xff]
    %v1361 = vld [vmem:[%s271 + $0x50] sm:$0xff]
    %v1362 = vld [vmem:[%s271 + $0x58] sm:$0xff]
    %v1363 = vld [vmem:[%s271 + $0x60] sm:$0xff]
    %v1364 = vld [vmem:[%s271 + $0x68] sm:$0xff]
    %v1365 = vld [vmem:[%s271 + $0x70] sm:$0xff]
    %v1366 = vld [vmem:[%s271 + $0x78] sm:$0xff]
    %s1367 = sld [smem:[#allocation12 + $0x82]]
    %v1368 = vstv %s1367
    %v1369 = vmul.f32 %v1368, %v1005
    %v1370 = vmul.f32 %v1368, %v1006
    %v1371 = vmul.f32 %v1368, %v1007
    %v1372 = vmul.f32 %v1368, %v1008
    %v1373 = vmul.f32 %v1368, %v1009
    %v1374 = vmul.f32 %v1368, %v1010
    %v1375 = vmul.f32 %v1368, %v1011
    %v1376 = vmul.f32 %v1368, %v1012
    %v1377 = vmul.f32 %v1368, %v1013
    %v1378 = vmul.f32 %v1368, %v1014
    %v1379 = vmul.f32 %v1368, %v1015
    %v1380 = vmul.f32 %v1368, %v1016
    %v1381 = vmul.f32 %v1368, %v1017
    %v1382 = vmul.f32 %v1368, %v1018
    %v1383 = vmul.f32 %v1368, %v1019
    %v1384 = vmul.f32 %v1368, %v1020
    %v1385 = vadd.f32 %v1351, %v1369
    %v1386 = vadd.f32 %v1352, %v1370
    %v1387 = vadd.f32 %v1353, %v1371
    %v1388 = vadd.f32 %v1354, %v1372
    %v1389 = vadd.f32 %v1355, %v1373
    %v1390 = vadd.f32 %v1356, %v1374
    %v1391 = vadd.f32 %v1357, %v1375
    %v1392 = vadd.f32 %v1358, %v1376
    %v1393 = vadd.f32 %v1359, %v1377
    %v1394 = vadd.f32 %v1360, %v1378
    %v1395 = vadd.f32 %v1361, %v1379
    %v1396 = vadd.f32 %v1362, %v1380
    %v1397 = vadd.f32 %v1363, %v1381
    %v1398 = vadd.f32 %v1364, %v1382
    %v1399 = vadd.f32 %v1365, %v1383
    %v1400 = vadd.f32 %v1366, %v1384
    %1401 = vst [vmem:[%s271] sm:$0xff] %v1385
    %1402 = vst [vmem:[%s271 + $0x8] sm:$0xff] %v1386
    %1403 = vst [vmem:[%s271 + $0x10] sm:$0xff] %v1387
    %1404 = vst [vmem:[%s271 + $0x18] sm:$0xff] %v1388
    %1405 = vst [vmem:[%s271 + $0x20] sm:$0xff] %v1389
    %1406 = vst [vmem:[%s271 + $0x28] sm:$0xff] %v1390
    %1407 = vst [vmem:[%s271 + $0x30] sm:$0xff] %v1391
    %1408 = vst [vmem:[%s271 + $0x38] sm:$0xff] %v1392
    %1409 = vst [vmem:[%s271 + $0x40] sm:$0xff] %v1393
    %1410 = vst [vmem:[%s271 + $0x48] sm:$0xff] %v1394
    %1411 = vst [vmem:[%s271 + $0x50] sm:$0xff] %v1395
    %1412 = vst [vmem:[%s271 + $0x58] sm:$0xff] %v1396
    %1413 = vst [vmem:[%s271 + $0x60] sm:$0xff] %v1397
    %1414 = vst [vmem:[%s271 + $0x68] sm:$0xff] %v1398
    %1415 = vst [vmem:[%s271 + $0x70] sm:$0xff] %v1399
    %1416 = vst [vmem:[%s271 + $0x78] sm:$0xff] %v1400
    %v1417 = vld [vmem:[%s306] sm:$0xff]
    %v1418 = vld [vmem:[%s306 + $0x8] sm:$0xff]
    %v1419 = vld [vmem:[%s306 + $0x10] sm:$0xff]
    %v1420 = vld [vmem:[%s306 + $0x18] sm:$0xff]
    %v1421 = vld [vmem:[%s306 + $0x20] sm:$0xff]
    %v1422 = vld [vmem:[%s306 + $0x28] sm:$0xff]
    %v1423 = vld [vmem:[%s306 + $0x30] sm:$0xff]
    %v1424 = vld [vmem:[%s306 + $0x38] sm:$0xff]
    %v1425 = vld [vmem:[%s306 + $0x40] sm:$0xff]
    %v1426 = vld [vmem:[%s306 + $0x48] sm:$0xff]
    %v1427 = vld [vmem:[%s306 + $0x50] sm:$0xff]
    %v1428 = vld [vmem:[%s306 + $0x58] sm:$0xff]
    %v1429 = vld [vmem:[%s306 + $0x60] sm:$0xff]
    %v1430 = vld [vmem:[%s306 + $0x68] sm:$0xff]
    %v1431 = vld [vmem:[%s306 + $0x70] sm:$0xff]
    %v1432 = vld [vmem:[%s306 + $0x78] sm:$0xff]
    %s1433 = sld [smem:[#allocation5 + $0x102]]
    %v1434 = vstv %s1433
    %v1435 = vmul.f32 %v1434, %v1005
    %v1436 = vmul.f32 %v1434, %v1006
    %v1437 = vmul.f32 %v1434, %v1007
    %v1438 = vmul.f32 %v1434, %v1008
    %v1439 = vmul.f32 %v1434, %v1009
    %v1440 = vmul.f32 %v1434, %v1010
    %v1441 = vmul.f32 %v1434, %v1011
    %v1442 = vmul.f32 %v1434, %v1012
    %v1443 = vmul.f32 %v1434, %v1013
    %v1444 = vmul.f32 %v1434, %v1014
    %v1445 = vmul.f32 %v1434, %v1015
    %v1446 = vmul.f32 %v1434, %v1016
    %v1447 = vmul.f32 %v1434, %v1017
    %v1448 = vmul.f32 %v1434, %v1018
    %v1449 = vmul.f32 %v1434, %v1019
    %v1450 = vmul.f32 %v1434, %v1020
    %v1451 = vadd.f32 %v1417, %v1435
    %v1452 = vadd.f32 %v1418, %v1436
    %v1453 = vadd.f32 %v1419, %v1437
    %v1454 = vadd.f32 %v1420, %v1438
    %v1455 = vadd.f32 %v1421, %v1439
    %v1456 = vadd.f32 %v1422, %v1440
    %v1457 = vadd.f32 %v1423, %v1441
    %v1458 = vadd.f32 %v1424, %v1442
    %v1459 = vadd.f32 %v1425, %v1443
    %v1460 = vadd.f32 %v1426, %v1444
    %v1461 = vadd.f32 %v1427, %v1445
    %v1462 = vadd.f32 %v1428, %v1446
    %v1463 = vadd.f32 %v1429, %v1447
    %v1464 = vadd.f32 %v1430, %v1448
    %v1465 = vadd.f32 %v1431, %v1449
    %v1466 = vadd.f32 %v1432, %v1450
    %1467 = vst [vmem:[%s306] sm:$0xff] %v1451
    %1468 = vst [vmem:[%s306 + $0x8] sm:$0xff] %v1452
    %1469 = vst [vmem:[%s306 + $0x10] sm:$0xff] %v1453
    %1470 = vst [vmem:[%s306 + $0x18] sm:$0xff] %v1454
    %1471 = vst [vmem:[%s306 + $0x20] sm:$0xff] %v1455
    %1472 = vst [vmem:[%s306 + $0x28] sm:$0xff] %v1456
    %1473 = vst [vmem:[%s306 + $0x30] sm:$0xff] %v1457
    %1474 = vst [vmem:[%s306 + $0x38] sm:$0xff] %v1458
    %1475 = vst [vmem:[%s306 + $0x40] sm:$0xff] %v1459
    %1476 = vst [vmem:[%s306 + $0x48] sm:$0xff] %v1460
    %1477 = vst [vmem:[%s306 + $0x50] sm:$0xff] %v1461
    %1478 = vst [vmem:[%s306 + $0x58] sm:$0xff] %v1462
    %1479 = vst [vmem:[%s306 + $0x60] sm:$0xff] %v1463
    %1480 = vst [vmem:[%s306 + $0x68] sm:$0xff] %v1464
    %1481 = vst [vmem:[%s306 + $0x70] sm:$0xff] %v1465
    %1482 = vst [vmem:[%s306 + $0x78] sm:$0xff] %v1466
    %v1483 = vld [vmem:[%s341] sm:$0xff]
    %v1484 = vld [vmem:[%s341 + $0x8] sm:$0xff]
    %v1485 = vld [vmem:[%s341 + $0x10] sm:$0xff]
    %v1486 = vld [vmem:[%s341 + $0x18] sm:$0xff]
    %v1487 = vld [vmem:[%s341 + $0x20] sm:$0xff]
    %v1488 = vld [vmem:[%s341 + $0x28] sm:$0xff]
    %v1489 = vld [vmem:[%s341 + $0x30] sm:$0xff]
    %v1490 = vld [vmem:[%s341 + $0x38] sm:$0xff]
    %v1491 = vld [vmem:[%s341 + $0x40] sm:$0xff]
    %v1492 = vld [vmem:[%s341 + $0x48] sm:$0xff]
    %v1493 = vld [vmem:[%s341 + $0x50] sm:$0xff]
    %v1494 = vld [vmem:[%s341 + $0x58] sm:$0xff]
    %v1495 = vld [vmem:[%s341 + $0x60] sm:$0xff]
    %v1496 = vld [vmem:[%s341 + $0x68] sm:$0xff]
    %v1497 = vld [vmem:[%s341 + $0x70] sm:$0xff]
    %v1498 = vld [vmem:[%s341 + $0x78] sm:$0xff]
    %s1499 = sld [smem:[#allocation10 + $0x102]]
    %v1500 = vstv %s1499
    %v1501 = vmul.f32 %v1500, %v1005
    %v1502 = vmul.f32 %v1500, %v1006
    %v1503 = vmul.f32 %v1500, %v1007
    %v1504 = vmul.f32 %v1500, %v1008
    %v1505 = vmul.f32 %v1500, %v1009
    %v1506 = vmul.f32 %v1500, %v1010
    %v1507 = vmul.f32 %v1500, %v1011
    %v1508 = vmul.f32 %v1500, %v1012
    %v1509 = vmul.f32 %v1500, %v1013
    %v1510 = vmul.f32 %v1500, %v1014
    %v1511 = vmul.f32 %v1500, %v1015
    %v1512 = vmul.f32 %v1500, %v1016
    %v1513 = vmul.f32 %v1500, %v1017
    %v1514 = vmul.f32 %v1500, %v1018
    %v1515 = vmul.f32 %v1500, %v1019
    %v1516 = vmul.f32 %v1500, %v1020
    %v1517 = vadd.f32 %v1483, %v1501
    %v1518 = vadd.f32 %v1484, %v1502
    %v1519 = vadd.f32 %v1485, %v1503
    %v1520 = vadd.f32 %v1486, %v1504
    %v1521 = vadd.f32 %v1487, %v1505
    %v1522 = vadd.f32 %v1488, %v1506
    %v1523 = vadd.f32 %v1489, %v1507
    %v1524 = vadd.f32 %v1490, %v1508
    %v1525 = vadd.f32 %v1491, %v1509
    %v1526 = vadd.f32 %v1492, %v1510
    %v1527 = vadd.f32 %v1493, %v1511
    %v1528 = vadd.f32 %v1494, %v1512
    %v1529 = vadd.f32 %v1495, %v1513
    %v1530 = vadd.f32 %v1496, %v1514
    %v1531 = vadd.f32 %v1497, %v1515
    %v1532 = vadd.f32 %v1498, %v1516
    %1533 = vst [vmem:[%s341] sm:$0xff] %v1517
    %1534 = vst [vmem:[%s341 + $0x8] sm:$0xff] %v1518
    %1535 = vst [vmem:[%s341 + $0x10] sm:$0xff] %v1519
    %1536 = vst [vmem:[%s341 + $0x18] sm:$0xff] %v1520
    %1537 = vst [vmem:[%s341 + $0x20] sm:$0xff] %v1521
    %1538 = vst [vmem:[%s341 + $0x28] sm:$0xff] %v1522
    %1539 = vst [vmem:[%s341 + $0x30] sm:$0xff] %v1523
    %1540 = vst [vmem:[%s341 + $0x38] sm:$0xff] %v1524
    %1541 = vst [vmem:[%s341 + $0x40] sm:$0xff] %v1525
    %1542 = vst [vmem:[%s341 + $0x48] sm:$0xff] %v1526
    %1543 = vst [vmem:[%s341 + $0x50] sm:$0xff] %v1527
    %1544 = vst [vmem:[%s341 + $0x58] sm:$0xff] %v1528
    %1545 = vst [vmem:[%s341 + $0x60] sm:$0xff] %v1529
    %1546 = vst [vmem:[%s341 + $0x68] sm:$0xff] %v1530
    %1547 = vst [vmem:[%s341 + $0x70] sm:$0xff] %v1531
    %1548 = vst [vmem:[%s341 + $0x78] sm:$0xff] %v1532
    %v1549 = vld [vmem:[%s376] sm:$0xff]
    %v1550 = vld [vmem:[%s376 + $0x8] sm:$0xff]
    %v1551 = vld [vmem:[%s376 + $0x10] sm:$0xff]
    %v1552 = vld [vmem:[%s376 + $0x18] sm:$0xff]
    %v1553 = vld [vmem:[%s376 + $0x20] sm:$0xff]
    %v1554 = vld [vmem:[%s376 + $0x28] sm:$0xff]
    %v1555 = vld [vmem:[%s376 + $0x30] sm:$0xff]
    %v1556 = vld [vmem:[%s376 + $0x38] sm:$0xff]
    %v1557 = vld [vmem:[%s376 + $0x40] sm:$0xff]
    %v1558 = vld [vmem:[%s376 + $0x48] sm:$0xff]
    %v1559 = vld [vmem:[%s376 + $0x50] sm:$0xff]
    %v1560 = vld [vmem:[%s376 + $0x58] sm:$0xff]
    %v1561 = vld [vmem:[%s376 + $0x60] sm:$0xff]
    %v1562 = vld [vmem:[%s376 + $0x68] sm:$0xff]
    %v1563 = vld [vmem:[%s376 + $0x70] sm:$0xff]
    %v1564 = vld [vmem:[%s376 + $0x78] sm:$0xff]
    %s1565 = sld [smem:[#allocation12 + $0x102]]
    %v1566 = vstv %s1565
    %v1567 = vmul.f32 %v1566, %v1005
    %v1568 = vmul.f32 %v1566, %v1006
    %v1569 = vmul.f32 %v1566, %v1007
    %v1570 = vmul.f32 %v1566, %v1008
    %v1571 = vmul.f32 %v1566, %v1009
    %v1572 = vmul.f32 %v1566, %v1010
    %v1573 = vmul.f32 %v1566, %v1011
    %v1574 = vmul.f32 %v1566, %v1012
    %v1575 = vmul.f32 %v1566, %v1013
    %v1576 = vmul.f32 %v1566, %v1014
    %v1577 = vmul.f32 %v1566, %v1015
    %v1578 = vmul.f32 %v1566, %v1016
    %v1579 = vmul.f32 %v1566, %v1017
    %v1580 = vmul.f32 %v1566, %v1018
    %v1581 = vmul.f32 %v1566, %v1019
    %v1582 = vmul.f32 %v1566, %v1020
    %v1583 = vadd.f32 %v1549, %v1567
    %v1584 = vadd.f32 %v1550, %v1568
    %v1585 = vadd.f32 %v1551, %v1569
    %v1586 = vadd.f32 %v1552, %v1570
    %v1587 = vadd.f32 %v1553, %v1571
    %v1588 = vadd.f32 %v1554, %v1572
    %v1589 = vadd.f32 %v1555, %v1573
    %v1590 = vadd.f32 %v1556, %v1574
    %v1591 = vadd.f32 %v1557, %v1575
    %v1592 = vadd.f32 %v1558, %v1576
    %v1593 = vadd.f32 %v1559, %v1577
    %v1594 = vadd.f32 %v1560, %v1578
    %v1595 = vadd.f32 %v1561, %v1579
    %v1596 = vadd.f32 %v1562, %v1580
    %v1597 = vadd.f32 %v1563, %v1581
    %v1598 = vadd.f32 %v1564, %v1582
    %1599 = vst [vmem:[%s376] sm:$0xff] %v1583
    %1600 = vst [vmem:[%s376 + $0x8] sm:$0xff] %v1584
    %1601 = vst [vmem:[%s376 + $0x10] sm:$0xff] %v1585
    %1602 = vst [vmem:[%s376 + $0x18] sm:$0xff] %v1586
    %1603 = vst [vmem:[%s376 + $0x20] sm:$0xff] %v1587
    %1604 = vst [vmem:[%s376 + $0x28] sm:$0xff] %v1588
    %1605 = vst [vmem:[%s376 + $0x30] sm:$0xff] %v1589
    %1606 = vst [vmem:[%s376 + $0x38] sm:$0xff] %v1590
    %1607 = vst [vmem:[%s376 + $0x40] sm:$0xff] %v1591
    %1608 = vst [vmem:[%s376 + $0x48] sm:$0xff] %v1592
    %1609 = vst [vmem:[%s376 + $0x50] sm:$0xff] %v1593
    %1610 = vst [vmem:[%s376 + $0x58] sm:$0xff] %v1594
    %1611 = vst [vmem:[%s376 + $0x60] sm:$0xff] %v1595
    %1612 = vst [vmem:[%s376 + $0x68] sm:$0xff] %v1596
    %1613 = vst [vmem:[%s376 + $0x70] sm:$0xff] %v1597
    %1614 = vst [vmem:[%s376 + $0x78] sm:$0xff] %v1598
    %s1615 = scalar_lea.vmem [#allocation13], 384
    %v1616 = vld [vmem:[%s1615] sm:$0xff]
    %v1617 = vld [vmem:[%s1615 + $0x8] sm:$0xff]
    %v1618 = vld [vmem:[%s1615 + $0x10] sm:$0xff]
    %v1619 = vld [vmem:[%s1615 + $0x18] sm:$0xff]
    %v1620 = vld [vmem:[%s1615 + $0x20] sm:$0xff]
    %v1621 = vld [vmem:[%s1615 + $0x28] sm:$0xff]
    %v1622 = vld [vmem:[%s1615 + $0x30] sm:$0xff]
    %v1623 = vld [vmem:[%s1615 + $0x38] sm:$0xff]
    %v1624 = vld [vmem:[%s1615 + $0x40] sm:$0xff]
    %v1625 = vld [vmem:[%s1615 + $0x48] sm:$0xff]
    %v1626 = vld [vmem:[%s1615 + $0x50] sm:$0xff]
    %v1627 = vld [vmem:[%s1615 + $0x58] sm:$0xff]
    %v1628 = vld [vmem:[%s1615 + $0x60] sm:$0xff]
    %v1629 = vld [vmem:[%s1615 + $0x68] sm:$0xff]
    %v1630 = vld [vmem:[%s1615 + $0x70] sm:$0xff]
    %v1631 = vld [vmem:[%s1615 + $0x78] sm:$0xff]
    %v1632 = vld [vmem:[#allocation2] sm:$0xff]
    %v1633 = vld [vmem:[#allocation2 + $0x8] sm:$0xff]
    %v1634 = vld [vmem:[#allocation2 + $0x10] sm:$0xff]
    %v1635 = vld [vmem:[#allocation2 + $0x18] sm:$0xff]
    %v1636 = vld [vmem:[#allocation2 + $0x20] sm:$0xff]
    %v1637 = vld [vmem:[#allocation2 + $0x28] sm:$0xff]
    %v1638 = vld [vmem:[#allocation2 + $0x30] sm:$0xff]
    %v1639 = vld [vmem:[#allocation2 + $0x38] sm:$0xff]
    %v1640 = vld [vmem:[#allocation2 + $0x40] sm:$0xff]
    %v1641 = vld [vmem:[#allocation2 + $0x48] sm:$0xff]
    %v1642 = vld [vmem:[#allocation2 + $0x50] sm:$0xff]
    %v1643 = vld [vmem:[#allocation2 + $0x58] sm:$0xff]
    %v1644 = vld [vmem:[#allocation2 + $0x60] sm:$0xff]
    %v1645 = vld [vmem:[#allocation2 + $0x68] sm:$0xff]
    %v1646 = vld [vmem:[#allocation2 + $0x70] sm:$0xff]
    %v1647 = vld [vmem:[#allocation2 + $0x78] sm:$0xff]
    %s1648 = sld [smem:[#allocation5 + $0x3]]
    %v1649 = vstv %s1648
    %v1650 = vmul.f32 %v1649, %v1616
    %v1651 = vmul.f32 %v1649, %v1617
    %v1652 = vmul.f32 %v1649, %v1618
    %v1653 = vmul.f32 %v1649, %v1619
    %v1654 = vmul.f32 %v1649, %v1620
    %v1655 = vmul.f32 %v1649, %v1621
    %v1656 = vmul.f32 %v1649, %v1622
    %v1657 = vmul.f32 %v1649, %v1623
    %v1658 = vmul.f32 %v1649, %v1624
    %v1659 = vmul.f32 %v1649, %v1625
    %v1660 = vmul.f32 %v1649, %v1626
    %v1661 = vmul.f32 %v1649, %v1627
    %v1662 = vmul.f32 %v1649, %v1628
    %v1663 = vmul.f32 %v1649, %v1629
    %v1664 = vmul.f32 %v1649, %v1630
    %v1665 = vmul.f32 %v1649, %v1631
    %v1666 = vadd.f32 %v1632, %v1650
    %v1667 = vadd.f32 %v1633, %v1651
    %v1668 = vadd.f32 %v1634, %v1652
    %v1669 = vadd.f32 %v1635, %v1653
    %v1670 = vadd.f32 %v1636, %v1654
    %v1671 = vadd.f32 %v1637, %v1655
    %v1672 = vadd.f32 %v1638, %v1656
    %v1673 = vadd.f32 %v1639, %v1657
    %v1674 = vadd.f32 %v1640, %v1658
    %v1675 = vadd.f32 %v1641, %v1659
    %v1676 = vadd.f32 %v1642, %v1660
    %v1677 = vadd.f32 %v1643, %v1661
    %v1678 = vadd.f32 %v1644, %v1662
    %v1679 = vadd.f32 %v1645, %v1663
    %v1680 = vadd.f32 %v1646, %v1664
    %v1681 = vadd.f32 %v1647, %v1665
    %1682 = vst [vmem:[#allocation2] sm:$0xff] %v1666
    %1683 = vst [vmem:[#allocation2 + $0x8] sm:$0xff] %v1667
    %1684 = vst [vmem:[#allocation2 + $0x10] sm:$0xff] %v1668
    %1685 = vst [vmem:[#allocation2 + $0x18] sm:$0xff] %v1669
    %1686 = vst [vmem:[#allocation2 + $0x20] sm:$0xff] %v1670
    %1687 = vst [vmem:[#allocation2 + $0x28] sm:$0xff] %v1671
    %1688 = vst [vmem:[#allocation2 + $0x30] sm:$0xff] %v1672
    %1689 = vst [vmem:[#allocation2 + $0x38] sm:$0xff] %v1673
    %1690 = vst [vmem:[#allocation2 + $0x40] sm:$0xff] %v1674
    %1691 = vst [vmem:[#allocation2 + $0x48] sm:$0xff] %v1675
    %1692 = vst [vmem:[#allocation2 + $0x50] sm:$0xff] %v1676
    %1693 = vst [vmem:[#allocation2 + $0x58] sm:$0xff] %v1677
    %1694 = vst [vmem:[#allocation2 + $0x60] sm:$0xff] %v1678
    %1695 = vst [vmem:[#allocation2 + $0x68] sm:$0xff] %v1679
    %1696 = vst [vmem:[#allocation2 + $0x70] sm:$0xff] %v1680
    %1697 = vst [vmem:[#allocation2 + $0x78] sm:$0xff] %v1681
    %v1698 = vld [vmem:[#allocation3] sm:$0xff]
    %v1699 = vld [vmem:[#allocation3 + $0x8] sm:$0xff]
    %v1700 = vld [vmem:[#allocation3 + $0x10] sm:$0xff]
    %v1701 = vld [vmem:[#allocation3 + $0x18] sm:$0xff]
    %v1702 = vld [vmem:[#allocation3 + $0x20] sm:$0xff]
    %v1703 = vld [vmem:[#allocation3 + $0x28] sm:$0xff]
    %v1704 = vld [vmem:[#allocation3 + $0x30] sm:$0xff]
    %v1705 = vld [vmem:[#allocation3 + $0x38] sm:$0xff]
    %v1706 = vld [vmem:[#allocation3 + $0x40] sm:$0xff]
    %v1707 = vld [vmem:[#allocation3 + $0x48] sm:$0xff]
    %v1708 = vld [vmem:[#allocation3 + $0x50] sm:$0xff]
    %v1709 = vld [vmem:[#allocation3 + $0x58] sm:$0xff]
    %v1710 = vld [vmem:[#allocation3 + $0x60] sm:$0xff]
    %v1711 = vld [vmem:[#allocation3 + $0x68] sm:$0xff]
    %v1712 = vld [vmem:[#allocation3 + $0x70] sm:$0xff]
    %v1713 = vld [vmem:[#allocation3 + $0x78] sm:$0xff]
    %s1714 = sld [smem:[#allocation10 + $0x3]]
    %v1715 = vstv %s1714
    %v1716 = vmul.f32 %v1715, %v1616
    %v1717 = vmul.f32 %v1715, %v1617
    %v1718 = vmul.f32 %v1715, %v1618
    %v1719 = vmul.f32 %v1715, %v1619
    %v1720 = vmul.f32 %v1715, %v1620
    %v1721 = vmul.f32 %v1715, %v1621
    %v1722 = vmul.f32 %v1715, %v1622
    %v1723 = vmul.f32 %v1715, %v1623
    %v1724 = vmul.f32 %v1715, %v1624
    %v1725 = vmul.f32 %v1715, %v1625
    %v1726 = vmul.f32 %v1715, %v1626
    %v1727 = vmul.f32 %v1715, %v1627
    %v1728 = vmul.f32 %v1715, %v1628
    %v1729 = vmul.f32 %v1715, %v1629
    %v1730 = vmul.f32 %v1715, %v1630
    %v1731 = vmul.f32 %v1715, %v1631
    %v1732 = vadd.f32 %v1698, %v1716
    %v1733 = vadd.f32 %v1699, %v1717
    %v1734 = vadd.f32 %v1700, %v1718
    %v1735 = vadd.f32 %v1701, %v1719
    %v1736 = vadd.f32 %v1702, %v1720
    %v1737 = vadd.f32 %v1703, %v1721
    %v1738 = vadd.f32 %v1704, %v1722
    %v1739 = vadd.f32 %v1705, %v1723
    %v1740 = vadd.f32 %v1706, %v1724
    %v1741 = vadd.f32 %v1707, %v1725
    %v1742 = vadd.f32 %v1708, %v1726
    %v1743 = vadd.f32 %v1709, %v1727
    %v1744 = vadd.f32 %v1710, %v1728
    %v1745 = vadd.f32 %v1711, %v1729
    %v1746 = vadd.f32 %v1712, %v1730
    %v1747 = vadd.f32 %v1713, %v1731
    %1748 = vst [vmem:[#allocation3] sm:$0xff] %v1732
    %1749 = vst [vmem:[#allocation3 + $0x8] sm:$0xff] %v1733
    %1750 = vst [vmem:[#allocation3 + $0x10] sm:$0xff] %v1734
    %1751 = vst [vmem:[#allocation3 + $0x18] sm:$0xff] %v1735
    %1752 = vst [vmem:[#allocation3 + $0x20] sm:$0xff] %v1736
    %1753 = vst [vmem:[#allocation3 + $0x28] sm:$0xff] %v1737
    %1754 = vst [vmem:[#allocation3 + $0x30] sm:$0xff] %v1738
    %1755 = vst [vmem:[#allocation3 + $0x38] sm:$0xff] %v1739
    %1756 = vst [vmem:[#allocation3 + $0x40] sm:$0xff] %v1740
    %1757 = vst [vmem:[#allocation3 + $0x48] sm:$0xff] %v1741
    %1758 = vst [vmem:[#allocation3 + $0x50] sm:$0xff] %v1742
    %1759 = vst [vmem:[#allocation3 + $0x58] sm:$0xff] %v1743
    %1760 = vst [vmem:[#allocation3 + $0x60] sm:$0xff] %v1744
    %1761 = vst [vmem:[#allocation3 + $0x68] sm:$0xff] %v1745
    %1762 = vst [vmem:[#allocation3 + $0x70] sm:$0xff] %v1746
    %1763 = vst [vmem:[#allocation3 + $0x78] sm:$0xff] %v1747
    %v1764 = vld [vmem:[#allocation4] sm:$0xff]
    %v1765 = vld [vmem:[#allocation4 + $0x8] sm:$0xff]
    %v1766 = vld [vmem:[#allocation4 + $0x10] sm:$0xff]
    %v1767 = vld [vmem:[#allocation4 + $0x18] sm:$0xff]
    %v1768 = vld [vmem:[#allocation4 + $0x20] sm:$0xff]
    %v1769 = vld [vmem:[#allocation4 + $0x28] sm:$0xff]
    %v1770 = vld [vmem:[#allocation4 + $0x30] sm:$0xff]
    %v1771 = vld [vmem:[#allocation4 + $0x38] sm:$0xff]
    %v1772 = vld [vmem:[#allocation4 + $0x40] sm:$0xff]
    %v1773 = vld [vmem:[#allocation4 + $0x48] sm:$0xff]
    %v1774 = vld [vmem:[#allocation4 + $0x50] sm:$0xff]
    %v1775 = vld [vmem:[#allocation4 + $0x58] sm:$0xff]
    %v1776 = vld [vmem:[#allocation4 + $0x60] sm:$0xff]
    %v1777 = vld [vmem:[#allocation4 + $0x68] sm:$0xff]
    %v1778 = vld [vmem:[#allocation4 + $0x70] sm:$0xff]
    %v1779 = vld [vmem:[#allocation4 + $0x78] sm:$0xff]
    %s1780 = sld [smem:[#allocation12 + $0x3]]
    %v1781 = vstv %s1780
    %v1782 = vmul.f32 %v1781, %v1616
    %v1783 = vmul.f32 %v1781, %v1617
    %v1784 = vmul.f32 %v1781, %v1618
    %v1785 = vmul.f32 %v1781, %v1619
    %v1786 = vmul.f32 %v1781, %v1620
    %v1787 = vmul.f32 %v1781, %v1621
    %v1788 = vmul.f32 %v1781, %v1622
    %v1789 = vmul.f32 %v1781, %v1623
    %v1790 = vmul.f32 %v1781, %v1624
    %v1791 = vmul.f32 %v1781, %v1625
    %v1792 = vmul.f32 %v1781, %v1626
    %v1793 = vmul.f32 %v1781, %v1627
    %v1794 = vmul.f32 %v1781, %v1628
    %v1795 = vmul.f32 %v1781, %v1629
    %v1796 = vmul.f32 %v1781, %v1630
    %v1797 = vmul.f32 %v1781, %v1631
    %v1798 = vadd.f32 %v1764, %v1782
    %v1799 = vadd.f32 %v1765, %v1783
    %v1800 = vadd.f32 %v1766, %v1784
    %v1801 = vadd.f32 %v1767, %v1785
    %v1802 = vadd.f32 %v1768, %v1786
    %v1803 = vadd.f32 %v1769, %v1787
    %v1804 = vadd.f32 %v1770, %v1788
    %v1805 = vadd.f32 %v1771, %v1789
    %v1806 = vadd.f32 %v1772, %v1790
    %v1807 = vadd.f32 %v1773, %v1791
    %v1808 = vadd.f32 %v1774, %v1792
    %v1809 = vadd.f32 %v1775, %v1793
    %v1810 = vadd.f32 %v1776, %v1794
    %v1811 = vadd.f32 %v1777, %v1795
    %v1812 = vadd.f32 %v1778, %v1796
    %v1813 = vadd.f32 %v1779, %v1797
    %1814 = vst [vmem:[#allocation4] sm:$0xff] %v1798
    %1815 = vst [vmem:[#allocation4 + $0x8] sm:$0xff] %v1799
    %1816 = vst [vmem:[#allocation4 + $0x10] sm:$0xff] %v1800
    %1817 = vst [vmem:[#allocation4 + $0x18] sm:$0xff] %v1801
    %1818 = vst [vmem:[#allocation4 + $0x20] sm:$0xff] %v1802
    %1819 = vst [vmem:[#allocation4 + $0x28] sm:$0xff] %v1803
    %1820 = vst [vmem:[#allocation4 + $0x30] sm:$0xff] %v1804
    %1821 = vst [vmem:[#allocation4 + $0x38] sm:$0xff] %v1805
    %1822 = vst [vmem:[#allocation4 + $0x40] sm:$0xff] %v1806
    %1823 = vst [vmem:[#allocation4 + $0x48] sm:$0xff] %v1807
    %1824 = vst [vmem:[#allocation4 + $0x50] sm:$0xff] %v1808
    %1825 = vst [vmem:[#allocation4 + $0x58] sm:$0xff] %v1809
    %1826 = vst [vmem:[#allocation4 + $0x60] sm:$0xff] %v1810
    %1827 = vst [vmem:[#allocation4 + $0x68] sm:$0xff] %v1811
    %1828 = vst [vmem:[#allocation4 + $0x70] sm:$0xff] %v1812
    %1829 = vst [vmem:[#allocation4 + $0x78] sm:$0xff] %v1813
    %v1830 = vld [vmem:[%s201] sm:$0xff]
    %v1831 = vld [vmem:[%s201 + $0x8] sm:$0xff]
    %v1832 = vld [vmem:[%s201 + $0x10] sm:$0xff]
    %v1833 = vld [vmem:[%s201 + $0x18] sm:$0xff]
    %v1834 = vld [vmem:[%s201 + $0x20] sm:$0xff]
    %v1835 = vld [vmem:[%s201 + $0x28] sm:$0xff]
    %v1836 = vld [vmem:[%s201 + $0x30] sm:$0xff]
    %v1837 = vld [vmem:[%s201 + $0x38] sm:$0xff]
    %v1838 = vld [vmem:[%s201 + $0x40] sm:$0xff]
    %v1839 = vld [vmem:[%s201 + $0x48] sm:$0xff]
    %v1840 = vld [vmem:[%s201 + $0x50] sm:$0xff]
    %v1841 = vld [vmem:[%s201 + $0x58] sm:$0xff]
    %v1842 = vld [vmem:[%s201 + $0x60] sm:$0xff]
    %v1843 = vld [vmem:[%s201 + $0x68] sm:$0xff]
    %v1844 = vld [vmem:[%s201 + $0x70] sm:$0xff]
    %v1845 = vld [vmem:[%s201 + $0x78] sm:$0xff]
    %s1846 = sld [smem:[#allocation5 + $0x83]]
    %v1847 = vstv %s1846
    %v1848 = vmul.f32 %v1847, %v1616
    %v1849 = vmul.f32 %v1847, %v1617
    %v1850 = vmul.f32 %v1847, %v1618
    %v1851 = vmul.f32 %v1847, %v1619
    %v1852 = vmul.f32 %v1847, %v1620
    %v1853 = vmul.f32 %v1847, %v1621
    %v1854 = vmul.f32 %v1847, %v1622
    %v1855 = vmul.f32 %v1847, %v1623
    %v1856 = vmul.f32 %v1847, %v1624
    %v1857 = vmul.f32 %v1847, %v1625
    %v1858 = vmul.f32 %v1847, %v1626
    %v1859 = vmul.f32 %v1847, %v1627
    %v1860 = vmul.f32 %v1847, %v1628
    %v1861 = vmul.f32 %v1847, %v1629
    %v1862 = vmul.f32 %v1847, %v1630
    %v1863 = vmul.f32 %v1847, %v1631
    %v1864 = vadd.f32 %v1830, %v1848
    %v1865 = vadd.f32 %v1831, %v1849
    %v1866 = vadd.f32 %v1832, %v1850
    %v1867 = vadd.f32 %v1833, %v1851
    %v1868 = vadd.f32 %v1834, %v1852
    %v1869 = vadd.f32 %v1835, %v1853
    %v1870 = vadd.f32 %v1836, %v1854
    %v1871 = vadd.f32 %v1837, %v1855
    %v1872 = vadd.f32 %v1838, %v1856
    %v1873 = vadd.f32 %v1839, %v1857
    %v1874 = vadd.f32 %v1840, %v1858
    %v1875 = vadd.f32 %v1841, %v1859
    %v1876 = vadd.f32 %v1842, %v1860
    %v1877 = vadd.f32 %v1843, %v1861
    %v1878 = vadd.f32 %v1844, %v1862
    %v1879 = vadd.f32 %v1845, %v1863
    %1880 = vst [vmem:[%s201] sm:$0xff] %v1864
    %1881 = vst [vmem:[%s201 + $0x8] sm:$0xff] %v1865
    %1882 = vst [vmem:[%s201 + $0x10] sm:$0xff] %v1866
    %1883 = vst [vmem:[%s201 + $0x18] sm:$0xff] %v1867
    %1884 = vst [vmem:[%s201 + $0x20] sm:$0xff] %v1868
    %1885 = vst [vmem:[%s201 + $0x28] sm:$0xff] %v1869
    %1886 = vst [vmem:[%s201 + $0x30] sm:$0xff] %v1870
    %1887 = vst [vmem:[%s201 + $0x38] sm:$0xff] %v1871
    %1888 = vst [vmem:[%s201 + $0x40] sm:$0xff] %v1872
    %1889 = vst [vmem:[%s201 + $0x48] sm:$0xff] %v1873
    %1890 = vst [vmem:[%s201 + $0x50] sm:$0xff] %v1874
    %1891 = vst [vmem:[%s201 + $0x58] sm:$0xff] %v1875
    %1892 = vst [vmem:[%s201 + $0x60] sm:$0xff] %v1876
    %1893 = vst [vmem:[%s201 + $0x68] sm:$0xff] %v1877
    %1894 = vst [vmem:[%s201 + $0x70] sm:$0xff] %v1878
    %1895 = vst [vmem:[%s201 + $0x78] sm:$0xff] %v1879
    %v1896 = vld [vmem:[%s236] sm:$0xff]
    %v1897 = vld [vmem:[%s236 + $0x8] sm:$0xff]
    %v1898 = vld [vmem:[%s236 + $0x10] sm:$0xff]
    %v1899 = vld [vmem:[%s236 + $0x18] sm:$0xff]
    %v1900 = vld [vmem:[%s236 + $0x20] sm:$0xff]
    %v1901 = vld [vmem:[%s236 + $0x28] sm:$0xff]
    %v1902 = vld [vmem:[%s236 + $0x30] sm:$0xff]
    %v1903 = vld [vmem:[%s236 + $0x38] sm:$0xff]
    %v1904 = vld [vmem:[%s236 + $0x40] sm:$0xff]
    %v1905 = vld [vmem:[%s236 + $0x48] sm:$0xff]
    %v1906 = vld [vmem:[%s236 + $0x50] sm:$0xff]
    %v1907 = vld [vmem:[%s236 + $0x58] sm:$0xff]
    %v1908 = vld [vmem:[%s236 + $0x60] sm:$0xff]
    %v1909 = vld [vmem:[%s236 + $0x68] sm:$0xff]
    %v1910 = vld [vmem:[%s236 + $0x70] sm:$0xff]
    %v1911 = vld [vmem:[%s236 + $0x78] sm:$0xff]
    %s1912 = sld [smem:[#allocation10 + $0x83]]
    %v1913 = vstv %s1912
    %v1914 = vmul.f32 %v1913, %v1616
    %v1915 = vmul.f32 %v1913, %v1617
    %v1916 = vmul.f32 %v1913, %v1618
    %v1917 = vmul.f32 %v1913, %v1619
    %v1918 = vmul.f32 %v1913, %v1620
    %v1919 = vmul.f32 %v1913, %v1621
    %v1920 = vmul.f32 %v1913, %v1622
    %v1921 = vmul.f32 %v1913, %v1623
    %v1922 = vmul.f32 %v1913, %v1624
    %v1923 = vmul.f32 %v1913, %v1625
    %v1924 = vmul.f32 %v1913, %v1626
    %v1925 = vmul.f32 %v1913, %v1627
    %v1926 = vmul.f32 %v1913, %v1628
    %v1927 = vmul.f32 %v1913, %v1629
    %v1928 = vmul.f32 %v1913, %v1630
    %v1929 = vmul.f32 %v1913, %v1631
    %v1930 = vadd.f32 %v1896, %v1914
    %v1931 = vadd.f32 %v1897, %v1915
    %v1932 = vadd.f32 %v1898, %v1916
    %v1933 = vadd.f32 %v1899, %v1917
    %v1934 = vadd.f32 %v1900, %v1918
    %v1935 = vadd.f32 %v1901, %v1919
    %v1936 = vadd.f32 %v1902, %v1920
    %v1937 = vadd.f32 %v1903, %v1921
    %v1938 = vadd.f32 %v1904, %v1922
    %v1939 = vadd.f32 %v1905, %v1923
    %v1940 = vadd.f32 %v1906, %v1924
    %v1941 = vadd.f32 %v1907, %v1925
    %v1942 = vadd.f32 %v1908, %v1926
    %v1943 = vadd.f32 %v1909, %v1927
    %v1944 = vadd.f32 %v1910, %v1928
    %v1945 = vadd.f32 %v1911, %v1929
    %1946 = vst [vmem:[%s236] sm:$0xff] %v1930
    %1947 = vst [vmem:[%s236 + $0x8] sm:$0xff] %v1931
    %1948 = vst [vmem:[%s236 + $0x10] sm:$0xff] %v1932
    %1949 = vst [vmem:[%s236 + $0x18] sm:$0xff] %v1933
    %1950 = vst [vmem:[%s236 + $0x20] sm:$0xff] %v1934
    %1951 = vst [vmem:[%s236 + $0x28] sm:$0xff] %v1935
    %1952 = vst [vmem:[%s236 + $0x30] sm:$0xff] %v1936
    %1953 = vst [vmem:[%s236 + $0x38] sm:$0xff] %v1937
    %1954 = vst [vmem:[%s236 + $0x40] sm:$0xff] %v1938
    %1955 = vst [vmem:[%s236 + $0x48] sm:$0xff] %v1939
    %1956 = vst [vmem:[%s236 + $0x50] sm:$0xff] %v1940
    %1957 = vst [vmem:[%s236 + $0x58] sm:$0xff] %v1941
    %1958 = vst [vmem:[%s236 + $0x60] sm:$0xff] %v1942
    %1959 = vst [vmem:[%s236 + $0x68] sm:$0xff] %v1943
    %1960 = vst [vmem:[%s236 + $0x70] sm:$0xff] %v1944
    %1961 = vst [vmem:[%s236 + $0x78] sm:$0xff] %v1945
    %v1962 = vld [vmem:[%s271] sm:$0xff]
    %v1963 = vld [vmem:[%s271 + $0x8] sm:$0xff]
    %v1964 = vld [vmem:[%s271 + $0x10] sm:$0xff]
    %v1965 = vld [vmem:[%s271 + $0x18] sm:$0xff]
    %v1966 = vld [vmem:[%s271 + $0x20] sm:$0xff]
    %v1967 = vld [vmem:[%s271 + $0x28] sm:$0xff]
    %v1968 = vld [vmem:[%s271 + $0x30] sm:$0xff]
    %v1969 = vld [vmem:[%s271 + $0x38] sm:$0xff]
    %v1970 = vld [vmem:[%s271 + $0x40] sm:$0xff]
    %v1971 = vld [vmem:[%s271 + $0x48] sm:$0xff]
    %v1972 = vld [vmem:[%s271 + $0x50] sm:$0xff]
    %v1973 = vld [vmem:[%s271 + $0x58] sm:$0xff]
    %v1974 = vld [vmem:[%s271 + $0x60] sm:$0xff]
    %v1975 = vld [vmem:[%s271 + $0x68] sm:$0xff]
    %v1976 = vld [vmem:[%s271 + $0x70] sm:$0xff]
    %v1977 = vld [vmem:[%s271 + $0x78] sm:$0xff]
    %s1978 = sld [smem:[#allocation12 + $0x83]]
    %v1979 = vstv %s1978
    %v1980 = vmul.f32 %v1979, %v1616
    %v1981 = vmul.f32 %v1979, %v1617
    %v1982 = vmul.f32 %v1979, %v1618
    %v1983 = vmul.f32 %v1979, %v1619
    %v1984 = vmul.f32 %v1979, %v1620
    %v1985 = vmul.f32 %v1979, %v1621
    %v1986 = vmul.f32 %v1979, %v1622
    %v1987 = vmul.f32 %v1979, %v1623
    %v1988 = vmul.f32 %v1979, %v1624
    %v1989 = vmul.f32 %v1979, %v1625
    %v1990 = vmul.f32 %v1979, %v1626
    %v1991 = vmul.f32 %v1979, %v1627
    %v1992 = vmul.f32 %v1979, %v1628
    %v1993 = vmul.f32 %v1979, %v1629
    %v1994 = vmul.f32 %v1979, %v1630
    %v1995 = vmul.f32 %v1979, %v1631
    %v1996 = vadd.f32 %v1962, %v1980
    %v1997 = vadd.f32 %v1963, %v1981
    %v1998 = vadd.f32 %v1964, %v1982
    %v1999 = vadd.f32 %v1965, %v1983
    %v2000 = vadd.f32 %v1966, %v1984
    %v2001 = vadd.f32 %v1967, %v1985
    %v2002 = vadd.f32 %v1968, %v1986
    %v2003 = vadd.f32 %v1969, %v1987
    %v2004 = vadd.f32 %v1970, %v1988
    %v2005 = vadd.f32 %v1971, %v1989
    %v2006 = vadd.f32 %v1972, %v1990
    %v2007 = vadd.f32 %v1973, %v1991
    %v2008 = vadd.f32 %v1974, %v1992
    %v2009 = vadd.f32 %v1975, %v1993
    %v2010 = vadd.f32 %v1976, %v1994
    %v2011 = vadd.f32 %v1977, %v1995
    %2012 = vst [vmem:[%s271] sm:$0xff] %v1996
    %2013 = vst [vmem:[%s271 + $0x8] sm:$0xff] %v1997
    %2014 = vst [vmem:[%s271 + $0x10] sm:$0xff] %v1998
    %2015 = vst [vmem:[%s271 + $0x18] sm:$0xff] %v1999
    %2016 = vst [vmem:[%s271 + $0x20] sm:$0xff] %v2000
    %2017 = vst [vmem:[%s271 + $0x28] sm:$0xff] %v2001
    %2018 = vst [vmem:[%s271 + $0x30] sm:$0xff] %v2002
    %2019 = vst [vmem:[%s271 + $0x38] sm:$0xff] %v2003
    %2020 = vst [vmem:[%s271 + $0x40] sm:$0xff] %v2004
    %2021 = vst [vmem:[%s271 + $0x48] sm:$0xff] %v2005
    %2022 = vst [vmem:[%s271 + $0x50] sm:$0xff] %v2006
    %2023 = vst [vmem:[%s271 + $0x58] sm:$0xff] %v2007
    %2024 = vst [vmem:[%s271 + $0x60] sm:$0xff] %v2008
    %2025 = vst [vmem:[%s271 + $0x68] sm:$0xff] %v2009
    %2026 = vst [vmem:[%s271 + $0x70] sm:$0xff] %v2010
    %2027 = vst [vmem:[%s271 + $0x78] sm:$0xff] %v2011
    %v2028 = vld [vmem:[%s306] sm:$0xff]
    %v2029 = vld [vmem:[%s306 + $0x8] sm:$0xff]
    %v2030 = vld [vmem:[%s306 + $0x10] sm:$0xff]
    %v2031 = vld [vmem:[%s306 + $0x18] sm:$0xff]
    %v2032 = vld [vmem:[%s306 + $0x20] sm:$0xff]
    %v2033 = vld [vmem:[%s306 + $0x28] sm:$0xff]
    %v2034 = vld [vmem:[%s306 + $0x30] sm:$0xff]
    %v2035 = vld [vmem:[%s306 + $0x38] sm:$0xff]
    %v2036 = vld [vmem:[%s306 + $0x40] sm:$0xff]
    %v2037 = vld [vmem:[%s306 + $0x48] sm:$0xff]
    %v2038 = vld [vmem:[%s306 + $0x50] sm:$0xff]
    %v2039 = vld [vmem:[%s306 + $0x58] sm:$0xff]
    %v2040 = vld [vmem:[%s306 + $0x60] sm:$0xff]
    %v2041 = vld [vmem:[%s306 + $0x68] sm:$0xff]
    %v2042 = vld [vmem:[%s306 + $0x70] sm:$0xff]
    %v2043 = vld [vmem:[%s306 + $0x78] sm:$0xff]
    %s2044 = sld [smem:[#allocation5 + $0x103]]
    %v2045 = vstv %s2044
    %v2046 = vmul.f32 %v2045, %v1616
    %v2047 = vmul.f32 %v2045, %v1617
    %v2048 = vmul.f32 %v2045, %v1618
    %v2049 = vmul.f32 %v2045, %v1619
    %v2050 = vmul.f32 %v2045, %v1620
    %v2051 = vmul.f32 %v2045, %v1621
    %v2052 = vmul.f32 %v2045, %v1622
    %v2053 = vmul.f32 %v2045, %v1623
    %v2054 = vmul.f32 %v2045, %v1624
    %v2055 = vmul.f32 %v2045, %v1625
    %v2056 = vmul.f32 %v2045, %v1626
    %v2057 = vmul.f32 %v2045, %v1627
    %v2058 = vmul.f32 %v2045, %v1628
    %v2059 = vmul.f32 %v2045, %v1629
    %v2060 = vmul.f32 %v2045, %v1630
    %v2061 = vmul.f32 %v2045, %v1631
    %v2062 = vadd.f32 %v2028, %v2046
    %v2063 = vadd.f32 %v2029, %v2047
    %v2064 = vadd.f32 %v2030, %v2048
    %v2065 = vadd.f32 %v2031, %v2049
    %v2066 = vadd.f32 %v2032, %v2050
    %v2067 = vadd.f32 %v2033, %v2051
    %v2068 = vadd.f32 %v2034, %v2052
    %v2069 = vadd.f32 %v2035, %v2053
    %v2070 = vadd.f32 %v2036, %v2054
    %v2071 = vadd.f32 %v2037, %v2055
    %v2072 = vadd.f32 %v2038, %v2056
    %v2073 = vadd.f32 %v2039, %v2057
    %v2074 = vadd.f32 %v2040, %v2058
    %v2075 = vadd.f32 %v2041, %v2059
    %v2076 = vadd.f32 %v2042, %v2060
    %v2077 = vadd.f32 %v2043, %v2061
    %2078 = vst [vmem:[%s306] sm:$0xff] %v2062
    %2079 = vst [vmem:[%s306 + $0x8] sm:$0xff] %v2063
    %2080 = vst [vmem:[%s306 + $0x10] sm:$0xff] %v2064
    %2081 = vst [vmem:[%s306 + $0x18] sm:$0xff] %v2065
    %2082 = vst [vmem:[%s306 + $0x20] sm:$0xff] %v2066
    %2083 = vst [vmem:[%s306 + $0x28] sm:$0xff] %v2067
    %2084 = vst [vmem:[%s306 + $0x30] sm:$0xff] %v2068
    %2085 = vst [vmem:[%s306 + $0x38] sm:$0xff] %v2069
    %2086 = vst [vmem:[%s306 + $0x40] sm:$0xff] %v2070
    %2087 = vst [vmem:[%s306 + $0x48] sm:$0xff] %v2071
    %2088 = vst [vmem:[%s306 + $0x50] sm:$0xff] %v2072
    %2089 = vst [vmem:[%s306 + $0x58] sm:$0xff] %v2073
    %2090 = vst [vmem:[%s306 + $0x60] sm:$0xff] %v2074
    %2091 = vst [vmem:[%s306 + $0x68] sm:$0xff] %v2075
    %2092 = vst [vmem:[%s306 + $0x70] sm:$0xff] %v2076
    %2093 = vst [vmem:[%s306 + $0x78] sm:$0xff] %v2077
    %v2094 = vld [vmem:[%s341] sm:$0xff]
    %v2095 = vld [vmem:[%s341 + $0x8] sm:$0xff]
    %v2096 = vld [vmem:[%s341 + $0x10] sm:$0xff]
    %v2097 = vld [vmem:[%s341 + $0x18] sm:$0xff]
    %v2098 = vld [vmem:[%s341 + $0x20] sm:$0xff]
    %v2099 = vld [vmem:[%s341 + $0x28] sm:$0xff]
    %v2100 = vld [vmem:[%s341 + $0x30] sm:$0xff]
    %v2101 = vld [vmem:[%s341 + $0x38] sm:$0xff]
    %v2102 = vld [vmem:[%s341 + $0x40] sm:$0xff]
    %v2103 = vld [vmem:[%s341 + $0x48] sm:$0xff]
    %v2104 = vld [vmem:[%s341 + $0x50] sm:$0xff]
    %v2105 = vld [vmem:[%s341 + $0x58] sm:$0xff]
    %v2106 = vld [vmem:[%s341 + $0x60] sm:$0xff]
    %v2107 = vld [vmem:[%s341 + $0x68] sm:$0xff]
    %v2108 = vld [vmem:[%s341 + $0x70] sm:$0xff]
    %v2109 = vld [vmem:[%s341 + $0x78] sm:$0xff]
    %s2110 = sld [smem:[#allocation10 + $0x103]]
    %v2111 = vstv %s2110
    %v2112 = vmul.f32 %v2111, %v1616
    %v2113 = vmul.f32 %v2111, %v1617
    %v2114 = vmul.f32 %v2111, %v1618
    %v2115 = vmul.f32 %v2111, %v1619
    %v2116 = vmul.f32 %v2111, %v1620
    %v2117 = vmul.f32 %v2111, %v1621
    %v2118 = vmul.f32 %v2111, %v1622
    %v2119 = vmul.f32 %v2111, %v1623
    %v2120 = vmul.f32 %v2111, %v1624
    %v2121 = vmul.f32 %v2111, %v1625
    %v2122 = vmul.f32 %v2111, %v1626
    %v2123 = vmul.f32 %v2111, %v1627
    %v2124 = vmul.f32 %v2111, %v1628
    %v2125 = vmul.f32 %v2111, %v1629
    %v2126 = vmul.f32 %v2111, %v1630
    %v2127 = vmul.f32 %v2111, %v1631
    %v2128 = vadd.f32 %v2094, %v2112
    %v2129 = vadd.f32 %v2095, %v2113
    %v2130 = vadd.f32 %v2096, %v2114
    %v2131 = vadd.f32 %v2097, %v2115
    %v2132 = vadd.f32 %v2098, %v2116
    %v2133 = vadd.f32 %v2099, %v2117
    %v2134 = vadd.f32 %v2100, %v2118
    %v2135 = vadd.f32 %v2101, %v2119
    %v2136 = vadd.f32 %v2102, %v2120
    %v2137 = vadd.f32 %v2103, %v2121
    %v2138 = vadd.f32 %v2104, %v2122
    %v2139 = vadd.f32 %v2105, %v2123
    %v2140 = vadd.f32 %v2106, %v2124
    %v2141 = vadd.f32 %v2107, %v2125
    %v2142 = vadd.f32 %v2108, %v2126
    %v2143 = vadd.f32 %v2109, %v2127
    %2144 = vst [vmem:[%s341] sm:$0xff] %v2128
    %2145 = vst [vmem:[%s341 + $0x8] sm:$0xff] %v2129
    %2146 = vst [vmem:[%s341 + $0x10] sm:$0xff] %v2130
    %2147 = vst [vmem:[%s341 + $0x18] sm:$0xff] %v2131
    %2148 = vst [vmem:[%s341 + $0x20] sm:$0xff] %v2132
    %2149 = vst [vmem:[%s341 + $0x28] sm:$0xff] %v2133
    %2150 = vst [vmem:[%s341 + $0x30] sm:$0xff] %v2134
    %2151 = vst [vmem:[%s341 + $0x38] sm:$0xff] %v2135
    %2152 = vst [vmem:[%s341 + $0x40] sm:$0xff] %v2136
    %2153 = vst [vmem:[%s341 + $0x48] sm:$0xff] %v2137
    %2154 = vst [vmem:[%s341 + $0x50] sm:$0xff] %v2138
    %2155 = vst [vmem:[%s341 + $0x58] sm:$0xff] %v2139
    %2156 = vst [vmem:[%s341 + $0x60] sm:$0xff] %v2140
    %2157 = vst [vmem:[%s341 + $0x68] sm:$0xff] %v2141
    %2158 = vst [vmem:[%s341 + $0x70] sm:$0xff] %v2142
    %2159 = vst [vmem:[%s341 + $0x78] sm:$0xff] %v2143
    %v2160 = vld [vmem:[%s376] sm:$0xff]
    %v2161 = vld [vmem:[%s376 + $0x8] sm:$0xff]
    %v2162 = vld [vmem:[%s376 + $0x10] sm:$0xff]
    %v2163 = vld [vmem:[%s376 + $0x18] sm:$0xff]
    %v2164 = vld [vmem:[%s376 + $0x20] sm:$0xff]
    %v2165 = vld [vmem:[%s376 + $0x28] sm:$0xff]
    %v2166 = vld [vmem:[%s376 + $0x30] sm:$0xff]
    %v2167 = vld [vmem:[%s376 + $0x38] sm:$0xff]
    %v2168 = vld [vmem:[%s376 + $0x40] sm:$0xff]
    %v2169 = vld [vmem:[%s376 + $0x48] sm:$0xff]
    %v2170 = vld [vmem:[%s376 + $0x50] sm:$0xff]
    %v2171 = vld [vmem:[%s376 + $0x58] sm:$0xff]
    %v2172 = vld [vmem:[%s376 + $0x60] sm:$0xff]
    %v2173 = vld [vmem:[%s376 + $0x68] sm:$0xff]
    %v2174 = vld [vmem:[%s376 + $0x70] sm:$0xff]
    %v2175 = vld [vmem:[%s376 + $0x78] sm:$0xff]
    %s2176 = sld [smem:[#allocation12 + $0x103]]
    %v2177 = vstv %s2176
    %v2178 = vmul.f32 %v2177, %v1616
    %v2179 = vmul.f32 %v2177, %v1617
    %v2180 = vmul.f32 %v2177, %v1618
    %v2181 = vmul.f32 %v2177, %v1619
    %v2182 = vmul.f32 %v2177, %v1620
    %v2183 = vmul.f32 %v2177, %v1621
    %v2184 = vmul.f32 %v2177, %v1622
    %v2185 = vmul.f32 %v2177, %v1623
    %v2186 = vmul.f32 %v2177, %v1624
    %v2187 = vmul.f32 %v2177, %v1625
    %v2188 = vmul.f32 %v2177, %v1626
    %v2189 = vmul.f32 %v2177, %v1627
    %v2190 = vmul.f32 %v2177, %v1628
    %v2191 = vmul.f32 %v2177, %v1629
    %v2192 = vmul.f32 %v2177, %v1630
    %v2193 = vmul.f32 %v2177, %v1631
    %v2194 = vadd.f32 %v2160, %v2178
    %v2195 = vadd.f32 %v2161, %v2179
    %v2196 = vadd.f32 %v2162, %v2180
    %v2197 = vadd.f32 %v2163, %v2181
    %v2198 = vadd.f32 %v2164, %v2182
    %v2199 = vadd.f32 %v2165, %v2183
    %v2200 = vadd.f32 %v2166, %v2184
    %v2201 = vadd.f32 %v2167, %v2185
    %v2202 = vadd.f32 %v2168, %v2186
    %v2203 = vadd.f32 %v2169, %v2187
    %v2204 = vadd.f32 %v2170, %v2188
    %v2205 = vadd.f32 %v2171, %v2189
    %v2206 = vadd.f32 %v2172, %v2190
    %v2207 = vadd.f32 %v2173, %v2191
    %v2208 = vadd.f32 %v2174, %v2192
    %v2209 = vadd.f32 %v2175, %v2193
    %2210 = vst [vmem:[%s376] sm:$0xff] %v2194
    %2211 = vst [vmem:[%s376 + $0x8] sm:$0xff] %v2195
    %2212 = vst [vmem:[%s376 + $0x10] sm:$0xff] %v2196
    %2213 = vst [vmem:[%s376 + $0x18] sm:$0xff] %v2197
    %2214 = vst [vmem:[%s376 + $0x20] sm:$0xff] %v2198
    %2215 = vst [vmem:[%s376 + $0x28] sm:$0xff] %v2199
    %2216 = vst [vmem:[%s376 + $0x30] sm:$0xff] %v2200
    %2217 = vst [vmem:[%s376 + $0x38] sm:$0xff] %v2201
    %2218 = vst [vmem:[%s376 + $0x40] sm:$0xff] %v2202
    %2219 = vst [vmem:[%s376 + $0x48] sm:$0xff] %v2203
    %2220 = vst [vmem:[%s376 + $0x50] sm:$0xff] %v2204
    %2221 = vst [vmem:[%s376 + $0x58] sm:$0xff] %v2205
    %2222 = vst [vmem:[%s376 + $0x60] sm:$0xff] %v2206
    %2223 = vst [vmem:[%s376 + $0x68] sm:$0xff] %v2207
    %2224 = vst [vmem:[%s376 + $0x70] sm:$0xff] %v2208
    %2225 = vst [vmem:[%s376 + $0x78] sm:$0xff] %v2209
    %v2226 = vld [vmem:[#allocation2] sm:$0xff]
    %v2227 = vld [vmem:[#allocation2 + $0x8] sm:$0xff]
    %v2228 = vld [vmem:[#allocation2 + $0x10] sm:$0xff]
    %v2229 = vld [vmem:[#allocation2 + $0x18] sm:$0xff]
    %v2230 = vld [vmem:[#allocation2 + $0x20] sm:$0xff]
    %v2231 = vld [vmem:[#allocation2 + $0x28] sm:$0xff]
    %v2232 = vld [vmem:[#allocation2 + $0x30] sm:$0xff]
    %v2233 = vld [vmem:[#allocation2 + $0x38] sm:$0xff]
    %v2234 = vld [vmem:[#allocation2 + $0x40] sm:$0xff]
    %v2235 = vld [vmem:[#allocation2 + $0x48] sm:$0xff]
    %v2236 = vld [vmem:[#allocation2 + $0x50] sm:$0xff]
    %v2237 = vld [vmem:[#allocation2 + $0x58] sm:$0xff]
    %v2238 = vld [vmem:[#allocation2 + $0x60] sm:$0xff]
    %v2239 = vld [vmem:[#allocation2 + $0x68] sm:$0xff]
    %v2240 = vld [vmem:[#allocation2 + $0x70] sm:$0xff]
    %v2241 = vld [vmem:[#allocation2 + $0x78] sm:$0xff]
    %v2242 = vld [vmem:[#allocation3] sm:$0xff]
    %v2243 = vld [vmem:[#allocation3 + $0x8] sm:$0xff]
    %v2244 = vld [vmem:[#allocation3 + $0x10] sm:$0xff]
    %v2245 = vld [vmem:[#allocation3 + $0x18] sm:$0xff]
    %v2246 = vld [vmem:[#allocation3 + $0x20] sm:$0xff]
    %v2247 = vld [vmem:[#allocation3 + $0x28] sm:$0xff]
    %v2248 = vld [vmem:[#allocation3 + $0x30] sm:$0xff]
    %v2249 = vld [vmem:[#allocation3 + $0x38] sm:$0xff]
    %v2250 = vld [vmem:[#allocation3 + $0x40] sm:$0xff]
    %v2251 = vld [vmem:[#allocation3 + $0x48] sm:$0xff]
    %v2252 = vld [vmem:[#allocation3 + $0x50] sm:$0xff]
    %v2253 = vld [vmem:[#allocation3 + $0x58] sm:$0xff]
    %v2254 = vld [vmem:[#allocation3 + $0x60] sm:$0xff]
    %v2255 = vld [vmem:[#allocation3 + $0x68] sm:$0xff]
    %v2256 = vld [vmem:[#allocation3 + $0x70] sm:$0xff]
    %v2257 = vld [vmem:[#allocation3 + $0x78] sm:$0xff]
    %2258 = vmatprep.subr.mxu0 0.0
    %2259 = vmatpush1.msra.mxu0 %v2242
    %2260 = vmatprep.subr.mxu0 0.0
    %2261 = vmatpush1.msra.mxu0 %v2243
    %2262 = vmatprep.subr.mxu0 0.0
    %2263 = vmatpush1.msra.mxu0 %v2244
    %2264 = vmatprep.subr.mxu0 0.0
    %2265 = vmatpush1.msra.mxu0 %v2245
    %2266 = vmatprep.subr.mxu0 0.0
    %2267 = vmatpush1.msra.mxu0 %v2246
    %2268 = vmatprep.subr.mxu0 0.0
    %2269 = vmatpush1.msra.mxu0 %v2247
    %2270 = vmatprep.subr.mxu0 0.0
    %2271 = vmatpush1.msra.mxu0 %v2248
    %2272 = vmatprep.subr.mxu0 0.0
    %2273 = vmatpush1.msra.mxu0 %v2249
    %2274 = vmatprep.subr.mxu0 0.0
    %2275 = vmatpush1.msra.mxu0 %v2250
    %2276 = vmatprep.subr.mxu0 0.0
    %2277 = vmatpush1.msra.mxu0 %v2251
    %2278 = vmatprep.subr.mxu0 0.0
    %2279 = vmatpush1.msra.mxu0 %v2252
    %2280 = vmatprep.subr.mxu0 0.0
    %2281 = vmatpush1.msra.mxu0 %v2253
    %2282 = vmatprep.subr.mxu0 0.0
    %2283 = vmatpush1.msra.mxu0 %v2254
    %2284 = vmatprep.subr.mxu0 0.0
    %2285 = vmatpush1.msra.mxu0 %v2255
    %2286 = vmatprep.subr.mxu0 0.0
    %2287 = vmatpush1.msra.mxu0 %v2256
    %2288 = vmatprep.subr.mxu0 0.0
    %2289 = vmatpush1.msra.mxu0 %v2257
    %2290 = vmatprep.subr.mxu0 0.0
    %2291 = vmatpush1.msra.mxu0 0.0
    %2292 = vmatprep.subr.mxu0 0.0
    %2293 = vmatpush1.msra.mxu0 0.0
    %2294 = vmatprep.subr.mxu0 0.0
    %2295 = vmatpush1.msra.mxu0 0.0
    %2296 = vmatprep.subr.mxu0 0.0
    %2297 = vmatpush1.msra.mxu0 0.0
    %2298 = vmatprep.subr.mxu0 0.0
    %2299 = vmatpush1.msra.mxu0 0.0
    %2300 = vmatprep.subr.mxu0 0.0
    %2301 = vmatpush1.msra.mxu0 0.0
    %2302 = vmatprep.subr.mxu0 0.0
    %2303 = vmatpush1.msra.mxu0 0.0
    %2304 = vmatprep.subr.mxu0 0.0
    %2305 = vmatpush1.msra.mxu0 0.0
    %2306 = vmatprep.subr.mxu0 0.0
    %2307 = vmatpush1.msra.mxu0 0.0
    %2308 = vmatprep.subr.mxu0 0.0
    %2309 = vmatpush1.msra.mxu0 0.0
    %2310 = vmatprep.subr.mxu0 0.0
    %2311 = vmatpush1.msra.mxu0 0.0
    %2312 = vmatprep.subr.mxu0 0.0
    %2313 = vmatpush1.msra.mxu0 0.0
    %2314 = vmatprep.subr.mxu0 0.0
    %2315 = vmatpush1.msra.mxu0 0.0
    %2316 = vmatprep.subr.mxu0 0.0
    %2317 = vmatpush1.msra.mxu0 0.0
    %2318 = vmatprep.subr.mxu0 0.0
    %2319 = vmatpush1.msra.mxu0 0.0
    %2320 = vmatprep.subr.mxu0 0.0
    %2321 = vmatpush1.msra.mxu0 0.0
    %2322 = vmatprep.mubr.f32.mxu0 0.0
    %2323 = vmatmul.mubr.f32.gmra.mrb[0].mxu0 %v2226
    %v2324 = vpop.f32.mrb[0].mxu0
    %v2325 = vadd.f32 0.0, %v2324
    %v2326 = vpop.f32.mrb[0].mxu0
    %2327 = vmatprep.mubr.f32.mxu0 0.0
    %2328 = vmatmul.mubr.f32.gmra.mrb[0].mxu0 %v2227
    %v2329 = vpop.f32.mrb[0].mxu0
    %v2330 = vadd.f32 0.0, %v2329
    %v2331 = vpop.f32.mrb[0].mxu0
    %2332 = vmatprep.mubr.f32.mxu0 0.0
    %2333 = vmatmul.mubr.f32.gmra.mrb[0].mxu0 %v2228
    %v2334 = vpop.f32.mrb[0].mxu0
    %v2335 = vadd.f32 0.0, %v2334
    %v2336 = vpop.f32.mrb[0].mxu0
    %2337 = vmatprep.mubr.f32.mxu0 0.0
    %2338 = vmatmul.mubr.f32.gmra.mrb[0].mxu0 %v2229
    %v2339 = vpop.f32.mrb[0].mxu0
    %v2340 = vadd.f32 0.0, %v2339
    %v2341 = vpop.f32.mrb[0].mxu0
    %2342 = vmatprep.mubr.f32.mxu0 0.0
    %2343 = vmatmul.mubr.f32.gmra.mrb[0].mxu0 %v2230
    %v2344 = vpop.f32.mrb[0].mxu0
    %v2345 = vadd.f32 0.0, %v2344
    %v2346 = vpop.f32.mrb[0].mxu0
    %2347 = vmatprep.mubr.f32.mxu0 0.0
    %2348 = vmatmul.mubr.f32.gmra.mrb[0].mxu0 %v2231
    %v2349 = vpop.f32.mrb[0].mxu0
    %v2350 = vadd.f32 0.0, %v2349
    %v2351 = vpop.f32.mrb[0].mxu0
    %2352 = vmatprep.mubr.f32.mxu0 0.0
    %2353 = vmatmul.mubr.f32.gmra.mrb[0].mxu0 %v2232
    %v2354 = vpop.f32.mrb[0].mxu0
    %v2355 = vadd.f32 0.0, %v2354
    %v2356 = vpop.f32.mrb[0].mxu0
    %2357 = vmatprep.mubr.f32.mxu0 0.0
    %2358 = vmatmul.mubr.f32.gmra.mrb[0].mxu0 %v2233
    %v2359 = vpop.f32.mrb[0].mxu0
    %v2360 = vadd.f32 0.0, %v2359
    %v2361 = vpop.f32.mrb[0].mxu0
    %2362 = vmatprep.mubr.f32.mxu0 0.0
    %2363 = vmatmul.mubr.f32.gmra.mrb[0].mxu0 %v2234
    %v2364 = vpop.f32.mrb[0].mxu0
    %v2365 = vadd.f32 0.0, %v2364
    %v2366 = vpop.f32.mrb[0].mxu0
    %2367 = vmatprep.mubr.f32.mxu0 0.0
    %2368 = vmatmul.mubr.f32.gmra.mrb[0].mxu0 %v2235
    %v2369 = vpop.f32.mrb[0].mxu0
    %v2370 = vadd.f32 0.0, %v2369
    %v2371 = vpop.f32.mrb[0].mxu0
    %2372 = vmatprep.mubr.f32.mxu0 0.0
    %2373 = vmatmul.mubr.f32.gmra.mrb[0].mxu0 %v2236
    %v2374 = vpop.f32.mrb[0].mxu0
    %v2375 = vadd.f32 0.0, %v2374
    %v2376 = vpop.f32.mrb[0].mxu0
    %2377 = vmatprep.mubr.f32.mxu0 0.0
    %2378 = vmatmul.mubr.f32.gmra.mrb[0].mxu0 %v2237
    %v2379 = vpop.f32.mrb[0].mxu0
    %v2380 = vadd.f32 0.0, %v2379
    %v2381 = vpop.f32.mrb[0].mxu0
    %2382 = vmatprep.mubr.f32.mxu0 0.0
    %2383 = vmatmul.mubr.f32.gmra.mrb[0].mxu0 %v2238
    %v2384 = vpop.f32.mrb[0].mxu0
    %v2385 = vadd.f32 0.0, %v2384
    %v2386 = vpop.f32.mrb[0].mxu0
    %2387 = vmatprep.mubr.f32.mxu0 0.0
    %2388 = vmatmul.mubr.f32.gmra.mrb[0].mxu0 %v2239
    %v2389 = vpop.f32.mrb[0].mxu0
    %v2390 = vadd.f32 0.0, %v2389
    %v2391 = vpop.f32.mrb[0].mxu0
    %2392 = vmatprep.mubr.f32.mxu0 0.0
    %2393 = vmatmul.mubr.f32.gmra.mrb[0].mxu0 %v2240
    %v2394 = vpop.f32.mrb[0].mxu0
    %v2395 = vadd.f32 0.0, %v2394
    %v2396 = vpop.f32.mrb[0].mxu0
    %2397 = vmatprep.mubr.f32.mxu0 0.0
    %2398 = vmatmul.mubr.f32.gmra.mrb[0].mxu0 %v2241
    %v2399 = vpop.f32.mrb[0].mxu0
    %v2400 = vadd.f32 0.0, %v2399
    %v2401 = vpop.f32.mrb[0].mxu0
    %2402 = vdwg.mxu0
    %v2403 = vld [vmem:[#allocation4] sm:$0xff]
    %v2404 = vld [vmem:[#allocation4 + $0x8] sm:$0xff]
    %v2405 = vld [vmem:[#allocation4 + $0x10] sm:$0xff]
    %v2406 = vld [vmem:[#allocation4 + $0x18] sm:$0xff]
    %v2407 = vld [vmem:[#allocation4 + $0x20] sm:$0xff]
    %v2408 = vld [vmem:[#allocation4 + $0x28] sm:$0xff]
    %v2409 = vld [vmem:[#allocation4 + $0x30] sm:$0xff]
    %v2410 = vld [vmem:[#allocation4 + $0x38] sm:$0xff]
    %v2411 = vld [vmem:[#allocation4 + $0x40] sm:$0xff]
    %v2412 = vld [vmem:[#allocation4 + $0x48] sm:$0xff]
    %v2413 = vld [vmem:[#allocation4 + $0x50] sm:$0xff]
    %v2414 = vld [vmem:[#allocation4 + $0x58] sm:$0xff]
    %v2415 = vld [vmem:[#allocation4 + $0x60] sm:$0xff]
    %v2416 = vld [vmem:[#allocation4 + $0x68] sm:$0xff]
    %v2417 = vld [vmem:[#allocation4 + $0x70] sm:$0xff]
    %v2418 = vld [vmem:[#allocation4 + $0x78] sm:$0xff]
    %2419 = vmatprep.subr.mxu0 0.0
    %2420 = vmatpush1.msra.mxu0 %v2403
    %2421 = vmatprep.subr.mxu0 0.0
    %2422 = vmatpush1.msra.mxu0 %v2404
    %2423 = vmatprep.subr.mxu0 0.0
    %2424 = vmatpush1.msra.mxu0 %v2405
    %2425 = vmatprep.subr.mxu0 0.0
    %2426 = vmatpush1.msra.mxu0 %v2406
    %2427 = vmatprep.subr.mxu0 0.0
    %2428 = vmatpush1.msra.mxu0 %v2407
    %2429 = vmatprep.subr.mxu0 0.0
    %2430 = vmatpush1.msra.mxu0 %v2408
    %2431 = vmatprep.subr.mxu0 0.0
    %2432 = vmatpush1.msra.mxu0 %v2409
    %2433 = vmatprep.subr.mxu0 0.0
    %2434 = vmatpush1.msra.mxu0 %v2410
    %2435 = vmatprep.subr.mxu0 0.0
    %2436 = vmatpush1.msra.mxu0 %v2411
    %2437 = vmatprep.subr.mxu0 0.0
    %2438 = vmatpush1.msra.mxu0 %v2412
    %2439 = vmatprep.subr.mxu0 0.0
    %2440 = vmatpush1.msra.mxu0 %v2413
    %2441 = vmatprep.subr.mxu0 0.0
    %2442 = vmatpush1.msra.mxu0 %v2414
    %2443 = vmatprep.subr.mxu0 0.0
    %2444 = vmatpush1.msra.mxu0 %v2415
    %2445 = vmatprep.subr.mxu0 0.0
    %2446 = vmatpush1.msra.mxu0 %v2416
    %2447 = vmatprep.subr.mxu0 0.0
    %2448 = vmatpush1.msra.mxu0 %v2417
    %2449 = vmatprep.subr.mxu0 0.0
    %2450 = vmatpush1.msra.mxu0 %v2418
    %2451 = vmatprep.subr.mxu0 0.0
    %2452 = vmatpush1.msra.mxu0 0.0
    %2453 = vmatprep.subr.mxu0 0.0
    %2454 = vmatpush1.msra.mxu0 0.0
    %2455 = vmatprep.subr.mxu0 0.0
    %2456 = vmatpush1.msra.mxu0 0.0
    %2457 = vmatprep.subr.mxu0 0.0
    %2458 = vmatpush1.msra.mxu0 0.0
    %2459 = vmatprep.subr.mxu0 0.0
    %2460 = vmatpush1.msra.mxu0 0.0
    %2461 = vmatprep.subr.mxu0 0.0
    %2462 = vmatpush1.msra.mxu0 0.0
    %2463 = vmatprep.subr.mxu0 0.0
    %2464 = vmatpush1.msra.mxu0 0.0
    %2465 = vmatprep.subr.mxu0 0.0
    %2466 = vmatpush1.msra.mxu0 0.0
    %2467 = vmatprep.subr.mxu0 0.0
    %2468 = vmatpush1.msra.mxu0 0.0
    %2469 = vmatprep.subr.mxu0 0.0
    %2470 = vmatpush1.msra.mxu0 0.0
    %2471 = vmatprep.subr.mxu0 0.0
    %2472 = vmatpush1.msra.mxu0 0.0
    %2473 = vmatprep.subr.mxu0 0.0
    %2474 = vmatpush1.msra.mxu0 0.0
    %2475 = vmatprep.subr.mxu0 0.0
    %2476 = vmatpush1.msra.mxu0 0.0
    %2477 = vmatprep.subr.mxu0 0.0
    %2478 = vmatpush1.msra.mxu0 0.0
    %2479 = vmatprep.subr.mxu0 0.0
    %2480 = vmatpush1.msra.mxu0 0.0
    %2481 = vmatprep.subr.mxu0 0.0
    %2482 = vmatpush1.msra.mxu0 0.0
    %2483 = vmatprep.mubr.f32.mxu0 0.0
    %2484 = vmatmul.mubr.f32.gmra.mrb[0].mxu0 %v2325
    %v2485 = vpop.f32.mrb[0].mxu0
    %v2486 = vadd.f32 0.0, %v2485
    %v2487 = vpop.f32.mrb[0].mxu0
    %2488 = vmatprep.mubr.f32.mxu0 0.0
    %2489 = vmatmul.mubr.f32.gmra.mrb[0].mxu0 %v2330
    %v2490 = vpop.f32.mrb[0].mxu0
    %v2491 = vadd.f32 0.0, %v2490
    %v2492 = vpop.f32.mrb[0].mxu0
    %2493 = vmatprep.mubr.f32.mxu0 0.0
    %2494 = vmatmul.mubr.f32.gmra.mrb[0].mxu0 %v2335
    %v2495 = vpop.f32.mrb[0].mxu0
    %v2496 = vadd.f32 0.0, %v2495
    %v2497 = vpop.f32.mrb[0].mxu0
    %2498 = vmatprep.mubr.f32.mxu0 0.0
    %2499 = vmatmul.mubr.f32.gmra.mrb[0].mxu0 %v2340
    %v2500 = vpop.f32.mrb[0].mxu0
    %v2501 = vadd.f32 0.0, %v2500
    %v2502 = vpop.f32.mrb[0].mxu0
    %2503 = vmatprep.mubr.f32.mxu0 0.0
    %2504 = vmatmul.mubr.f32.gmra.mrb[0].mxu0 %v2345
    %v2505 = vpop.f32.mrb[0].mxu0
    %v2506 = vadd.f32 0.0, %v2505
    %v2507 = vpop.f32.mrb[0].mxu0
    %2508 = vmatprep.mubr.f32.mxu0 0.0
    %2509 = vmatmul.mubr.f32.gmra.mrb[0].mxu0 %v2350
    %v2510 = vpop.f32.mrb[0].mxu0
    %v2511 = vadd.f32 0.0, %v2510
    %v2512 = vpop.f32.mrb[0].mxu0
    %2513 = vmatprep.mubr.f32.mxu0 0.0
    %2514 = vmatmul.mubr.f32.gmra.mrb[0].mxu0 %v2355
    %v2515 = vpop.f32.mrb[0].mxu0
    %v2516 = vadd.f32 0.0, %v2515
    %v2517 = vpop.f32.mrb[0].mxu0
    %2518 = vmatprep.mubr.f32.mxu0 0.0
    %2519 = vmatmul.mubr.f32.gmra.mrb[0].mxu0 %v2360
    %v2520 = vpop.f32.mrb[0].mxu0
    %v2521 = vadd.f32 0.0, %v2520
    %v2522 = vpop.f32.mrb[0].mxu0
    %2523 = vmatprep.mubr.f32.mxu0 0.0
    %2524 = vmatmul.mubr.f32.gmra.mrb[0].mxu0 %v2365
    %v2525 = vpop.f32.mrb[0].mxu0
    %v2526 = vadd.f32 0.0, %v2525
    %v2527 = vpop.f32.mrb[0].mxu0
    %2528 = vmatprep.mubr.f32.mxu0 0.0
    %2529 = vmatmul.mubr.f32.gmra.mrb[0].mxu0 %v2370
    %v2530 = vpop.f32.mrb[0].mxu0
    %v2531 = vadd.f32 0.0, %v2530
    %v2532 = vpop.f32.mrb[0].mxu0
    %2533 = vmatprep.mubr.f32.mxu0 0.0
    %2534 = vmatmul.mubr.f32.gmra.mrb[0].mxu0 %v2375
    %v2535 = vpop.f32.mrb[0].mxu0
    %v2536 = vadd.f32 0.0, %v2535
    %v2537 = vpop.f32.mrb[0].mxu0
    %2538 = vmatprep.mubr.f32.mxu0 0.0
    %2539 = vmatmul.mubr.f32.gmra.mrb[0].mxu0 %v2380
    %v2540 = vpop.f32.mrb[0].mxu0
    %v2541 = vadd.f32 0.0, %v2540
    %v2542 = vpop.f32.mrb[0].mxu0
    %2543 = vmatprep.mubr.f32.mxu0 0.0
    %2544 = vmatmul.mubr.f32.gmra.mrb[0].mxu0 %v2385
    %v2545 = vpop.f32.mrb[0].mxu0
    %v2546 = vadd.f32 0.0, %v2545
    %v2547 = vpop.f32.mrb[0].mxu0
    %2548 = vmatprep.mubr.f32.mxu0 0.0
    %2549 = vmatmul.mubr.f32.gmra.mrb[0].mxu0 %v2390
    %v2550 = vpop.f32.mrb[0].mxu0
    %v2551 = vadd.f32 0.0, %v2550
    %v2552 = vpop.f32.mrb[0].mxu0
    %2553 = vmatprep.mubr.f32.mxu0 0.0
    %2554 = vmatmul.mubr.f32.gmra.mrb[0].mxu0 %v2395
    %v2555 = vpop.f32.mrb[0].mxu0
    %v2556 = vadd.f32 0.0, %v2555
    %v2557 = vpop.f32.mrb[0].mxu0
    %2558 = vmatprep.mubr.f32.mxu0 0.0
    %2559 = vmatmul.mubr.f32.gmra.mrb[0].mxu0 %v2400
    %v2560 = vpop.f32.mrb[0].mxu0
    %v2561 = vadd.f32 0.0, %v2560
    %v2562 = vpop.f32.mrb[0].mxu0
    %2563 = vdwg.mxu0
    %2564 = vst [vmem:[#allocation14] sm:$0xff] %v2486
    %2565 = vst [vmem:[#allocation14 + $0x8] sm:$0xff] %v2491
    %2566 = vst [vmem:[#allocation14 + $0x10] sm:$0xff] %v2496
    %2567 = vst [vmem:[#allocation14 + $0x18] sm:$0xff] %v2501
    %2568 = vst [vmem:[#allocation14 + $0x20] sm:$0xff] %v2506
    %2569 = vst [vmem:[#allocation14 + $0x28] sm:$0xff] %v2511
    %2570 = vst [vmem:[#allocation14 + $0x30] sm:$0xff] %v2516
    %2571 = vst [vmem:[#allocation14 + $0x38] sm:$0xff] %v2521
    %2572 = vst [vmem:[#allocation14 + $0x40] sm:$0xff] %v2526
    %2573 = vst [vmem:[#allocation14 + $0x48] sm:$0xff] %v2531
    %2574 = vst [vmem:[#allocation14 + $0x50] sm:$0xff] %v2536
    %2575 = vst [vmem:[#allocation14 + $0x58] sm:$0xff] %v2541
    %2576 = vst [vmem:[#allocation14 + $0x60] sm:$0xff] %v2546
    %2577 = vst [vmem:[#allocation14 + $0x68] sm:$0xff] %v2551
    %2578 = vst [vmem:[#allocation14 + $0x70] sm:$0xff] %v2556
    %2579 = vst [vmem:[#allocation14 + $0x78] sm:$0xff] %v2561
    %v2580 = vld [vmem:[%s201] sm:$0xff]
    %v2581 = vld [vmem:[%s201 + $0x8] sm:$0xff]
    %v2582 = vld [vmem:[%s201 + $0x10] sm:$0xff]
    %v2583 = vld [vmem:[%s201 + $0x18] sm:$0xff]
    %v2584 = vld [vmem:[%s201 + $0x20] sm:$0xff]
    %v2585 = vld [vmem:[%s201 + $0x28] sm:$0xff]
    %v2586 = vld [vmem:[%s201 + $0x30] sm:$0xff]
    %v2587 = vld [vmem:[%s201 + $0x38] sm:$0xff]
    %v2588 = vld [vmem:[%s201 + $0x40] sm:$0xff]
    %v2589 = vld [vmem:[%s201 + $0x48] sm:$0xff]
    %v2590 = vld [vmem:[%s201 + $0x50] sm:$0xff]
    %v2591 = vld [vmem:[%s201 + $0x58] sm:$0xff]
    %v2592 = vld [vmem:[%s201 + $0x60] sm:$0xff]
    %v2593 = vld [vmem:[%s201 + $0x68] sm:$0xff]
    %v2594 = vld [vmem:[%s201 + $0x70] sm:$0xff]
    %v2595 = vld [vmem:[%s201 + $0x78] sm:$0xff]
    %v2596 = vld [vmem:[%s236] sm:$0xff]
    %v2597 = vld [vmem:[%s236 + $0x8] sm:$0xff]
    %v2598 = vld [vmem:[%s236 + $0x10] sm:$0xff]
    %v2599 = vld [vmem:[%s236 + $0x18] sm:$0xff]
    %v2600 = vld [vmem:[%s236 + $0x20] sm:$0xff]
    %v2601 = vld [vmem:[%s236 + $0x28] sm:$0xff]
    %v2602 = vld [vmem:[%s236 + $0x30] sm:$0xff]
    %v2603 = vld [vmem:[%s236 + $0x38] sm:$0xff]
    %v2604 = vld [vmem:[%s236 + $0x40] sm:$0xff]
    %v2605 = vld [vmem:[%s236 + $0x48] sm:$0xff]
    %v2606 = vld [vmem:[%s236 + $0x50] sm:$0xff]
    %v2607 = vld [vmem:[%s236 + $0x58] sm:$0xff]
    %v2608 = vld [vmem:[%s236 + $0x60] sm:$0xff]
    %v2609 = vld [vmem:[%s236 + $0x68] sm:$0xff]
    %v2610 = vld [vmem:[%s236 + $0x70] sm:$0xff]
    %v2611 = vld [vmem:[%s236 + $0x78] sm:$0xff]
    %2612 = vmatprep.subr.mxu0 0.0
    %2613 = vmatpush1.msra.mxu0 %v2596
    %2614 = vmatprep.subr.mxu0 0.0
    %2615 = vmatpush1.msra.mxu0 %v2597
    %2616 = vmatprep.subr.mxu0 0.0
    %2617 = vmatpush1.msra.mxu0 %v2598
    %2618 = vmatprep.subr.mxu0 0.0
    %2619 = vmatpush1.msra.mxu0 %v2599
    %2620 = vmatprep.subr.mxu0 0.0
    %2621 = vmatpush1.msra.mxu0 %v2600
    %2622 = vmatprep.subr.mxu0 0.0
    %2623 = vmatpush1.msra.mxu0 %v2601
    %2624 = vmatprep.subr.mxu0 0.0
    %2625 = vmatpush1.msra.mxu0 %v2602
    %2626 = vmatprep.subr.mxu0 0.0
    %2627 = vmatpush1.msra.mxu0 %v2603
    %2628 = vmatprep.subr.mxu0 0.0
    %2629 = vmatpush1.msra.mxu0 %v2604
    %2630 = vmatprep.subr.mxu0 0.0
    %2631 = vmatpush1.msra.mxu0 %v2605
    %2632 = vmatprep.subr.mxu0 0.0
    %2633 = vmatpush1.msra.mxu0 %v2606
    %2634 = vmatprep.subr.mxu0 0.0
    %2635 = vmatpush1.msra.mxu0 %v2607
    %2636 = vmatprep.subr.mxu0 0.0
    %2637 = vmatpush1.msra.mxu0 %v2608
    %2638 = vmatprep.subr.mxu0 0.0
    %2639 = vmatpush1.msra.mxu0 %v2609
    %2640 = vmatprep.subr.mxu0 0.0
    %2641 = vmatpush1.msra.mxu0 %v2610
    %2642 = vmatprep.subr.mxu0 0.0
    %2643 = vmatpush1.msra.mxu0 %v2611
    %2644 = vmatprep.subr.mxu0 0.0
    %2645 = vmatpush1.msra.mxu0 0.0
    %2646 = vmatprep.subr.mxu0 0.0
    %2647 = vmatpush1.msra.mxu0 0.0
    %2648 = vmatprep.subr.mxu0 0.0
    %2649 = vmatpush1.msra.mxu0 0.0
    %2650 = vmatprep.subr.mxu0 0.0
    %2651 = vmatpush1.msra.mxu0 0.0
    %2652 = vmatprep.subr.mxu0 0.0
    %2653 = vmatpush1.msra.mxu0 0.0
    %2654 = vmatprep.subr.mxu0 0.0
    %2655 = vmatpush1.msra.mxu0 0.0
    %2656 = vmatprep.subr.mxu0 0.0
    %2657 = vmatpush1.msra.mxu0 0.0
    %2658 = vmatprep.subr.mxu0 0.0
    %2659 = vmatpush1.msra.mxu0 0.0
    %2660 = vmatprep.subr.mxu0 0.0
    %2661 = vmatpush1.msra.mxu0 0.0
    %2662 = vmatprep.subr.mxu0 0.0
    %2663 = vmatpush1.msra.mxu0 0.0
    %2664 = vmatprep.subr.mxu0 0.0
    %2665 = vmatpush1.msra.mxu0 0.0
    %2666 = vmatprep.subr.mxu0 0.0
    %2667 = vmatpush1.msra.mxu0 0.0
    %2668 = vmatprep.subr.mxu0 0.0
    %2669 = vmatpush1.msra.mxu0 0.0
    %2670 = vmatprep.subr.mxu0 0.0
    %2671 = vmatpush1.msra.mxu0 0.0
    %2672 = vmatprep.subr.mxu0 0.0
    %2673 = vmatpush1.msra.mxu0 0.0
    %2674 = vmatprep.subr.mxu0 0.0
    %2675 = vmatpush1.msra.mxu0 0.0
    %2676 = vmatprep.mubr.f32.mxu0 0.0
    %2677 = vmatmul.mubr.f32.gmra.mrb[0].mxu0 %v2580
    %v2678 = vpop.f32.mrb[0].mxu0
    %v2679 = vadd.f32 0.0, %v2678
    %v2680 = vpop.f32.mrb[0].mxu0
    %2681 = vmatprep.mubr.f32.mxu0 0.0
    %2682 = vmatmul.mubr.f32.gmra.mrb[0].mxu0 %v2581
    %v2683 = vpop.f32.mrb[0].mxu0
    %v2684 = vadd.f32 0.0, %v2683
    %v2685 = vpop.f32.mrb[0].mxu0
    %2686 = vmatprep.mubr.f32.mxu0 0.0
    %2687 = vmatmul.mubr.f32.gmra.mrb[0].mxu0 %v2582
    %v2688 = vpop.f32.mrb[0].mxu0
    %v2689 = vadd.f32 0.0, %v2688
    %v2690 = vpop.f32.mrb[0].mxu0
    %2691 = vmatprep.mubr.f32.mxu0 0.0
    %2692 = vmatmul.mubr.f32.gmra.mrb[0].mxu0 %v2583
    %v2693 = vpop.f32.mrb[0].mxu0
    %v2694 = vadd.f32 0.0, %v2693
    %v2695 = vpop.f32.mrb[0].mxu0
    %2696 = vmatprep.mubr.f32.mxu0 0.0
    %2697 = vmatmul.mubr.f32.gmra.mrb[0].mxu0 %v2584
    %v2698 = vpop.f32.mrb[0].mxu0
    %v2699 = vadd.f32 0.0, %v2698
    %v2700 = vpop.f32.mrb[0].mxu0
    %2701 = vmatprep.mubr.f32.mxu0 0.0
    %2702 = vmatmul.mubr.f32.gmra.mrb[0].mxu0 %v2585
    %v2703 = vpop.f32.mrb[0].mxu0
    %v2704 = vadd.f32 0.0, %v2703
    %v2705 = vpop.f32.mrb[0].mxu0
    %2706 = vmatprep.mubr.f32.mxu0 0.0
    %2707 = vmatmul.mubr.f32.gmra.mrb[0].mxu0 %v2586
    %v2708 = vpop.f32.mrb[0].mxu0
    %v2709 = vadd.f32 0.0, %v2708
    %v2710 = vpop.f32.mrb[0].mxu0
    %2711 = vmatprep.mubr.f32.mxu0 0.0
    %2712 = vmatmul.mubr.f32.gmra.mrb[0].mxu0 %v2587
    %v2713 = vpop.f32.mrb[0].mxu0
    %v2714 = vadd.f32 0.0, %v2713
    %v2715 = vpop.f32.mrb[0].mxu0
    %2716 = vmatprep.mubr.f32.mxu0 0.0
    %2717 = vmatmul.mubr.f32.gmra.mrb[0].mxu0 %v2588
    %v2718 = vpop.f32.mrb[0].mxu0
    %v2719 = vadd.f32 0.0, %v2718
    %v2720 = vpop.f32.mrb[0].mxu0
    %2721 = vmatprep.mubr.f32.mxu0 0.0
    %2722 = vmatmul.mubr.f32.gmra.mrb[0].mxu0 %v2589
    %v2723 = vpop.f32.mrb[0].mxu0
    %v2724 = vadd.f32 0.0, %v2723
    %v2725 = vpop.f32.mrb[0].mxu0
    %2726 = vmatprep.mubr.f32.mxu0 0.0
    %2727 = vmatmul.mubr.f32.gmra.mrb[0].mxu0 %v2590
    %v2728 = vpop.f32.mrb[0].mxu0
    %v2729 = vadd.f32 0.0, %v2728
    %v2730 = vpop.f32.mrb[0].mxu0
    %2731 = vmatprep.mubr.f32.mxu0 0.0
    %2732 = vmatmul.mubr.f32.gmra.mrb[0].mxu0 %v2591
    %v2733 = vpop.f32.mrb[0].mxu0
    %v2734 = vadd.f32 0.0, %v2733
    %v2735 = vpop.f32.mrb[0].mxu0
    %2736 = vmatprep.mubr.f32.mxu0 0.0
    %2737 = vmatmul.mubr.f32.gmra.mrb[0].mxu0 %v2592
    %v2738 = vpop.f32.mrb[0].mxu0
    %v2739 = vadd.f32 0.0, %v2738
    %v2740 = vpop.f32.mrb[0].mxu0
    %2741 = vmatprep.mubr.f32.mxu0 0.0
    %2742 = vmatmul.mubr.f32.gmra.mrb[0].mxu0 %v2593
    %v2743 = vpop.f32.mrb[0].mxu0
    %v2744 = vadd.f32 0.0, %v2743
    %v2745 = vpop.f32.mrb[0].mxu0
    %2746 = vmatprep.mubr.f32.mxu0 0.0
    %2747 = vmatmul.mubr.f32.gmra.mrb[0].mxu0 %v2594
    %v2748 = vpop.f32.mrb[0].mxu0
    %v2749 = vadd.f32 0.0, %v2748
    %v2750 = vpop.f32.mrb[0].mxu0
    %2751 = vmatprep.mubr.f32.mxu0 0.0
    %2752 = vmatmul.mubr.f32.gmra.mrb[0].mxu0 %v2595
    %v2753 = vpop.f32.mrb[0].mxu0
    %v2754 = vadd.f32 0.0, %v2753
    %v2755 = vpop.f32.mrb[0].mxu0
    %2756 = vdwg.mxu0
    %v2757 = vld [vmem:[%s271] sm:$0xff]
    %v2758 = vld [vmem:[%s271 + $0x8] sm:$0xff]
    %v2759 = vld [vmem:[%s271 + $0x10] sm:$0xff]
    %v2760 = vld [vmem:[%s271 + $0x18] sm:$0xff]
    %v2761 = vld [vmem:[%s271 + $0x20] sm:$0xff]
    %v2762 = vld [vmem:[%s271 + $0x28] sm:$0xff]
    %v2763 = vld [vmem:[%s271 + $0x30] sm:$0xff]
    %v2764 = vld [vmem:[%s271 + $0x38] sm:$0xff]
    %v2765 = vld [vmem:[%s271 + $0x40] sm:$0xff]
    %v2766 = vld [vmem:[%s271 + $0x48] sm:$0xff]
    %v2767 = vld [vmem:[%s271 + $0x50] sm:$0xff]
    %v2768 = vld [vmem:[%s271 + $0x58] sm:$0xff]
    %v2769 = vld [vmem:[%s271 + $0x60] sm:$0xff]
    %v2770 = vld [vmem:[%s271 + $0x68] sm:$0xff]
    %v2771 = vld [vmem:[%s271 + $0x70] sm:$0xff]
    %v2772 = vld [vmem:[%s271 + $0x78] sm:$0xff]
    %2773 = vmatprep.subr.mxu0 0.0
    %2774 = vmatpush1.msra.mxu0 %v2757
    %2775 = vmatprep.subr.mxu0 0.0
    %2776 = vmatpush1.msra.mxu0 %v2758
    %2777 = vmatprep.subr.mxu0 0.0
    %2778 = vmatpush1.msra.mxu0 %v2759
    %2779 = vmatprep.subr.mxu0 0.0
    %2780 = vmatpush1.msra.mxu0 %v2760
    %2781 = vmatprep.subr.mxu0 0.0
    %2782 = vmatpush1.msra.mxu0 %v2761
    %2783 = vmatprep.subr.mxu0 0.0
    %2784 = vmatpush1.msra.mxu0 %v2762
    %2785 = vmatprep.subr.mxu0 0.0
    %2786 = vmatpush1.msra.mxu0 %v2763
    %2787 = vmatprep.subr.mxu0 0.0
    %2788 = vmatpush1.msra.mxu0 %v2764
    %2789 = vmatprep.subr.mxu0 0.0
    %2790 = vmatpush1.msra.mxu0 %v2765
    %2791 = vmatprep.subr.mxu0 0.0
    %2792 = vmatpush1.msra.mxu0 %v2766
    %2793 = vmatprep.subr.mxu0 0.0
    %2794 = vmatpush1.msra.mxu0 %v2767
    %2795 = vmatprep.subr.mxu0 0.0
    %2796 = vmatpush1.msra.mxu0 %v2768
    %2797 = vmatprep.subr.mxu0 0.0
    %2798 = vmatpush1.msra.mxu0 %v2769
    %2799 = vmatprep.subr.mxu0 0.0
    %2800 = vmatpush1.msra.mxu0 %v2770
    %2801 = vmatprep.subr.mxu0 0.0
    %2802 = vmatpush1.msra.mxu0 %v2771
    %2803 = vmatprep.subr.mxu0 0.0
    %2804 = vmatpush1.msra.mxu0 %v2772
    %2805 = vmatprep.subr.mxu0 0.0
    %2806 = vmatpush1.msra.mxu0 0.0
    %2807 = vmatprep.subr.mxu0 0.0
    %2808 = vmatpush1.msra.mxu0 0.0
    %2809 = vmatprep.subr.mxu0 0.0
    %2810 = vmatpush1.msra.mxu0 0.0
    %2811 = vmatprep.subr.mxu0 0.0
    %2812 = vmatpush1.msra.mxu0 0.0
    %2813 = vmatprep.subr.mxu0 0.0
    %2814 = vmatpush1.msra.mxu0 0.0
    %2815 = vmatprep.subr.mxu0 0.0
    %2816 = vmatpush1.msra.mxu0 0.0
    %2817 = vmatprep.subr.mxu0 0.0
    %2818 = vmatpush1.msra.mxu0 0.0
    %2819 = vmatprep.subr.mxu0 0.0
    %2820 = vmatpush1.msra.mxu0 0.0
    %2821 = vmatprep.subr.mxu0 0.0
    %2822 = vmatpush1.msra.mxu0 0.0
    %2823 = vmatprep.subr.mxu0 0.0
    %2824 = vmatpush1.msra.mxu0 0.0
    %2825 = vmatprep.subr.mxu0 0.0
    %2826 = vmatpush1.msra.mxu0 0.0
    %2827 = vmatprep.subr.mxu0 0.0
    %2828 = vmatpush1.msra.mxu0 0.0
    %2829 = vmatprep.subr.mxu0 0.0
    %2830 = vmatpush1.msra.mxu0 0.0
    %2831 = vmatprep.subr.mxu0 0.0
    %2832 = vmatpush1.msra.mxu0 0.0
    %2833 = vmatprep.subr.mxu0 0.0
    %2834 = vmatpush1.msra.mxu0 0.0
    %2835 = vmatprep.subr.mxu0 0.0
    %2836 = vmatpush1.msra.mxu0 0.0
    %2837 = vmatprep.mubr.f32.mxu0 0.0
    %2838 = vmatmul.mubr.f32.gmra.mrb[0].mxu0 %v2679
    %v2839 = vpop.f32.mrb[0].mxu0
    %v2840 = vadd.f32 0.0, %v2839
    %v2841 = vpop.f32.mrb[0].mxu0
    %2842 = vmatprep.mubr.f32.mxu0 0.0
    %2843 = vmatmul.mubr.f32.gmra.mrb[0].mxu0 %v2684
    %v2844 = vpop.f32.mrb[0].mxu0
    %v2845 = vadd.f32 0.0, %v2844
    %v2846 = vpop.f32.mrb[0].mxu0
    %2847 = vmatprep.mubr.f32.mxu0 0.0
    %2848 = vmatmul.mubr.f32.gmra.mrb[0].mxu0 %v2689
    %v2849 = vpop.f32.mrb[0].mxu0
    %v2850 = vadd.f32 0.0, %v2849
    %v2851 = vpop.f32.mrb[0].mxu0
    %2852 = vmatprep.mubr.f32.mxu0 0.0
    %2853 = vmatmul.mubr.f32.gmra.mrb[0].mxu0 %v2694
    %v2854 = vpop.f32.mrb[0].mxu0
    %v2855 = vadd.f32 0.0, %v2854
    %v2856 = vpop.f32.mrb[0].mxu0
    %2857 = vmatprep.mubr.f32.mxu0 0.0
    %2858 = vmatmul.mubr.f32.gmra.mrb[0].mxu0 %v2699
    %v2859 = vpop.f32.mrb[0].mxu0
    %v2860 = vadd.f32 0.0, %v2859
    %v2861 = vpop.f32.mrb[0].mxu0
    %2862 = vmatprep.mubr.f32.mxu0 0.0
    %2863 = vmatmul.mubr.f32.gmra.mrb[0].mxu0 %v2704
    %v2864 = vpop.f32.mrb[0].mxu0
    %v2865 = vadd.f32 0.0, %v2864
    %v2866 = vpop.f32.mrb[0].mxu0
    %2867 = vmatprep.mubr.f32.mxu0 0.0
    %2868 = vmatmul.mubr.f32.gmra.mrb[0].mxu0 %v2709
    %v2869 = vpop.f32.mrb[0].mxu0
    %v2870 = vadd.f32 0.0, %v2869
    %v2871 = vpop.f32.mrb[0].mxu0
    %2872 = vmatprep.mubr.f32.mxu0 0.0
    %2873 = vmatmul.mubr.f32.gmra.mrb[0].mxu0 %v2714
    %v2874 = vpop.f32.mrb[0].mxu0
    %v2875 = vadd.f32 0.0, %v2874
    %v2876 = vpop.f32.mrb[0].mxu0
    %2877 = vmatprep.mubr.f32.mxu0 0.0
    %2878 = vmatmul.mubr.f32.gmra.mrb[0].mxu0 %v2719
    %v2879 = vpop.f32.mrb[0].mxu0
    %v2880 = vadd.f32 0.0, %v2879
    %v2881 = vpop.f32.mrb[0].mxu0
    %2882 = vmatprep.mubr.f32.mxu0 0.0
    %2883 = vmatmul.mubr.f32.gmra.mrb[0].mxu0 %v2724
    %v2884 = vpop.f32.mrb[0].mxu0
    %v2885 = vadd.f32 0.0, %v2884
    %v2886 = vpop.f32.mrb[0].mxu0
    %2887 = vmatprep.mubr.f32.mxu0 0.0
    %2888 = vmatmul.mubr.f32.gmra.mrb[0].mxu0 %v2729
    %v2889 = vpop.f32.mrb[0].mxu0
    %v2890 = vadd.f32 0.0, %v2889
    %v2891 = vpop.f32.mrb[0].mxu0
    %2892 = vmatprep.mubr.f32.mxu0 0.0
    %2893 = vmatmul.mubr.f32.gmra.mrb[0].mxu0 %v2734
    %v2894 = vpop.f32.mrb[0].mxu0
    %v2895 = vadd.f32 0.0, %v2894
    %v2896 = vpop.f32.mrb[0].mxu0
    %2897 = vmatprep.mubr.f32.mxu0 0.0
    %2898 = vmatmul.mubr.f32.gmra.mrb[0].mxu0 %v2739
    %v2899 = vpop.f32.mrb[0].mxu0
    %v2900 = vadd.f32 0.0, %v2899
    %v2901 = vpop.f32.mrb[0].mxu0
    %2902 = vmatprep.mubr.f32.mxu0 0.0
    %2903 = vmatmul.mubr.f32.gmra.mrb[0].mxu0 %v2744
    %v2904 = vpop.f32.mrb[0].mxu0
    %v2905 = vadd.f32 0.0, %v2904
    %v2906 = vpop.f32.mrb[0].mxu0
    %2907 = vmatprep.mubr.f32.mxu0 0.0
    %2908 = vmatmul.mubr.f32.gmra.mrb[0].mxu0 %v2749
    %v2909 = vpop.f32.mrb[0].mxu0
    %v2910 = vadd.f32 0.0, %v2909
    %v2911 = vpop.f32.mrb[0].mxu0
    %2912 = vmatprep.mubr.f32.mxu0 0.0
    %2913 = vmatmul.mubr.f32.gmra.mrb[0].mxu0 %v2754
    %v2914 = vpop.f32.mrb[0].mxu0
    %v2915 = vadd.f32 0.0, %v2914
    %v2916 = vpop.f32.mrb[0].mxu0
    %2917 = vdwg.mxu0
    %s2918 = scalar_lea.vmem [#allocation14], 128
    %2919 = vst [vmem:[%s2918] sm:$0xff] %v2840
    %2920 = vst [vmem:[%s2918 + $0x8] sm:$0xff] %v2845
    %2921 = vst [vmem:[%s2918 + $0x10] sm:$0xff] %v2850
    %2922 = vst [vmem:[%s2918 + $0x18] sm:$0xff] %v2855
    %2923 = vst [vmem:[%s2918 + $0x20] sm:$0xff] %v2860
    %2924 = vst [vmem:[%s2918 + $0x28] sm:$0xff] %v2865
    %2925 = vst [vmem:[%s2918 + $0x30] sm:$0xff] %v2870
    %2926 = vst [vmem:[%s2918 + $0x38] sm:$0xff] %v2875
    %2927 = vst [vmem:[%s2918 + $0x40] sm:$0xff] %v2880
    %2928 = vst [vmem:[%s2918 + $0x48] sm:$0xff] %v2885
    %2929 = vst [vmem:[%s2918 + $0x50] sm:$0xff] %v2890
    %2930 = vst [vmem:[%s2918 + $0x58] sm:$0xff] %v2895
    %2931 = vst [vmem:[%s2918 + $0x60] sm:$0xff] %v2900
    %2932 = vst [vmem:[%s2918 + $0x68] sm:$0xff] %v2905
    %2933 = vst [vmem:[%s2918 + $0x70] sm:$0xff] %v2910
    %2934 = vst [vmem:[%s2918 + $0x78] sm:$0xff] %v2915
    %v2935 = vld [vmem:[%s306] sm:$0xff]
    %v2936 = vld [vmem:[%s306 + $0x8] sm:$0xff]
    %v2937 = vld [vmem:[%s306 + $0x10] sm:$0xff]
    %v2938 = vld [vmem:[%s306 + $0x18] sm:$0xff]
    %v2939 = vld [vmem:[%s306 + $0x20] sm:$0xff]
    %v2940 = vld [vmem:[%s306 + $0x28] sm:$0xff]
    %v2941 = vld [vmem:[%s306 + $0x30] sm:$0xff]
    %v2942 = vld [vmem:[%s306 + $0x38] sm:$0xff]
    %v2943 = vld [vmem:[%s306 + $0x40] sm:$0xff]
    %v2944 = vld [vmem:[%s306 + $0x48] sm:$0xff]
    %v2945 = vld [vmem:[%s306 + $0x50] sm:$0xff]
    %v2946 = vld [vmem:[%s306 + $0x58] sm:$0xff]
    %v2947 = vld [vmem:[%s306 + $0x60] sm:$0xff]
    %v2948 = vld [vmem:[%s306 + $0x68] sm:$0xff]
    %v2949 = vld [vmem:[%s306 + $0x70] sm:$0xff]
    %v2950 = vld [vmem:[%s306 + $0x78] sm:$0xff]
    %v2951 = vld [vmem:[%s341] sm:$0xff]
    %v2952 = vld [vmem:[%s341 + $0x8] sm:$0xff]
    %v2953 = vld [vmem:[%s341 + $0x10] sm:$0xff]
    %v2954 = vld [vmem:[%s341 + $0x18] sm:$0xff]
    %v2955 = vld [vmem:[%s341 + $0x20] sm:$0xff]
    %v2956 = vld [vmem:[%s341 + $0x28] sm:$0xff]
    %v2957 = vld [vmem:[%s341 + $0x30] sm:$0xff]
    %v2958 = vld [vmem:[%s341 + $0x38] sm:$0xff]
    %v2959 = vld [vmem:[%s341 + $0x40] sm:$0xff]
    %v2960 = vld [vmem:[%s341 + $0x48] sm:$0xff]
    %v2961 = vld [vmem:[%s341 + $0x50] sm:$0xff]
    %v2962 = vld [vmem:[%s341 + $0x58] sm:$0xff]
    %v2963 = vld [vmem:[%s341 + $0x60] sm:$0xff]
    %v2964 = vld [vmem:[%s341 + $0x68] sm:$0xff]
    %v2965 = vld [vmem:[%s341 + $0x70] sm:$0xff]
    %v2966 = vld [vmem:[%s341 + $0x78] sm:$0xff]
    %2967 = vmatprep.subr.mxu0 0.0
    %2968 = vmatpush1.msra.mxu0 %v2951
    %2969 = vmatprep.subr.mxu0 0.0
    %2970 = vmatpush1.msra.mxu0 %v2952
    %2971 = vmatprep.subr.mxu0 0.0
    %2972 = vmatpush1.msra.mxu0 %v2953
    %2973 = vmatprep.subr.mxu0 0.0
    %2974 = vmatpush1.msra.mxu0 %v2954
    %2975 = vmatprep.subr.mxu0 0.0
    %2976 = vmatpush1.msra.mxu0 %v2955
    %2977 = vmatprep.subr.mxu0 0.0
    %2978 = vmatpush1.msra.mxu0 %v2956
    %2979 = vmatprep.subr.mxu0 0.0
    %2980 = vmatpush1.msra.mxu0 %v2957
    %2981 = vmatprep.subr.mxu0 0.0
    %2982 = vmatpush1.msra.mxu0 %v2958
    %2983 = vmatprep.subr.mxu0 0.0
    %2984 = vmatpush1.msra.mxu0 %v2959
    %2985 = vmatprep.subr.mxu0 0.0
    %2986 = vmatpush1.msra.mxu0 %v2960
    %2987 = vmatprep.subr.mxu0 0.0
    %2988 = vmatpush1.msra.mxu0 %v2961
    %2989 = vmatprep.subr.mxu0 0.0
    %2990 = vmatpush1.msra.mxu0 %v2962
    %2991 = vmatprep.subr.mxu0 0.0
    %2992 = vmatpush1.msra.mxu0 %v2963
    %2993 = vmatprep.subr.mxu0 0.0
    %2994 = vmatpush1.msra.mxu0 %v2964
    %2995 = vmatprep.subr.mxu0 0.0
    %2996 = vmatpush1.msra.mxu0 %v2965
    %2997 = vmatprep.subr.mxu0 0.0
    %2998 = vmatpush1.msra.mxu0 %v2966
    %2999 = vmatprep.subr.mxu0 0.0
    %3000 = vmatpush1.msra.mxu0 0.0
    %3001 = vmatprep.subr.mxu0 0.0
    %3002 = vmatpush1.msra.mxu0 0.0
    %3003 = vmatprep.subr.mxu0 0.0
    %3004 = vmatpush1.msra.mxu0 0.0
    %3005 = vmatprep.subr.mxu0 0.0
    %3006 = vmatpush1.msra.mxu0 0.0
    %3007 = vmatprep.subr.mxu0 0.0
    %3008 = vmatpush1.msra.mxu0 0.0
    %3009 = vmatprep.subr.mxu0 0.0
    %3010 = vmatpush1.msra.mxu0 0.0
    %3011 = vmatprep.subr.mxu0 0.0
    %3012 = vmatpush1.msra.mxu0 0.0
    %3013 = vmatprep.subr.mxu0 0.0
    %3014 = vmatpush1.msra.mxu0 0.0
    %3015 = vmatprep.subr.mxu0 0.0
    %3016 = vmatpush1.msra.mxu0 0.0
    %3017 = vmatprep.subr.mxu0 0.0
    %3018 = vmatpush1.msra.mxu0 0.0
    %3019 = vmatprep.subr.mxu0 0.0
    %3020 = vmatpush1.msra.mxu0 0.0
    %3021 = vmatprep.subr.mxu0 0.0
    %3022 = vmatpush1.msra.mxu0 0.0
    %3023 = vmatprep.subr.mxu0 0.0
    %3024 = vmatpush1.msra.mxu0 0.0
    %3025 = vmatprep.subr.mxu0 0.0
    %3026 = vmatpush1.msra.mxu0 0.0
    %3027 = vmatprep.subr.mxu0 0.0
    %3028 = vmatpush1.msra.mxu0 0.0
    %3029 = vmatprep.subr.mxu0 0.0
    %3030 = vmatpush1.msra.mxu0 0.0
    %3031 = vmatprep.mubr.f32.mxu0 0.0
    %3032 = vmatmul.mubr.f32.gmra.mrb[0].mxu0 %v2935
    %v3033 = vpop.f32.mrb[0].mxu0
    %v3034 = vadd.f32 0.0, %v3033
    %v3035 = vpop.f32.mrb[0].mxu0
    %3036 = vmatprep.mubr.f32.mxu0 0.0
    %3037 = vmatmul.mubr.f32.gmra.mrb[0].mxu0 %v2936
    %v3038 = vpop.f32.mrb[0].mxu0
    %v3039 = vadd.f32 0.0, %v3038
    %v3040 = vpop.f32.mrb[0].mxu0
    %3041 = vmatprep.mubr.f32.mxu0 0.0
    %3042 = vmatmul.mubr.f32.gmra.mrb[0].mxu0 %v2937
    %v3043 = vpop.f32.mrb[0].mxu0
    %v3044 = vadd.f32 0.0, %v3043
    %v3045 = vpop.f32.mrb[0].mxu0
    %3046 = vmatprep.mubr.f32.mxu0 0.0
    %3047 = vmatmul.mubr.f32.gmra.mrb[0].mxu0 %v2938
    %v3048 = vpop.f32.mrb[0].mxu0
    %v3049 = vadd.f32 0.0, %v3048
    %v3050 = vpop.f32.mrb[0].mxu0
    %3051 = vmatprep.mubr.f32.mxu0 0.0
    %3052 = vmatmul.mubr.f32.gmra.mrb[0].mxu0 %v2939
    %v3053 = vpop.f32.mrb[0].mxu0
    %v3054 = vadd.f32 0.0, %v3053
    %v3055 = vpop.f32.mrb[0].mxu0
    %3056 = vmatprep.mubr.f32.mxu0 0.0
    %3057 = vmatmul.mubr.f32.gmra.mrb[0].mxu0 %v2940
    %v3058 = vpop.f32.mrb[0].mxu0
    %v3059 = vadd.f32 0.0, %v3058
    %v3060 = vpop.f32.mrb[0].mxu0
    %3061 = vmatprep.mubr.f32.mxu0 0.0
    %3062 = vmatmul.mubr.f32.gmra.mrb[0].mxu0 %v2941
    %v3063 = vpop.f32.mrb[0].mxu0
    %v3064 = vadd.f32 0.0, %v3063
    %v3065 = vpop.f32.mrb[0].mxu0
    %3066 = vmatprep.mubr.f32.mxu0 0.0
    %3067 = vmatmul.mubr.f32.gmra.mrb[0].mxu0 %v2942
    %v3068 = vpop.f32.mrb[0].mxu0
    %v3069 = vadd.f32 0.0, %v3068
    %v3070 = vpop.f32.mrb[0].mxu0
    %3071 = vmatprep.mubr.f32.mxu0 0.0
    %3072 = vmatmul.mubr.f32.gmra.mrb[0].mxu0 %v2943
    %v3073 = vpop.f32.mrb[0].mxu0
    %v3074 = vadd.f32 0.0, %v3073
    %v3075 = vpop.f32.mrb[0].mxu0
    %3076 = vmatprep.mubr.f32.mxu0 0.0
    %3077 = vmatmul.mubr.f32.gmra.mrb[0].mxu0 %v2944
    %v3078 = vpop.f32.mrb[0].mxu0
    %v3079 = vadd.f32 0.0, %v3078
    %v3080 = vpop.f32.mrb[0].mxu0
    %3081 = vmatprep.mubr.f32.mxu0 0.0
    %3082 = vmatmul.mubr.f32.gmra.mrb[0].mxu0 %v2945
    %v3083 = vpop.f32.mrb[0].mxu0
    %v3084 = vadd.f32 0.0, %v3083
    %v3085 = vpop.f32.mrb[0].mxu0
    %3086 = vmatprep.mubr.f32.mxu0 0.0
    %3087 = vmatmul.mubr.f32.gmra.mrb[0].mxu0 %v2946
    %v3088 = vpop.f32.mrb[0].mxu0
    %v3089 = vadd.f32 0.0, %v3088
    %v3090 = vpop.f32.mrb[0].mxu0
    %3091 = vmatprep.mubr.f32.mxu0 0.0
    %3092 = vmatmul.mubr.f32.gmra.mrb[0].mxu0 %v2947
    %v3093 = vpop.f32.mrb[0].mxu0
    %v3094 = vadd.f32 0.0, %v3093
    %v3095 = vpop.f32.mrb[0].mxu0
    %3096 = vmatprep.mubr.f32.mxu0 0.0
    %3097 = vmatmul.mubr.f32.gmra.mrb[0].mxu0 %v2948
    %v3098 = vpop.f32.mrb[0].mxu0
    %v3099 = vadd.f32 0.0, %v3098
    %v3100 = vpop.f32.mrb[0].mxu0
    %3101 = vmatprep.mubr.f32.mxu0 0.0
    %3102 = vmatmul.mubr.f32.gmra.mrb[0].mxu0 %v2949
    %v3103 = vpop.f32.mrb[0].mxu0
    %v3104 = vadd.f32 0.0, %v3103
    %v3105 = vpop.f32.mrb[0].mxu0
    %3106 = vmatprep.mubr.f32.mxu0 0.0
    %3107 = vmatmul.mubr.f32.gmra.mrb[0].mxu0 %v2950
    %v3108 = vpop.f32.mrb[0].mxu0
    %v3109 = vadd.f32 0.0, %v3108
    %v3110 = vpop.f32.mrb[0].mxu0
    %3111 = vdwg.mxu0
    %v3112 = vld [vmem:[%s376] sm:$0xff]
    %v3113 = vld [vmem:[%s376 + $0x8] sm:$0xff]
    %v3114 = vld [vmem:[%s376 + $0x10] sm:$0xff]
    %v3115 = vld [vmem:[%s376 + $0x18] sm:$0xff]
    %v3116 = vld [vmem:[%s376 + $0x20] sm:$0xff]
    %v3117 = vld [vmem:[%s376 + $0x28] sm:$0xff]
    %v3118 = vld [vmem:[%s376 + $0x30] sm:$0xff]
    %v3119 = vld [vmem:[%s376 + $0x38] sm:$0xff]
    %v3120 = vld [vmem:[%s376 + $0x40] sm:$0xff]
    %v3121 = vld [vmem:[%s376 + $0x48] sm:$0xff]
    %v3122 = vld [vmem:[%s376 + $0x50] sm:$0xff]
    %v3123 = vld [vmem:[%s376 + $0x58] sm:$0xff]
    %v3124 = vld [vmem:[%s376 + $0x60] sm:$0xff]
    %v3125 = vld [vmem:[%s376 + $0x68] sm:$0xff]
    %v3126 = vld [vmem:[%s376 + $0x70] sm:$0xff]
    %v3127 = vld [vmem:[%s376 + $0x78] sm:$0xff]
    %3128 = vmatprep.subr.mxu0 0.0
    %3129 = vmatpush1.msra.mxu0 %v3112
    %3130 = vmatprep.subr.mxu0 0.0
    %3131 = vmatpush1.msra.mxu0 %v3113
    %3132 = vmatprep.subr.mxu0 0.0
    %3133 = vmatpush1.msra.mxu0 %v3114
    %3134 = vmatprep.subr.mxu0 0.0
    %3135 = vmatpush1.msra.mxu0 %v3115
    %3136 = vmatprep.subr.mxu0 0.0
    %3137 = vmatpush1.msra.mxu0 %v3116
    %3138 = vmatprep.subr.mxu0 0.0
    %3139 = vmatpush1.msra.mxu0 %v3117
    %3140 = vmatprep.subr.mxu0 0.0
    %3141 = vmatpush1.msra.mxu0 %v3118
    %3142 = vmatprep.subr.mxu0 0.0
    %3143 = vmatpush1.msra.mxu0 %v3119
    %3144 = vmatprep.subr.mxu0 0.0
    %3145 = vmatpush1.msra.mxu0 %v3120
    %3146 = vmatprep.subr.mxu0 0.0
    %3147 = vmatpush1.msra.mxu0 %v3121
    %3148 = vmatprep.subr.mxu0 0.0
    %3149 = vmatpush1.msra.mxu0 %v3122
    %3150 = vmatprep.subr.mxu0 0.0
    %3151 = vmatpush1.msra.mxu0 %v3123
    %3152 = vmatprep.subr.mxu0 0.0
    %3153 = vmatpush1.msra.mxu0 %v3124
    %3154 = vmatprep.subr.mxu0 0.0
    %3155 = vmatpush1.msra.mxu0 %v3125
    %3156 = vmatprep.subr.mxu0 0.0
    %3157 = vmatpush1.msra.mxu0 %v3126
    %3158 = vmatprep.subr.mxu0 0.0
    %3159 = vmatpush1.msra.mxu0 %v3127
    %3160 = vmatprep.subr.mxu0 0.0
    %3161 = vmatpush1.msra.mxu0 0.0
    %3162 = vmatprep.subr.mxu0 0.0
    %3163 = vmatpush1.msra.mxu0 0.0
    %3164 = vmatprep.subr.mxu0 0.0
    %3165 = vmatpush1.msra.mxu0 0.0
    %3166 = vmatprep.subr.mxu0 0.0
    %3167 = vmatpush1.msra.mxu0 0.0
    %3168 = vmatprep.subr.mxu0 0.0
    %3169 = vmatpush1.msra.mxu0 0.0
    %3170 = vmatprep.subr.mxu0 0.0
    %3171 = vmatpush1.msra.mxu0 0.0
    %3172 = vmatprep.subr.mxu0 0.0
    %3173 = vmatpush1.msra.mxu0 0.0
    %3174 = vmatprep.subr.mxu0 0.0
    %3175 = vmatpush1.msra.mxu0 0.0
    %3176 = vmatprep.subr.mxu0 0.0
    %3177 = vmatpush1.msra.mxu0 0.0
    %3178 = vmatprep.subr.mxu0 0.0
    %3179 = vmatpush1.msra.mxu0 0.0
    %3180 = vmatprep.subr.mxu0 0.0
    %3181 = vmatpush1.msra.mxu0 0.0
    %3182 = vmatprep.subr.mxu0 0.0
    %3183 = vmatpush1.msra.mxu0 0.0
    %3184 = vmatprep.subr.mxu0 0.0
    %3185 = vmatpush1.msra.mxu0 0.0
    %3186 = vmatprep.subr.mxu0 0.0
    %3187 = vmatpush1.msra.mxu0 0.0
    %3188 = vmatprep.subr.mxu0 0.0
    %3189 = vmatpush1.msra.mxu0 0.0
    %3190 = vmatprep.subr.mxu0 0.0
    %3191 = vmatpush1.msra.mxu0 0.0
    %3192 = vmatprep.mubr.f32.mxu0 0.0
    %3193 = vmatmul.mubr.f32.gmra.mrb[0].mxu0 %v3034
    %v3194 = vpop.f32.mrb[0].mxu0
    %v3195 = vadd.f32 0.0, %v3194
    %v3196 = vpop.f32.mrb[0].mxu0
    %3197 = vmatprep.mubr.f32.mxu0 0.0
    %3198 = vmatmul.mubr.f32.gmra.mrb[0].mxu0 %v3039
    %v3199 = vpop.f32.mrb[0].mxu0
    %v3200 = vadd.f32 0.0, %v3199
    %v3201 = vpop.f32.mrb[0].mxu0
    %3202 = vmatprep.mubr.f32.mxu0 0.0
    %3203 = vmatmul.mubr.f32.gmra.mrb[0].mxu0 %v3044
    %v3204 = vpop.f32.mrb[0].mxu0
    %v3205 = vadd.f32 0.0, %v3204
    %v3206 = vpop.f32.mrb[0].mxu0
    %3207 = vmatprep.mubr.f32.mxu0 0.0
    %3208 = vmatmul.mubr.f32.gmra.mrb[0].mxu0 %v3049
    %v3209 = vpop.f32.mrb[0].mxu0
    %v3210 = vadd.f32 0.0, %v3209
    %v3211 = vpop.f32.mrb[0].mxu0
    %3212 = vmatprep.mubr.f32.mxu0 0.0
    %3213 = vmatmul.mubr.f32.gmra.mrb[0].mxu0 %v3054
    %v3214 = vpop.f32.mrb[0].mxu0
    %v3215 = vadd.f32 0.0, %v3214
    %v3216 = vpop.f32.mrb[0].mxu0
    %3217 = vmatprep.mubr.f32.mxu0 0.0
    %3218 = vmatmul.mubr.f32.gmra.mrb[0].mxu0 %v3059
    %v3219 = vpop.f32.mrb[0].mxu0
    %v3220 = vadd.f32 0.0, %v3219
    %v3221 = vpop.f32.mrb[0].mxu0
    %3222 = vmatprep.mubr.f32.mxu0 0.0
    %3223 = vmatmul.mubr.f32.gmra.mrb[0].mxu0 %v3064
    %v3224 = vpop.f32.mrb[0].mxu0
    %v3225 = vadd.f32 0.0, %v3224
    %v3226 = vpop.f32.mrb[0].mxu0
    %3227 = vmatprep.mubr.f32.mxu0 0.0
    %3228 = vmatmul.mubr.f32.gmra.mrb[0].mxu0 %v3069
    %v3229 = vpop.f32.mrb[0].mxu0
    %v3230 = vadd.f32 0.0, %v3229
    %v3231 = vpop.f32.mrb[0].mxu0
    %3232 = vmatprep.mubr.f32.mxu0 0.0
    %3233 = vmatmul.mubr.f32.gmra.mrb[0].mxu0 %v3074
    %v3234 = vpop.f32.mrb[0].mxu0
    %v3235 = vadd.f32 0.0, %v3234
    %v3236 = vpop.f32.mrb[0].mxu0
    %3237 = vmatprep.mubr.f32.mxu0 0.0
    %3238 = vmatmul.mubr.f32.gmra.mrb[0].mxu0 %v3079
    %v3239 = vpop.f32.mrb[0].mxu0
    %v3240 = vadd.f32 0.0, %v3239
    %v3241 = vpop.f32.mrb[0].mxu0
    %3242 = vmatprep.mubr.f32.mxu0 0.0
    %3243 = vmatmul.mubr.f32.gmra.mrb[0].mxu0 %v3084
    %v3244 = vpop.f32.mrb[0].mxu0
    %v3245 = vadd.f32 0.0, %v3244
    %v3246 = vpop.f32.mrb[0].mxu0
    %3247 = vmatprep.mubr.f32.mxu0 0.0
    %3248 = vmatmul.mubr.f32.gmra.mrb[0].mxu0 %v3089
    %v3249 = vpop.f32.mrb[0].mxu0
    %v3250 = vadd.f32 0.0, %v3249
    %v3251 = vpop.f32.mrb[0].mxu0
    %3252 = vmatprep.mubr.f32.mxu0 0.0
    %3253 = vmatmul.mubr.f32.gmra.mrb[0].mxu0 %v3094
    %v3254 = vpop.f32.mrb[0].mxu0
    %v3255 = vadd.f32 0.0, %v3254
    %v3256 = vpop.f32.mrb[0].mxu0
    %3257 = vmatprep.mubr.f32.mxu0 0.0
    %3258 = vmatmul.mubr.f32.gmra.mrb[0].mxu0 %v3099
    %v3259 = vpop.f32.mrb[0].mxu0
    %v3260 = vadd.f32 0.0, %v3259
    %v3261 = vpop.f32.mrb[0].mxu0
    %3262 = vmatprep.mubr.f32.mxu0 0.0
    %3263 = vmatmul.mubr.f32.gmra.mrb[0].mxu0 %v3104
    %v3264 = vpop.f32.mrb[0].mxu0
    %v3265 = vadd.f32 0.0, %v3264
    %v3266 = vpop.f32.mrb[0].mxu0
    %3267 = vmatprep.mubr.f32.mxu0 0.0
    %3268 = vmatmul.mubr.f32.gmra.mrb[0].mxu0 %v3109
    %v3269 = vpop.f32.mrb[0].mxu0
    %v3270 = vadd.f32 0.0, %v3269
    %v3271 = vpop.f32.mrb[0].mxu0
    %3272 = vdwg.mxu0
    %s3273 = scalar_lea.vmem [#allocation14], 256
    %3274 = vst [vmem:[%s3273] sm:$0xff] %v3195
    %3275 = vst [vmem:[%s3273 + $0x8] sm:$0xff] %v3200
    %3276 = vst [vmem:[%s3273 + $0x10] sm:$0xff] %v3205
    %3277 = vst [vmem:[%s3273 + $0x18] sm:$0xff] %v3210
    %3278 = vst [vmem:[%s3273 + $0x20] sm:$0xff] %v3215
    %3279 = vst [vmem:[%s3273 + $0x28] sm:$0xff] %v3220
    %3280 = vst [vmem:[%s3273 + $0x30] sm:$0xff] %v3225
    %3281 = vst [vmem:[%s3273 + $0x38] sm:$0xff] %v3230
    %3282 = vst [vmem:[%s3273 + $0x40] sm:$0xff] %v3235
    %3283 = vst [vmem:[%s3273 + $0x48] sm:$0xff] %v3240
    %3284 = vst [vmem:[%s3273 + $0x50] sm:$0xff] %v3245
    %3285 = vst [vmem:[%s3273 + $0x58] sm:$0xff] %v3250
    %3286 = vst [vmem:[%s3273 + $0x60] sm:$0xff] %v3255
    %3287 = vst [vmem:[%s3273 + $0x68] sm:$0xff] %v3260
    %3288 = vst [vmem:[%s3273 + $0x70] sm:$0xff] %v3265
    %3289 = vst [vmem:[%s3273 + $0x78] sm:$0xff] %v3270
    // Predicated region
    $region34: #{tpu_custom_call.1} parent=1 // pred_check
      _
    $region35: #{tpu_custom_call.1} parent=1 // pred_check_branch
      %3291 = sbr.rel (0) target = $region37
    $region36: #{tpu_custom_call.1} parent=1 // pred_region
      %s3293 = ssub.s32 6144, 6144
      %3294 = vsyncadd [#allocation7], %s3293
      %s3295 = sshll.u32 [#allocation14], 4
      %s3296 = int_to_ptr.vmem [resolvable:$true] %s3295
      %3301 = dma.vmem_to_hbm [thread:$0]  %s3296, 6144, %s4, [#allocation7], 128, 128, 8
    $region37: #{tpu_custom_call.1} parent=1 // pred_fallthru
      _
    // Predicated region
    $region38: #{tpu_custom_call.1} parent=1 // pred_check
      _
    $region39: #{tpu_custom_call.1} parent=1 // pred_check_branch
      %3303 = sbr.rel (0) target = $region41
    $region40: #{tpu_custom_call.1} parent=1 // pred_region
      %3304 = dma.done [#allocation7], 6144
    $region41: #{tpu_custom_call.1} parent=1 // pred_fallthru
      _
    %3305 = vsyncpa [#allocation6], 1
    %3306 = vsyncpa [#allocation7], 1
    %3307 = vsyncpa [#allocation8], 1
    %3308 = vsyncpa [#allocation11], 1
    %3309 = vsyncpa [#allocation9], 1

</llo_original>
